<compile_context>
chip_gen: v6e
topology: v6e:2x2x1
jax: 0.10.0
libtpu: 0.0.40
codegen_flags: <defaults>
</compile_context>

<pallas_src>
import functools
import math

import jax
import jax.numpy as jnp
import numpy as np
from jax.experimental import pallas as pl
from jax.experimental.pallas import tpu as pltpu


def _decoder_kernel(x_ref, w_ih_ref, w_hh_ref, b_ref,
                    fc_w_ref, fc_b_ref, fo_w_ref, fo_b_ref,
                    out_ref, *, seq_len, batch):
    """Whole forward pass in one invocation.

    x_ref:    (T*B, D)    time-major, flattened input
    w_ih_ref: (4, D, H)   per-gate input weights   (gate order i, f, g, o)
    w_hh_ref: (4, H, H)   per-gate hidden weights
    b_ref:    (4, 1, H)   per-gate bias (b_ih + b_hh folded)
    fc_w_ref: (H, fc_dim)   fc_b_ref: (1, fc_dim)
    fo_w_ref: (fc_dim, C)   fo_b_ref: (1, C)
    out_ref:  (B, C)
    """
    T, B = seq_len, batch
    H = w_hh_ref.shape[-1]

    x_all = x_ref[...]                                   # (T*B, D)

    # ---- Hoisted input projection: all timesteps, once, per gate. ----------
    # Off the serial path; removes repeated bias broadcasts and halves the
    # per-step MXU traffic inside the recurrence.
    xg = [jnp.dot(x_all, w_ih_ref[k], preferred_element_type=jnp.float32)
          + b_ref[k]
          for k in range(4)]                             # 4 x (T*B, H)

    h = jnp.zeros((B, H), jnp.float32)
    c = jnp.zeros((B, H), jnp.float32)

    # ---- Recurrence: fully unrolled, only h @ W_hh_k on the critical path. --
    for t in range(T):
        lo = t * B
        i_g = jax.nn.sigmoid(
            xg[0][lo:lo + B, :]
            + jnp.dot(h, w_hh_ref[0], preferred_element_type=jnp.float32))
        f_g = jax.nn.sigmoid(
            xg[1][lo:lo + B, :]
            + jnp.dot(h, w_hh_ref[1], preferred_element_type=jnp.float32))
        g_g = jnp.tanh(
            xg[2][lo:lo + B, :]
            + jnp.dot(h, w_hh_ref[2], preferred_element_type=jnp.float32))
        o_g = jax.nn.sigmoid(
            xg[3][lo:lo + B, :]
            + jnp.dot(h, w_hh_ref[3], preferred_element_type=jnp.float32))
        c = f_g * c + i_g * g_g
        h = o_g * jnp.tanh(c)

    # ---- Head: two fused Linear layers on the last hidden state. -----------
    fc = jnp.dot(h, fc_w_ref[...], preferred_element_type=jnp.float32) + fc_b_ref[...]
    out = jnp.dot(fc, fo_w_ref[...], preferred_element_type=jnp.float32) + fo_b_ref[...]
    out_ref[...] = out.astype(out_ref.dtype)


def decoder_forward(x, params):
    """x: (B, T, D_in) float32 (batch_first, like PyTorch). Returns (B, classes)."""
    w_ih, w_hh, b, fc_w, fc_b, fo_w, fo_b = params
    B, T, D = x.shape
    classes = fo_w.shape[-1]

    # Time-major, flattened to (T*B, D) so the kernel does one hoisted
    # input-projection GEMM per gate and cheap static row slices per step.
    x_tm = jnp.transpose(x, (1, 0, 2)).reshape(T * B, D)

    kernel = functools.partial(_decoder_kernel, seq_len=T, batch=B)
    vmem = lambda: pl.BlockSpec(memory_space=pltpu.MemorySpace.VMEM)

    return pl.pallas_call(
        kernel,
        out_shape=jax.ShapeDtypeStruct((B, classes), jnp.float32),
        in_specs=[vmem() for _ in range(8)],   # everything resident in VMEM, single DMA each
        out_specs=vmem(),
    )(x_tm, w_ih, w_hh, b, fc_w, fc_b, fo_w, fo_b)


def init_params(key, input_size, hidden_size, fc_dim, classes):
    """PyTorch-style uniform(-1/sqrt(fan), 1/sqrt(fan)) init.

    LSTM weights are stored per gate and transposed vs. PyTorch so the kernel
    does plain `x @ W`: w_ih (4, D, H), w_hh (4, H, H), b (4, 1, H) with
    b = b_ih + b_hh folded (the gates only ever see the sum).
    """
    ks = jax.random.split(key, 8)
    H = hidden_size
    k_lstm = 1.0 / math.sqrt(H)

    w_ih = jax.random.uniform(ks[0], (4, input_size, H), jnp.float32, -k_lstm, k_lstm)
    w_hh = jax.random.uniform(ks[1], (4, H, H), jnp.float32, -k_lstm, k_lstm)
    b_ih = jax.random.uniform(ks[2], (4, 1, H), jnp.float32, -k_lstm, k_lstm)
    b_hh = jax.random.uniform(ks[3], (4, 1, H), jnp.float32, -k_lstm, k_lstm)
    b = b_ih + b_hh

    k_fc = 1.0 / math.sqrt(H)
    fc_w = jax.random.uniform(ks[4], (H, fc_dim), jnp.float32, -k_fc, k_fc)
    fc_b = jax.random.uniform(ks[5], (1, fc_dim), jnp.float32, -k_fc, k_fc)

    k_fo = 1.0 / math.sqrt(fc_dim)
    fo_w = jax.random.uniform(ks[6], (fc_dim, classes), jnp.float32, -k_fo, k_fo)
    fo_b = jax.random.uniform(ks[7], (1, classes), jnp.float32, -k_fo, k_fo)

    return (w_ih, w_hh, b, fc_w, fc_b, fo_w, fo_b)


def decoder_reference(x, params):
    """Pure-JAX reference (lax.scan LSTM with PyTorch-style stacked weights)."""
    w_ih, w_hh, b, fc_w, fc_b, fo_w, fo_b = params
    B = x.shape[0]
    H = w_hh.shape[-1]

    # Rebuild the stacked (D, 4H)/(H, 4H)/(1, 4H) layout to cross-check the
    # kernel's per-gate decomposition.
    w_ih_s = jnp.concatenate([w_ih[k] for k in range(4)], axis=-1)
    w_hh_s = jnp.concatenate([w_hh[k] for k in range(4)], axis=-1)
    b_s = jnp.concatenate([b[k] for k in range(4)], axis=-1)

    def step(carry, x_t):
        h, c = carry
        gates = x_t @ w_ih_s + h @ w_hh_s + b_s
        i = jax.nn.sigmoid(gates[:, 0 * H:1 * H])
        f = jax.nn.sigmoid(gates[:, 1 * H:2 * H])
        g = jnp.tanh(gates[:, 2 * H:3 * H])
        o = jax.nn.sigmoid(gates[:, 3 * H:4 * H])
        c = f * c + i * g
        h = o * jnp.tanh(c)
        return (h, c), None

    h0 = jnp.zeros((B, H), jnp.float32)
    c0 = jnp.zeros((B, H), jnp.float32)
    (h_last, _), _ = jax.lax.scan(step, (h0, c0), jnp.transpose(x, (1, 0, 2)))
    out = h_last @ fc_w + fc_b
    out = out @ fo_w + fo_b
    return out


if __name__ == "__main__":
    # Shapes consistent with the module defaults:
    #   x: (batch=2, seq=8, input_size=16); hidden=64, fc_dim=32, classes=2
    B, T, D_IN = 2, 8, 16
    HIDDEN, FC_DIM, CLASSES = 64, 32, 2

    key = jax.random.PRNGKey(0)
    kx, kp = jax.random.split(key)
    x = jax.random.normal(kx, (B, T, D_IN), jnp.float32)
    params = init_params(kp, D_IN, HIDDEN, FC_DIM, CLASSES)

    out = jax.block_until_ready(decoder_forward(x, params))

    ref = decoder_reference(x, params)
    np.testing.assert_allclose(np.asarray(out), np.asarray(ref),
                               rtol=1e-4, atol=1e-5)
    assert out.shape == (B, CLASSES)
    print("KERNEL_OK")
</pallas_src>

<mosaic_0001>
module attributes {stable_mosaic.version = 11 : i64} {
  func.func @_decoder_kernel(%arg0: memref<16x16xf32, #tpu.memory_space<vmem>>, %arg1: memref<4x16x64xf32, #tpu.memory_space<vmem>>, %arg2: memref<4x64x64xf32, #tpu.memory_space<vmem>>, %arg3: memref<4x1x64xf32, #tpu.memory_space<vmem>>, %arg4: memref<64x32xf32, #tpu.memory_space<vmem>>, %arg5: memref<1x32xf32, #tpu.memory_space<vmem>>, %arg6: memref<32x2xf32, #tpu.memory_space<vmem>>, %arg7: memref<1x2xf32, #tpu.memory_space<vmem>>, %arg8: memref<2x2xf32, #tpu.memory_space<vmem>>) attributes {dimension_semantics = [], scalar_prefetch = 0 : i64, scratch_operands = 0 : i64, tpu.core_type = #tpu.core_type<tc>} {
    %c0 = arith.constant 0 : index
    %c0_0 = arith.constant 0 : index
    %0 = vector.load %arg0[%c0, %c0_0] : memref<16x16xf32, #tpu.memory_space<vmem>>, vector<16x16xf32>
    %c0_1 = arith.constant 0 : index
    %c0_2 = arith.constant 0 : index
    %c0_3 = arith.constant 0 : index
    %1 = vector.load %arg1[%c0_1, %c0_2, %c0_3] : memref<4x16x64xf32, #tpu.memory_space<vmem>>, vector<1x16x64xf32>
    %2 = vector.shape_cast %1 : vector<1x16x64xf32> to vector<16x64xf32>
    %cst = arith.constant dense<0.000000e+00> : vector<16x64xf32>
    %3 = tpu.matmul %0, %2, %cst {dimension_numbers = #tpu.dot_dimension_numbers<[1], [0], [0], [1], [0, 0, 1, 1], [], []>} : vector<16x16xf32>, vector<16x64xf32>, vector<16x64xf32> -> vector<16x64xf32>
    %c0_4 = arith.constant 0 : index
    %c0_5 = arith.constant 0 : index
    %c0_6 = arith.constant 0 : index
    %4 = vector.load %arg3[%c0_4, %c0_5, %c0_6] : memref<4x1x64xf32, #tpu.memory_space<vmem>>, vector<1x1x64xf32>
    %5 = vector.shape_cast %4 : vector<1x1x64xf32> to vector<1x64xf32>
    %6 = vector.broadcast %5 : vector<1x64xf32> to vector<16x64xf32>
    %7 = arith.addf %3, %6 : vector<16x64xf32>
    %c1 = arith.constant 1 : index
    %c0_7 = arith.constant 0 : index
    %c0_8 = arith.constant 0 : index
    %8 = vector.load %arg1[%c1, %c0_7, %c0_8] : memref<4x16x64xf32, #tpu.memory_space<vmem>>, vector<1x16x64xf32>
    %9 = vector.shape_cast %8 : vector<1x16x64xf32> to vector<16x64xf32>
    %cst_9 = arith.constant dense<0.000000e+00> : vector<16x64xf32>
    %10 = tpu.matmul %0, %9, %cst_9 {dimension_numbers = #tpu.dot_dimension_numbers<[1], [0], [0], [1], [0, 0, 1, 1], [], []>} : vector<16x16xf32>, vector<16x64xf32>, vector<16x64xf32> -> vector<16x64xf32>
    %c1_10 = arith.constant 1 : index
    %c0_11 = arith.constant 0 : index
    %c0_12 = arith.constant 0 : index
    %11 = vector.load %arg3[%c1_10, %c0_11, %c0_12] : memref<4x1x64xf32, #tpu.memory_space<vmem>>, vector<1x1x64xf32>
    %12 = vector.shape_cast %11 : vector<1x1x64xf32> to vector<1x64xf32>
    %13 = vector.broadcast %12 : vector<1x64xf32> to vector<16x64xf32>
    %14 = arith.addf %10, %13 : vector<16x64xf32>
    %c2 = arith.constant 2 : index
    %c0_13 = arith.constant 0 : index
    %c0_14 = arith.constant 0 : index
    %15 = vector.load %arg1[%c2, %c0_13, %c0_14] : memref<4x16x64xf32, #tpu.memory_space<vmem>>, vector<1x16x64xf32>
    %16 = vector.shape_cast %15 : vector<1x16x64xf32> to vector<16x64xf32>
    %cst_15 = arith.constant dense<0.000000e+00> : vector<16x64xf32>
    %17 = tpu.matmul %0, %16, %cst_15 {dimension_numbers = #tpu.dot_dimension_numbers<[1], [0], [0], [1], [0, 0, 1, 1], [], []>} : vector<16x16xf32>, vector<16x64xf32>, vector<16x64xf32> -> vector<16x64xf32>
    %c2_16 = arith.constant 2 : index
    %c0_17 = arith.constant 0 : index
    %c0_18 = arith.constant 0 : index
    %18 = vector.load %arg3[%c2_16, %c0_17, %c0_18] : memref<4x1x64xf32, #tpu.memory_space<vmem>>, vector<1x1x64xf32>
    %19 = vector.shape_cast %18 : vector<1x1x64xf32> to vector<1x64xf32>
    %20 = vector.broadcast %19 : vector<1x64xf32> to vector<16x64xf32>
    %21 = arith.addf %17, %20 : vector<16x64xf32>
    %c3 = arith.constant 3 : index
    %c0_19 = arith.constant 0 : index
    %c0_20 = arith.constant 0 : index
    %22 = vector.load %arg1[%c3, %c0_19, %c0_20] : memref<4x16x64xf32, #tpu.memory_space<vmem>>, vector<1x16x64xf32>
    %23 = vector.shape_cast %22 : vector<1x16x64xf32> to vector<16x64xf32>
    %cst_21 = arith.constant dense<0.000000e+00> : vector<16x64xf32>
    %24 = tpu.matmul %0, %23, %cst_21 {dimension_numbers = #tpu.dot_dimension_numbers<[1], [0], [0], [1], [0, 0, 1, 1], [], []>} : vector<16x16xf32>, vector<16x64xf32>, vector<16x64xf32> -> vector<16x64xf32>
    %c3_22 = arith.constant 3 : index
    %c0_23 = arith.constant 0 : index
    %c0_24 = arith.constant 0 : index
    %25 = vector.load %arg3[%c3_22, %c0_23, %c0_24] : memref<4x1x64xf32, #tpu.memory_space<vmem>>, vector<1x1x64xf32>
    %26 = vector.shape_cast %25 : vector<1x1x64xf32> to vector<1x64xf32>
    %27 = vector.broadcast %26 : vector<1x64xf32> to vector<16x64xf32>
    %28 = arith.addf %24, %27 : vector<16x64xf32>
    %cst_25 = arith.constant 0.000000e+00 : f32
    %29 = vector.broadcast %cst_25 : f32 to vector<2x64xf32>
    %cst_26 = arith.constant 0.000000e+00 : f32
    %30 = vector.broadcast %cst_26 : f32 to vector<2x64xf32>
    %31 = vector.extract_strided_slice %7 {offsets = [0, 0], sizes = [2, 64], strides = [1, 1]} : vector<16x64xf32> to vector<2x64xf32>
    %c0_27 = arith.constant 0 : index
    %c0_28 = arith.constant 0 : index
    %c0_29 = arith.constant 0 : index
    %32 = vector.load %arg2[%c0_27, %c0_28, %c0_29] : memref<4x64x64xf32, #tpu.memory_space<vmem>>, vector<1x64x64xf32>
    %33 = vector.shape_cast %32 : vector<1x64x64xf32> to vector<64x64xf32>
    %cst_30 = arith.constant dense<0.000000e+00> : vector<2x64xf32>
    %34 = tpu.matmul %29, %33, %cst_30 {dimension_numbers = #tpu.dot_dimension_numbers<[1], [0], [0], [1], [0, 0, 1, 1], [], []>} : vector<2x64xf32>, vector<64x64xf32>, vector<2x64xf32> -> vector<2x64xf32>
    %35 = arith.addf %31, %34 : vector<2x64xf32>
    %36 = arith.negf %35 : vector<2x64xf32>
    %37 = math.exp %36 : vector<2x64xf32>
    %cst_31 = arith.constant 1.000000e+00 : f32
    %38 = vector.broadcast %cst_31 : f32 to vector<2x64xf32>
    %39 = arith.addf %38, %37 : vector<2x64xf32>
    %40 = arith.divf %38, %39 : vector<2x64xf32>
    %41 = vector.extract_strided_slice %14 {offsets = [0, 0], sizes = [2, 64], strides = [1, 1]} : vector<16x64xf32> to vector<2x64xf32>
    %c1_32 = arith.constant 1 : index
    %c0_33 = arith.constant 0 : index
    %c0_34 = arith.constant 0 : index
    %42 = vector.load %arg2[%c1_32, %c0_33, %c0_34] : memref<4x64x64xf32, #tpu.memory_space<vmem>>, vector<1x64x64xf32>
    %43 = vector.shape_cast %42 : vector<1x64x64xf32> to vector<64x64xf32>
    %cst_35 = arith.constant dense<0.000000e+00> : vector<2x64xf32>
    %44 = tpu.matmul %29, %43, %cst_35 {dimension_numbers = #tpu.dot_dimension_numbers<[1], [0], [0], [1], [0, 0, 1, 1], [], []>} : vector<2x64xf32>, vector<64x64xf32>, vector<2x64xf32> -> vector<2x64xf32>
    %45 = arith.addf %41, %44 : vector<2x64xf32>
    %46 = arith.negf %45 : vector<2x64xf32>
    %47 = math.exp %46 : vector<2x64xf32>
    %cst_36 = arith.constant 1.000000e+00 : f32
    %48 = vector.broadcast %cst_36 : f32 to vector<2x64xf32>
    %49 = arith.addf %48, %47 : vector<2x64xf32>
    %50 = arith.divf %48, %49 : vector<2x64xf32>
    %51 = vector.extract_strided_slice %21 {offsets = [0, 0], sizes = [2, 64], strides = [1, 1]} : vector<16x64xf32> to vector<2x64xf32>
    %c2_37 = arith.constant 2 : index
    %c0_38 = arith.constant 0 : index
    %c0_39 = arith.constant 0 : index
    %52 = vector.load %arg2[%c2_37, %c0_38, %c0_39] : memref<4x64x64xf32, #tpu.memory_space<vmem>>, vector<1x64x64xf32>
    %53 = vector.shape_cast %52 : vector<1x64x64xf32> to vector<64x64xf32>
    %cst_40 = arith.constant dense<0.000000e+00> : vector<2x64xf32>
    %54 = tpu.matmul %29, %53, %cst_40 {dimension_numbers = #tpu.dot_dimension_numbers<[1], [0], [0], [1], [0, 0, 1, 1], [], []>} : vector<2x64xf32>, vector<64x64xf32>, vector<2x64xf32> -> vector<2x64xf32>
    %55 = arith.addf %51, %54 : vector<2x64xf32>
    %56 = math.tanh %55 : vector<2x64xf32>
    %57 = vector.extract_strided_slice %28 {offsets = [0, 0], sizes = [2, 64], strides = [1, 1]} : vector<16x64xf32> to vector<2x64xf32>
    %c3_41 = arith.constant 3 : index
    %c0_42 = arith.constant 0 : index
    %c0_43 = arith.constant 0 : index
    %58 = vector.load %arg2[%c3_41, %c0_42, %c0_43] : memref<4x64x64xf32, #tpu.memory_space<vmem>>, vector<1x64x64xf32>
    %59 = vector.shape_cast %58 : vector<1x64x64xf32> to vector<64x64xf32>
    %cst_44 = arith.constant dense<0.000000e+00> : vector<2x64xf32>
    %60 = tpu.matmul %29, %59, %cst_44 {dimension_numbers = #tpu.dot_dimension_numbers<[1], [0], [0], [1], [0, 0, 1, 1], [], []>} : vector<2x64xf32>, vector<64x64xf32>, vector<2x64xf32> -> vector<2x64xf32>
    %61 = arith.addf %57, %60 : vector<2x64xf32>
    %62 = arith.negf %61 : vector<2x64xf32>
    %63 = math.exp %62 : vector<2x64xf32>
    %cst_45 = arith.constant 1.000000e+00 : f32
    %64 = vector.broadcast %cst_45 : f32 to vector<2x64xf32>
    %65 = arith.addf %64, %63 : vector<2x64xf32>
    %66 = arith.divf %64, %65 : vector<2x64xf32>
    %67 = arith.mulf %50, %30 : vector<2x64xf32>
    %68 = arith.mulf %40, %56 : vector<2x64xf32>
    %69 = arith.addf %67, %68 : vector<2x64xf32>
    %70 = math.tanh %69 : vector<2x64xf32>
    %71 = arith.mulf %66, %70 : vector<2x64xf32>
    %72 = vector.extract_strided_slice %7 {offsets = [2, 0], sizes = [2, 64], strides = [1, 1]} : vector<16x64xf32> to vector<2x64xf32>
    %c0_46 = arith.constant 0 : index
    %c0_47 = arith.constant 0 : index
    %c0_48 = arith.constant 0 : index
    %73 = vector.load %arg2[%c0_46, %c0_47, %c0_48] : memref<4x64x64xf32, #tpu.memory_space<vmem>>, vector<1x64x64xf32>
    %74 = vector.shape_cast %73 : vector<1x64x64xf32> to vector<64x64xf32>
    %cst_49 = arith.constant dense<0.000000e+00> : vector<2x64xf32>
    %75 = tpu.matmul %71, %74, %cst_49 {dimension_numbers = #tpu.dot_dimension_numbers<[1], [0], [0], [1], [0, 0, 1, 1], [], []>} : vector<2x64xf32>, vector<64x64xf32>, vector<2x64xf32> -> vector<2x64xf32>
    %76 = arith.addf %72, %75 : vector<2x64xf32>
    %77 = arith.negf %76 : vector<2x64xf32>
    %78 = math.exp %77 : vector<2x64xf32>
    %cst_50 = arith.constant 1.000000e+00 : f32
    %79 = vector.broadcast %cst_50 : f32 to vector<2x64xf32>
    %80 = arith.addf %79, %78 : vector<2x64xf32>
    %81 = arith.divf %79, %80 : vector<2x64xf32>
    %82 = vector.extract_strided_slice %14 {offsets = [2, 0], sizes = [2, 64], strides = [1, 1]} : vector<16x64xf32> to vector<2x64xf32>
    %c1_51 = arith.constant 1 : index
    %c0_52 = arith.constant 0 : index
    %c0_53 = arith.constant 0 : index
    %83 = vector.load %arg2[%c1_51, %c0_52, %c0_53] : memref<4x64x64xf32, #tpu.memory_space<vmem>>, vector<1x64x64xf32>
    %84 = vector.shape_cast %83 : vector<1x64x64xf32> to vector<64x64xf32>
    %cst_54 = arith.constant dense<0.000000e+00> : vector<2x64xf32>
    %85 = tpu.matmul %71, %84, %cst_54 {dimension_numbers = #tpu.dot_dimension_numbers<[1], [0], [0], [1], [0, 0, 1, 1], [], []>} : vector<2x64xf32>, vector<64x64xf32>, vector<2x64xf32> -> vector<2x64xf32>
    %86 = arith.addf %82, %85 : vector<2x64xf32>
    %87 = arith.negf %86 : vector<2x64xf32>
    %88 = math.exp %87 : vector<2x64xf32>
    %cst_55 = arith.constant 1.000000e+00 : f32
    %89 = vector.broadcast %cst_55 : f32 to vector<2x64xf32>
    %90 = arith.addf %89, %88 : vector<2x64xf32>
    %91 = arith.divf %89, %90 : vector<2x64xf32>
    %92 = vector.extract_strided_slice %21 {offsets = [2, 0], sizes = [2, 64], strides = [1, 1]} : vector<16x64xf32> to vector<2x64xf32>
    %c2_56 = arith.constant 2 : index
    %c0_57 = arith.constant 0 : index
    %c0_58 = arith.constant 0 : index
    %93 = vector.load %arg2[%c2_56, %c0_57, %c0_58] : memref<4x64x64xf32, #tpu.memory_space<vmem>>, vector<1x64x64xf32>
    %94 = vector.shape_cast %93 : vector<1x64x64xf32> to vector<64x64xf32>
    %cst_59 = arith.constant dense<0.000000e+00> : vector<2x64xf32>
    %95 = tpu.matmul %71, %94, %cst_59 {dimension_numbers = #tpu.dot_dimension_numbers<[1], [0], [0], [1], [0, 0, 1, 1], [], []>} : vector<2x64xf32>, vector<64x64xf32>, vector<2x64xf32> -> vector<2x64xf32>
    %96 = arith.addf %92, %95 : vector<2x64xf32>
    %97 = math.tanh %96 : vector<2x64xf32>
    %98 = vector.extract_strided_slice %28 {offsets = [2, 0], sizes = [2, 64], strides = [1, 1]} : vector<16x64xf32> to vector<2x64xf32>
    %c3_60 = arith.constant 3 : index
    %c0_61 = arith.constant 0 : index
    %c0_62 = arith.constant 0 : index
    %99 = vector.load %arg2[%c3_60, %c0_61, %c0_62] : memref<4x64x64xf32, #tpu.memory_space<vmem>>, vector<1x64x64xf32>
    %100 = vector.shape_cast %99 : vector<1x64x64xf32> to vector<64x64xf32>
    %cst_63 = arith.constant dense<0.000000e+00> : vector<2x64xf32>
    %101 = tpu.matmul %71, %100, %cst_63 {dimension_numbers = #tpu.dot_dimension_numbers<[1], [0], [0], [1], [0, 0, 1, 1], [], []>} : vector<2x64xf32>, vector<64x64xf32>, vector<2x64xf32> -> vector<2x64xf32>
    %102 = arith.addf %98, %101 : vector<2x64xf32>
    %103 = arith.negf %102 : vector<2x64xf32>
    %104 = math.exp %103 : vector<2x64xf32>
    %cst_64 = arith.constant 1.000000e+00 : f32
    %105 = vector.broadcast %cst_64 : f32 to vector<2x64xf32>
    %106 = arith.addf %105, %104 : vector<2x64xf32>
    %107 = arith.divf %105, %106 : vector<2x64xf32>
    %108 = arith.mulf %91, %69 : vector<2x64xf32>
    %109 = arith.mulf %81, %97 : vector<2x64xf32>
    %110 = arith.addf %108, %109 : vector<2x64xf32>
    %111 = math.tanh %110 : vector<2x64xf32>
    %112 = arith.mulf %107, %111 : vector<2x64xf32>
    %113 = vector.extract_strided_slice %7 {offsets = [4, 0], sizes = [2, 64], strides = [1, 1]} : vector<16x64xf32> to vector<2x64xf32>
    %c0_65 = arith.constant 0 : index
    %c0_66 = arith.constant 0 : index
    %c0_67 = arith.constant 0 : index
    %114 = vector.load %arg2[%c0_65, %c0_66, %c0_67] : memref<4x64x64xf32, #tpu.memory_space<vmem>>, vector<1x64x64xf32>
    %115 = vector.shape_cast %114 : vector<1x64x64xf32> to vector<64x64xf32>
    %cst_68 = arith.constant dense<0.000000e+00> : vector<2x64xf32>
    %116 = tpu.matmul %112, %115, %cst_68 {dimension_numbers = #tpu.dot_dimension_numbers<[1], [0], [0], [1], [0, 0, 1, 1], [], []>} : vector<2x64xf32>, vector<64x64xf32>, vector<2x64xf32> -> vector<2x64xf32>
    %117 = arith.addf %113, %116 : vector<2x64xf32>
    %118 = arith.negf %117 : vector<2x64xf32>
    %119 = math.exp %118 : vector<2x64xf32>
    %cst_69 = arith.constant 1.000000e+00 : f32
    %120 = vector.broadcast %cst_69 : f32 to vector<2x64xf32>
    %121 = arith.addf %120, %119 : vector<2x64xf32>
    %122 = arith.divf %120, %121 : vector<2x64xf32>
    %123 = vector.extract_strided_slice %14 {offsets = [4, 0], sizes = [2, 64], strides = [1, 1]} : vector<16x64xf32> to vector<2x64xf32>
    %c1_70 = arith.constant 1 : index
    %c0_71 = arith.constant 0 : index
    %c0_72 = arith.constant 0 : index
    %124 = vector.load %arg2[%c1_70, %c0_71, %c0_72] : memref<4x64x64xf32, #tpu.memory_space<vmem>>, vector<1x64x64xf32>
    %125 = vector.shape_cast %124 : vector<1x64x64xf32> to vector<64x64xf32>
    %cst_73 = arith.constant dense<0.000000e+00> : vector<2x64xf32>
    %126 = tpu.matmul %112, %125, %cst_73 {dimension_numbers = #tpu.dot_dimension_numbers<[1], [0], [0], [1], [0, 0, 1, 1], [], []>} : vector<2x64xf32>, vector<64x64xf32>, vector<2x64xf32> -> vector<2x64xf32>
    %127 = arith.addf %123, %126 : vector<2x64xf32>
    %128 = arith.negf %127 : vector<2x64xf32>
    %129 = math.exp %128 : vector<2x64xf32>
    %cst_74 = arith.constant 1.000000e+00 : f32
    %130 = vector.broadcast %cst_74 : f32 to vector<2x64xf32>
    %131 = arith.addf %130, %129 : vector<2x64xf32>
    %132 = arith.divf %130, %131 : vector<2x64xf32>
    %133 = vector.extract_strided_slice %21 {offsets = [4, 0], sizes = [2, 64], strides = [1, 1]} : vector<16x64xf32> to vector<2x64xf32>
    %c2_75 = arith.constant 2 : index
    %c0_76 = arith.constant 0 : index
    %c0_77 = arith.constant 0 : index
    %134 = vector.load %arg2[%c2_75, %c0_76, %c0_77] : memref<4x64x64xf32, #tpu.memory_space<vmem>>, vector<1x64x64xf32>
    %135 = vector.shape_cast %134 : vector<1x64x64xf32> to vector<64x64xf32>
    %cst_78 = arith.constant dense<0.000000e+00> : vector<2x64xf32>
    %136 = tpu.matmul %112, %135, %cst_78 {dimension_numbers = #tpu.dot_dimension_numbers<[1], [0], [0], [1], [0, 0, 1, 1], [], []>} : vector<2x64xf32>, vector<64x64xf32>, vector<2x64xf32> -> vector<2x64xf32>
    %137 = arith.addf %133, %136 : vector<2x64xf32>
    %138 = math.tanh %137 : vector<2x64xf32>
    %139 = vector.extract_strided_slice %28 {offsets = [4, 0], sizes = [2, 64], strides = [1, 1]} : vector<16x64xf32> to vector<2x64xf32>
    %c3_79 = arith.constant 3 : index
    %c0_80 = arith.constant 0 : index
    %c0_81 = arith.constant 0 : index
    %140 = vector.load %arg2[%c3_79, %c0_80, %c0_81] : memref<4x64x64xf32, #tpu.memory_space<vmem>>, vector<1x64x64xf32>
    %141 = vector.shape_cast %140 : vector<1x64x64xf32> to vector<64x64xf32>
    %cst_82 = arith.constant dense<0.000000e+00> : vector<2x64xf32>
    %142 = tpu.matmul %112, %141, %cst_82 {dimension_numbers = #tpu.dot_dimension_numbers<[1], [0], [0], [1], [0, 0, 1, 1], [], []>} : vector<2x64xf32>, vector<64x64xf32>, vector<2x64xf32> -> vector<2x64xf32>
    %143 = arith.addf %139, %142 : vector<2x64xf32>
    %144 = arith.negf %143 : vector<2x64xf32>
    %145 = math.exp %144 : vector<2x64xf32>
    %cst_83 = arith.constant 1.000000e+00 : f32
    %146 = vector.broadcast %cst_83 : f32 to vector<2x64xf32>
    %147 = arith.addf %146, %145 : vector<2x64xf32>
    %148 = arith.divf %146, %147 : vector<2x64xf32>
    %149 = arith.mulf %132, %110 : vector<2x64xf32>
    %150 = arith.mulf %122, %138 : vector<2x64xf32>
    %151 = arith.addf %149, %150 : vector<2x64xf32>
    %152 = math.tanh %151 : vector<2x64xf32>
    %153 = arith.mulf %148, %152 : vector<2x64xf32>
    %154 = vector.extract_strided_slice %7 {offsets = [6, 0], sizes = [2, 64], strides = [1, 1]} : vector<16x64xf32> to vector<2x64xf32>
    %c0_84 = arith.constant 0 : index
    %c0_85 = arith.constant 0 : index
    %c0_86 = arith.constant 0 : index
    %155 = vector.load %arg2[%c0_84, %c0_85, %c0_86] : memref<4x64x64xf32, #tpu.memory_space<vmem>>, vector<1x64x64xf32>
    %156 = vector.shape_cast %155 : vector<1x64x64xf32> to vector<64x64xf32>
    %cst_87 = arith.constant dense<0.000000e+00> : vector<2x64xf32>
    %157 = tpu.matmul %153, %156, %cst_87 {dimension_numbers = #tpu.dot_dimension_numbers<[1], [0], [0], [1], [0, 0, 1, 1], [], []>} : vector<2x64xf32>, vector<64x64xf32>, vector<2x64xf32> -> vector<2x64xf32>
    %158 = arith.addf %154, %157 : vector<2x64xf32>
    %159 = arith.negf %158 : vector<2x64xf32>
    %160 = math.exp %159 : vector<2x64xf32>
    %cst_88 = arith.constant 1.000000e+00 : f32
    %161 = vector.broadcast %cst_88 : f32 to vector<2x64xf32>
    %162 = arith.addf %161, %160 : vector<2x64xf32>
    %163 = arith.divf %161, %162 : vector<2x64xf32>
    %164 = vector.extract_strided_slice %14 {offsets = [6, 0], sizes = [2, 64], strides = [1, 1]} : vector<16x64xf32> to vector<2x64xf32>
    %c1_89 = arith.constant 1 : index
    %c0_90 = arith.constant 0 : index
    %c0_91 = arith.constant 0 : index
    %165 = vector.load %arg2[%c1_89, %c0_90, %c0_91] : memref<4x64x64xf32, #tpu.memory_space<vmem>>, vector<1x64x64xf32>
    %166 = vector.shape_cast %165 : vector<1x64x64xf32> to vector<64x64xf32>
    %cst_92 = arith.constant dense<0.000000e+00> : vector<2x64xf32>
    %167 = tpu.matmul %153, %166, %cst_92 {dimension_numbers = #tpu.dot_dimension_numbers<[1], [0], [0], [1], [0, 0, 1, 1], [], []>} : vector<2x64xf32>, vector<64x64xf32>, vector<2x64xf32> -> vector<2x64xf32>
    %168 = arith.addf %164, %167 : vector<2x64xf32>
    %169 = arith.negf %168 : vector<2x64xf32>
    %170 = math.exp %169 : vector<2x64xf32>
    %cst_93 = arith.constant 1.000000e+00 : f32
    %171 = vector.broadcast %cst_93 : f32 to vector<2x64xf32>
    %172 = arith.addf %171, %170 : vector<2x64xf32>
    %173 = arith.divf %171, %172 : vector<2x64xf32>
    %174 = vector.extract_strided_slice %21 {offsets = [6, 0], sizes = [2, 64], strides = [1, 1]} : vector<16x64xf32> to vector<2x64xf32>
    %c2_94 = arith.constant 2 : index
    %c0_95 = arith.constant 0 : index
    %c0_96 = arith.constant 0 : index
    %175 = vector.load %arg2[%c2_94, %c0_95, %c0_96] : memref<4x64x64xf32, #tpu.memory_space<vmem>>, vector<1x64x64xf32>
    %176 = vector.shape_cast %175 : vector<1x64x64xf32> to vector<64x64xf32>
    %cst_97 = arith.constant dense<0.000000e+00> : vector<2x64xf32>
    %177 = tpu.matmul %153, %176, %cst_97 {dimension_numbers = #tpu.dot_dimension_numbers<[1], [0], [0], [1], [0, 0, 1, 1], [], []>} : vector<2x64xf32>, vector<64x64xf32>, vector<2x64xf32> -> vector<2x64xf32>
    %178 = arith.addf %174, %177 : vector<2x64xf32>
    %179 = math.tanh %178 : vector<2x64xf32>
    %180 = vector.extract_strided_slice %28 {offsets = [6, 0], sizes = [2, 64], strides = [1, 1]} : vector<16x64xf32> to vector<2x64xf32>
    %c3_98 = arith.constant 3 : index
    %c0_99 = arith.constant 0 : index
    %c0_100 = arith.constant 0 : index
    %181 = vector.load %arg2[%c3_98, %c0_99, %c0_100] : memref<4x64x64xf32, #tpu.memory_space<vmem>>, vector<1x64x64xf32>
    %182 = vector.shape_cast %181 : vector<1x64x64xf32> to vector<64x64xf32>
    %cst_101 = arith.constant dense<0.000000e+00> : vector<2x64xf32>
    %183 = tpu.matmul %153, %182, %cst_101 {dimension_numbers = #tpu.dot_dimension_numbers<[1], [0], [0], [1], [0, 0, 1, 1], [], []>} : vector<2x64xf32>, vector<64x64xf32>, vector<2x64xf32> -> vector<2x64xf32>
    %184 = arith.addf %180, %183 : vector<2x64xf32>
    %185 = arith.negf %184 : vector<2x64xf32>
    %186 = math.exp %185 : vector<2x64xf32>
    %cst_102 = arith.constant 1.000000e+00 : f32
    %187 = vector.broadcast %cst_102 : f32 to vector<2x64xf32>
    %188 = arith.addf %187, %186 : vector<2x64xf32>
    %189 = arith.divf %187, %188 : vector<2x64xf32>
    %190 = arith.mulf %173, %151 : vector<2x64xf32>
    %191 = arith.mulf %163, %179 : vector<2x64xf32>
    %192 = arith.addf %190, %191 : vector<2x64xf32>
    %193 = math.tanh %192 : vector<2x64xf32>
    %194 = arith.mulf %189, %193 : vector<2x64xf32>
    %195 = vector.extract_strided_slice %7 {offsets = [8, 0], sizes = [2, 64], strides = [1, 1]} : vector<16x64xf32> to vector<2x64xf32>
    %c0_103 = arith.constant 0 : index
    %c0_104 = arith.constant 0 : index
    %c0_105 = arith.constant 0 : index
    %196 = vector.load %arg2[%c0_103, %c0_104, %c0_105] : memref<4x64x64xf32, #tpu.memory_space<vmem>>, vector<1x64x64xf32>
    %197 = vector.shape_cast %196 : vector<1x64x64xf32> to vector<64x64xf32>
    %cst_106 = arith.constant dense<0.000000e+00> : vector<2x64xf32>
    %198 = tpu.matmul %194, %197, %cst_106 {dimension_numbers = #tpu.dot_dimension_numbers<[1], [0], [0], [1], [0, 0, 1, 1], [], []>} : vector<2x64xf32>, vector<64x64xf32>, vector<2x64xf32> -> vector<2x64xf32>
    %199 = arith.addf %195, %198 : vector<2x64xf32>
    %200 = arith.negf %199 : vector<2x64xf32>
    %201 = math.exp %200 : vector<2x64xf32>
    %cst_107 = arith.constant 1.000000e+00 : f32
    %202 = vector.broadcast %cst_107 : f32 to vector<2x64xf32>
    %203 = arith.addf %202, %201 : vector<2x64xf32>
    %204 = arith.divf %202, %203 : vector<2x64xf32>
    %205 = vector.extract_strided_slice %14 {offsets = [8, 0], sizes = [2, 64], strides = [1, 1]} : vector<16x64xf32> to vector<2x64xf32>
    %c1_108 = arith.constant 1 : index
    %c0_109 = arith.constant 0 : index
    %c0_110 = arith.constant 0 : index
    %206 = vector.load %arg2[%c1_108, %c0_109, %c0_110] : memref<4x64x64xf32, #tpu.memory_space<vmem>>, vector<1x64x64xf32>
    %207 = vector.shape_cast %206 : vector<1x64x64xf32> to vector<64x64xf32>
    %cst_111 = arith.constant dense<0.000000e+00> : vector<2x64xf32>
    %208 = tpu.matmul %194, %207, %cst_111 {dimension_numbers = #tpu.dot_dimension_numbers<[1], [0], [0], [1], [0, 0, 1, 1], [], []>} : vector<2x64xf32>, vector<64x64xf32>, vector<2x64xf32> -> vector<2x64xf32>
    %209 = arith.addf %205, %208 : vector<2x64xf32>
    %210 = arith.negf %209 : vector<2x64xf32>
    %211 = math.exp %210 : vector<2x64xf32>
    %cst_112 = arith.constant 1.000000e+00 : f32
    %212 = vector.broadcast %cst_112 : f32 to vector<2x64xf32>
    %213 = arith.addf %212, %211 : vector<2x64xf32>
    %214 = arith.divf %212, %213 : vector<2x64xf32>
    %215 = vector.extract_strided_slice %21 {offsets = [8, 0], sizes = [2, 64], strides = [1, 1]} : vector<16x64xf32> to vector<2x64xf32>
    %c2_113 = arith.constant 2 : index
    %c0_114 = arith.constant 0 : index
    %c0_115 = arith.constant 0 : index
    %216 = vector.load %arg2[%c2_113, %c0_114, %c0_115] : memref<4x64x64xf32, #tpu.memory_space<vmem>>, vector<1x64x64xf32>
    %217 = vector.shape_cast %216 : vector<1x64x64xf32> to vector<64x64xf32>
    %cst_116 = arith.constant dense<0.000000e+00> : vector<2x64xf32>
    %218 = tpu.matmul %194, %217, %cst_116 {dimension_numbers = #tpu.dot_dimension_numbers<[1], [0], [0], [1], [0, 0, 1, 1], [], []>} : vector<2x64xf32>, vector<64x64xf32>, vector<2x64xf32> -> vector<2x64xf32>
    %219 = arith.addf %215, %218 : vector<2x64xf32>
    %220 = math.tanh %219 : vector<2x64xf32>
    %221 = vector.extract_strided_slice %28 {offsets = [8, 0], sizes = [2, 64], strides = [1, 1]} : vector<16x64xf32> to vector<2x64xf32>
    %c3_117 = arith.constant 3 : index
    %c0_118 = arith.constant 0 : index
    %c0_119 = arith.constant 0 : index
    %222 = vector.load %arg2[%c3_117, %c0_118, %c0_119] : memref<4x64x64xf32, #tpu.memory_space<vmem>>, vector<1x64x64xf32>
    %223 = vector.shape_cast %222 : vector<1x64x64xf32> to vector<64x64xf32>
    %cst_120 = arith.constant dense<0.000000e+00> : vector<2x64xf32>
    %224 = tpu.matmul %194, %223, %cst_120 {dimension_numbers = #tpu.dot_dimension_numbers<[1], [0], [0], [1], [0, 0, 1, 1], [], []>} : vector<2x64xf32>, vector<64x64xf32>, vector<2x64xf32> -> vector<2x64xf32>
    %225 = arith.addf %221, %224 : vector<2x64xf32>
    %226 = arith.negf %225 : vector<2x64xf32>
    %227 = math.exp %226 : vector<2x64xf32>
    %cst_121 = arith.constant 1.000000e+00 : f32
    %228 = vector.broadcast %cst_121 : f32 to vector<2x64xf32>
    %229 = arith.addf %228, %227 : vector<2x64xf32>
    %230 = arith.divf %228, %229 : vector<2x64xf32>
    %231 = arith.mulf %214, %192 : vector<2x64xf32>
    %232 = arith.mulf %204, %220 : vector<2x64xf32>
    %233 = arith.addf %231, %232 : vector<2x64xf32>
    %234 = math.tanh %233 : vector<2x64xf32>
    %235 = arith.mulf %230, %234 : vector<2x64xf32>
    %236 = vector.extract_strided_slice %7 {offsets = [10, 0], sizes = [2, 64], strides = [1, 1]} : vector<16x64xf32> to vector<2x64xf32>
    %c0_122 = arith.constant 0 : index
    %c0_123 = arith.constant 0 : index
    %c0_124 = arith.constant 0 : index
    %237 = vector.load %arg2[%c0_122, %c0_123, %c0_124] : memref<4x64x64xf32, #tpu.memory_space<vmem>>, vector<1x64x64xf32>
    %238 = vector.shape_cast %237 : vector<1x64x64xf32> to vector<64x64xf32>
    %cst_125 = arith.constant dense<0.000000e+00> : vector<2x64xf32>
    %239 = tpu.matmul %235, %238, %cst_125 {dimension_numbers = #tpu.dot_dimension_numbers<[1], [0], [0], [1], [0, 0, 1, 1], [], []>} : vector<2x64xf32>, vector<64x64xf32>, vector<2x64xf32> -> vector<2x64xf32>
    %240 = arith.addf %236, %239 : vector<2x64xf32>
    %241 = arith.negf %240 : vector<2x64xf32>
    %242 = math.exp %241 : vector<2x64xf32>
    %cst_126 = arith.constant 1.000000e+00 : f32
    %243 = vector.broadcast %cst_126 : f32 to vector<2x64xf32>
    %244 = arith.addf %243, %242 : vector<2x64xf32>
    %245 = arith.divf %243, %244 : vector<2x64xf32>
    %246 = vector.extract_strided_slice %14 {offsets = [10, 0], sizes = [2, 64], strides = [1, 1]} : vector<16x64xf32> to vector<2x64xf32>
    %c1_127 = arith.constant 1 : index
    %c0_128 = arith.constant 0 : index
    %c0_129 = arith.constant 0 : index
    %247 = vector.load %arg2[%c1_127, %c0_128, %c0_129] : memref<4x64x64xf32, #tpu.memory_space<vmem>>, vector<1x64x64xf32>
    %248 = vector.shape_cast %247 : vector<1x64x64xf32> to vector<64x64xf32>
    %cst_130 = arith.constant dense<0.000000e+00> : vector<2x64xf32>
    %249 = tpu.matmul %235, %248, %cst_130 {dimension_numbers = #tpu.dot_dimension_numbers<[1], [0], [0], [1], [0, 0, 1, 1], [], []>} : vector<2x64xf32>, vector<64x64xf32>, vector<2x64xf32> -> vector<2x64xf32>
    %250 = arith.addf %246, %249 : vector<2x64xf32>
    %251 = arith.negf %250 : vector<2x64xf32>
    %252 = math.exp %251 : vector<2x64xf32>
    %cst_131 = arith.constant 1.000000e+00 : f32
    %253 = vector.broadcast %cst_131 : f32 to vector<2x64xf32>
    %254 = arith.addf %253, %252 : vector<2x64xf32>
    %255 = arith.divf %253, %254 : vector<2x64xf32>
    %256 = vector.extract_strided_slice %21 {offsets = [10, 0], sizes = [2, 64], strides = [1, 1]} : vector<16x64xf32> to vector<2x64xf32>
    %c2_132 = arith.constant 2 : index
    %c0_133 = arith.constant 0 : index
    %c0_134 = arith.constant 0 : index
    %257 = vector.load %arg2[%c2_132, %c0_133, %c0_134] : memref<4x64x64xf32, #tpu.memory_space<vmem>>, vector<1x64x64xf32>
    %258 = vector.shape_cast %257 : vector<1x64x64xf32> to vector<64x64xf32>
    %cst_135 = arith.constant dense<0.000000e+00> : vector<2x64xf32>
    %259 = tpu.matmul %235, %258, %cst_135 {dimension_numbers = #tpu.dot_dimension_numbers<[1], [0], [0], [1], [0, 0, 1, 1], [], []>} : vector<2x64xf32>, vector<64x64xf32>, vector<2x64xf32> -> vector<2x64xf32>
    %260 = arith.addf %256, %259 : vector<2x64xf32>
    %261 = math.tanh %260 : vector<2x64xf32>
    %262 = vector.extract_strided_slice %28 {offsets = [10, 0], sizes = [2, 64], strides = [1, 1]} : vector<16x64xf32> to vector<2x64xf32>
    %c3_136 = arith.constant 3 : index
    %c0_137 = arith.constant 0 : index
    %c0_138 = arith.constant 0 : index
    %263 = vector.load %arg2[%c3_136, %c0_137, %c0_138] : memref<4x64x64xf32, #tpu.memory_space<vmem>>, vector<1x64x64xf32>
    %264 = vector.shape_cast %263 : vector<1x64x64xf32> to vector<64x64xf32>
    %cst_139 = arith.constant dense<0.000000e+00> : vector<2x64xf32>
    %265 = tpu.matmul %235, %264, %cst_139 {dimension_numbers = #tpu.dot_dimension_numbers<[1], [0], [0], [1], [0, 0, 1, 1], [], []>} : vector<2x64xf32>, vector<64x64xf32>, vector<2x64xf32> -> vector<2x64xf32>
    %266 = arith.addf %262, %265 : vector<2x64xf32>
    %267 = arith.negf %266 : vector<2x64xf32>
    %268 = math.exp %267 : vector<2x64xf32>
    %cst_140 = arith.constant 1.000000e+00 : f32
    %269 = vector.broadcast %cst_140 : f32 to vector<2x64xf32>
    %270 = arith.addf %269, %268 : vector<2x64xf32>
    %271 = arith.divf %269, %270 : vector<2x64xf32>
    %272 = arith.mulf %255, %233 : vector<2x64xf32>
    %273 = arith.mulf %245, %261 : vector<2x64xf32>
    %274 = arith.addf %272, %273 : vector<2x64xf32>
    %275 = math.tanh %274 : vector<2x64xf32>
    %276 = arith.mulf %271, %275 : vector<2x64xf32>
    %277 = vector.extract_strided_slice %7 {offsets = [12, 0], sizes = [2, 64], strides = [1, 1]} : vector<16x64xf32> to vector<2x64xf32>
    %c0_141 = arith.constant 0 : index
    %c0_142 = arith.constant 0 : index
    %c0_143 = arith.constant 0 : index
    %278 = vector.load %arg2[%c0_141, %c0_142, %c0_143] : memref<4x64x64xf32, #tpu.memory_space<vmem>>, vector<1x64x64xf32>
    %279 = vector.shape_cast %278 : vector<1x64x64xf32> to vector<64x64xf32>
    %cst_144 = arith.constant dense<0.000000e+00> : vector<2x64xf32>
    %280 = tpu.matmul %276, %279, %cst_144 {dimension_numbers = #tpu.dot_dimension_numbers<[1], [0], [0], [1], [0, 0, 1, 1], [], []>} : vector<2x64xf32>, vector<64x64xf32>, vector<2x64xf32> -> vector<2x64xf32>
    %281 = arith.addf %277, %280 : vector<2x64xf32>
    %282 = arith.negf %281 : vector<2x64xf32>
    %283 = math.exp %282 : vector<2x64xf32>
    %cst_145 = arith.constant 1.000000e+00 : f32
    %284 = vector.broadcast %cst_145 : f32 to vector<2x64xf32>
    %285 = arith.addf %284, %283 : vector<2x64xf32>
    %286 = arith.divf %284, %285 : vector<2x64xf32>
    %287 = vector.extract_strided_slice %14 {offsets = [12, 0], sizes = [2, 64], strides = [1, 1]} : vector<16x64xf32> to vector<2x64xf32>
    %c1_146 = arith.constant 1 : index
    %c0_147 = arith.constant 0 : index
    %c0_148 = arith.constant 0 : index
    %288 = vector.load %arg2[%c1_146, %c0_147, %c0_148] : memref<4x64x64xf32, #tpu.memory_space<vmem>>, vector<1x64x64xf32>
    %289 = vector.shape_cast %288 : vector<1x64x64xf32> to vector<64x64xf32>
    %cst_149 = arith.constant dense<0.000000e+00> : vector<2x64xf32>
    %290 = tpu.matmul %276, %289, %cst_149 {dimension_numbers = #tpu.dot_dimension_numbers<[1], [0], [0], [1], [0, 0, 1, 1], [], []>} : vector<2x64xf32>, vector<64x64xf32>, vector<2x64xf32> -> vector<2x64xf32>
    %291 = arith.addf %287, %290 : vector<2x64xf32>
    %292 = arith.negf %291 : vector<2x64xf32>
    %293 = math.exp %292 : vector<2x64xf32>
    %cst_150 = arith.constant 1.000000e+00 : f32
    %294 = vector.broadcast %cst_150 : f32 to vector<2x64xf32>
    %295 = arith.addf %294, %293 : vector<2x64xf32>
    %296 = arith.divf %294, %295 : vector<2x64xf32>
    %297 = vector.extract_strided_slice %21 {offsets = [12, 0], sizes = [2, 64], strides = [1, 1]} : vector<16x64xf32> to vector<2x64xf32>
    %c2_151 = arith.constant 2 : index
    %c0_152 = arith.constant 0 : index
    %c0_153 = arith.constant 0 : index
    %298 = vector.load %arg2[%c2_151, %c0_152, %c0_153] : memref<4x64x64xf32, #tpu.memory_space<vmem>>, vector<1x64x64xf32>
    %299 = vector.shape_cast %298 : vector<1x64x64xf32> to vector<64x64xf32>
    %cst_154 = arith.constant dense<0.000000e+00> : vector<2x64xf32>
    %300 = tpu.matmul %276, %299, %cst_154 {dimension_numbers = #tpu.dot_dimension_numbers<[1], [0], [0], [1], [0, 0, 1, 1], [], []>} : vector<2x64xf32>, vector<64x64xf32>, vector<2x64xf32> -> vector<2x64xf32>
    %301 = arith.addf %297, %300 : vector<2x64xf32>
    %302 = math.tanh %301 : vector<2x64xf32>
    %303 = vector.extract_strided_slice %28 {offsets = [12, 0], sizes = [2, 64], strides = [1, 1]} : vector<16x64xf32> to vector<2x64xf32>
    %c3_155 = arith.constant 3 : index
    %c0_156 = arith.constant 0 : index
    %c0_157 = arith.constant 0 : index
    %304 = vector.load %arg2[%c3_155, %c0_156, %c0_157] : memref<4x64x64xf32, #tpu.memory_space<vmem>>, vector<1x64x64xf32>
    %305 = vector.shape_cast %304 : vector<1x64x64xf32> to vector<64x64xf32>
    %cst_158 = arith.constant dense<0.000000e+00> : vector<2x64xf32>
    %306 = tpu.matmul %276, %305, %cst_158 {dimension_numbers = #tpu.dot_dimension_numbers<[1], [0], [0], [1], [0, 0, 1, 1], [], []>} : vector<2x64xf32>, vector<64x64xf32>, vector<2x64xf32> -> vector<2x64xf32>
    %307 = arith.addf %303, %306 : vector<2x64xf32>
    %308 = arith.negf %307 : vector<2x64xf32>
    %309 = math.exp %308 : vector<2x64xf32>
    %cst_159 = arith.constant 1.000000e+00 : f32
    %310 = vector.broadcast %cst_159 : f32 to vector<2x64xf32>
    %311 = arith.addf %310, %309 : vector<2x64xf32>
    %312 = arith.divf %310, %311 : vector<2x64xf32>
    %313 = arith.mulf %296, %274 : vector<2x64xf32>
    %314 = arith.mulf %286, %302 : vector<2x64xf32>
    %315 = arith.addf %313, %314 : vector<2x64xf32>
    %316 = math.tanh %315 : vector<2x64xf32>
    %317 = arith.mulf %312, %316 : vector<2x64xf32>
    %318 = vector.extract_strided_slice %7 {offsets = [14, 0], sizes = [2, 64], strides = [1, 1]} : vector<16x64xf32> to vector<2x64xf32>
    %c0_160 = arith.constant 0 : index
    %c0_161 = arith.constant 0 : index
    %c0_162 = arith.constant 0 : index
    %319 = vector.load %arg2[%c0_160, %c0_161, %c0_162] : memref<4x64x64xf32, #tpu.memory_space<vmem>>, vector<1x64x64xf32>
    %320 = vector.shape_cast %319 : vector<1x64x64xf32> to vector<64x64xf32>
    %cst_163 = arith.constant dense<0.000000e+00> : vector<2x64xf32>
    %321 = tpu.matmul %317, %320, %cst_163 {dimension_numbers = #tpu.dot_dimension_numbers<[1], [0], [0], [1], [0, 0, 1, 1], [], []>} : vector<2x64xf32>, vector<64x64xf32>, vector<2x64xf32> -> vector<2x64xf32>
    %322 = arith.addf %318, %321 : vector<2x64xf32>
    %323 = arith.negf %322 : vector<2x64xf32>
    %324 = math.exp %323 : vector<2x64xf32>
    %cst_164 = arith.constant 1.000000e+00 : f32
    %325 = vector.broadcast %cst_164 : f32 to vector<2x64xf32>
    %326 = arith.addf %325, %324 : vector<2x64xf32>
    %327 = arith.divf %325, %326 : vector<2x64xf32>
    %328 = vector.extract_strided_slice %14 {offsets = [14, 0], sizes = [2, 64], strides = [1, 1]} : vector<16x64xf32> to vector<2x64xf32>
    %c1_165 = arith.constant 1 : index
    %c0_166 = arith.constant 0 : index
    %c0_167 = arith.constant 0 : index
    %329 = vector.load %arg2[%c1_165, %c0_166, %c0_167] : memref<4x64x64xf32, #tpu.memory_space<vmem>>, vector<1x64x64xf32>
    %330 = vector.shape_cast %329 : vector<1x64x64xf32> to vector<64x64xf32>
    %cst_168 = arith.constant dense<0.000000e+00> : vector<2x64xf32>
    %331 = tpu.matmul %317, %330, %cst_168 {dimension_numbers = #tpu.dot_dimension_numbers<[1], [0], [0], [1], [0, 0, 1, 1], [], []>} : vector<2x64xf32>, vector<64x64xf32>, vector<2x64xf32> -> vector<2x64xf32>
    %332 = arith.addf %328, %331 : vector<2x64xf32>
    %333 = arith.negf %332 : vector<2x64xf32>
    %334 = math.exp %333 : vector<2x64xf32>
    %cst_169 = arith.constant 1.000000e+00 : f32
    %335 = vector.broadcast %cst_169 : f32 to vector<2x64xf32>
    %336 = arith.addf %335, %334 : vector<2x64xf32>
    %337 = arith.divf %335, %336 : vector<2x64xf32>
    %338 = vector.extract_strided_slice %21 {offsets = [14, 0], sizes = [2, 64], strides = [1, 1]} : vector<16x64xf32> to vector<2x64xf32>
    %c2_170 = arith.constant 2 : index
    %c0_171 = arith.constant 0 : index
    %c0_172 = arith.constant 0 : index
    %339 = vector.load %arg2[%c2_170, %c0_171, %c0_172] : memref<4x64x64xf32, #tpu.memory_space<vmem>>, vector<1x64x64xf32>
    %340 = vector.shape_cast %339 : vector<1x64x64xf32> to vector<64x64xf32>
    %cst_173 = arith.constant dense<0.000000e+00> : vector<2x64xf32>
    %341 = tpu.matmul %317, %340, %cst_173 {dimension_numbers = #tpu.dot_dimension_numbers<[1], [0], [0], [1], [0, 0, 1, 1], [], []>} : vector<2x64xf32>, vector<64x64xf32>, vector<2x64xf32> -> vector<2x64xf32>
    %342 = arith.addf %338, %341 : vector<2x64xf32>
    %343 = math.tanh %342 : vector<2x64xf32>
    %344 = vector.extract_strided_slice %28 {offsets = [14, 0], sizes = [2, 64], strides = [1, 1]} : vector<16x64xf32> to vector<2x64xf32>
    %c3_174 = arith.constant 3 : index
    %c0_175 = arith.constant 0 : index
    %c0_176 = arith.constant 0 : index
    %345 = vector.load %arg2[%c3_174, %c0_175, %c0_176] : memref<4x64x64xf32, #tpu.memory_space<vmem>>, vector<1x64x64xf32>
    %346 = vector.shape_cast %345 : vector<1x64x64xf32> to vector<64x64xf32>
    %cst_177 = arith.constant dense<0.000000e+00> : vector<2x64xf32>
    %347 = tpu.matmul %317, %346, %cst_177 {dimension_numbers = #tpu.dot_dimension_numbers<[1], [0], [0], [1], [0, 0, 1, 1], [], []>} : vector<2x64xf32>, vector<64x64xf32>, vector<2x64xf32> -> vector<2x64xf32>
    %348 = arith.addf %344, %347 : vector<2x64xf32>
    %349 = arith.negf %348 : vector<2x64xf32>
    %350 = math.exp %349 : vector<2x64xf32>
    %cst_178 = arith.constant 1.000000e+00 : f32
    %351 = vector.broadcast %cst_178 : f32 to vector<2x64xf32>
    %352 = arith.addf %351, %350 : vector<2x64xf32>
    %353 = arith.divf %351, %352 : vector<2x64xf32>
    %354 = arith.mulf %337, %315 : vector<2x64xf32>
    %355 = arith.mulf %327, %343 : vector<2x64xf32>
    %356 = arith.addf %354, %355 : vector<2x64xf32>
    %357 = math.tanh %356 : vector<2x64xf32>
    %358 = arith.mulf %353, %357 : vector<2x64xf32>
    %c0_179 = arith.constant 0 : index
    %c0_180 = arith.constant 0 : index
    %359 = vector.load %arg4[%c0_179, %c0_180] : memref<64x32xf32, #tpu.memory_space<vmem>>, vector<64x32xf32>
    %cst_181 = arith.constant dense<0.000000e+00> : vector<2x32xf32>
    %360 = tpu.matmul %358, %359, %cst_181 {dimension_numbers = #tpu.dot_dimension_numbers<[1], [0], [0], [1], [0, 0, 1, 1], [], []>} : vector<2x64xf32>, vector<64x32xf32>, vector<2x32xf32> -> vector<2x32xf32>
    %c0_182 = arith.constant 0 : index
    %c0_183 = arith.constant 0 : index
    %361 = vector.load %arg5[%c0_182, %c0_183] : memref<1x32xf32, #tpu.memory_space<vmem>>, vector<1x32xf32>
    %362 = vector.broadcast %361 : vector<1x32xf32> to vector<2x32xf32>
    %363 = arith.addf %360, %362 : vector<2x32xf32>
    %c0_184 = arith.constant 0 : index
    %c0_185 = arith.constant 0 : index
    %364 = vector.load %arg6[%c0_184, %c0_185] : memref<32x2xf32, #tpu.memory_space<vmem>>, vector<32x2xf32>
    %cst_186 = arith.constant dense<0.000000e+00> : vector<2x2xf32>
    %365 = tpu.matmul %363, %364, %cst_186 {dimension_numbers = #tpu.dot_dimension_numbers<[1], [0], [0], [1], [0, 0, 1, 1], [], []>} : vector<2x32xf32>, vector<32x2xf32>, vector<2x2xf32> -> vector<2x2xf32>
    %c0_187 = arith.constant 0 : index
    %c0_188 = arith.constant 0 : index
    %366 = vector.load %arg7[%c0_187, %c0_188] : memref<1x2xf32, #tpu.memory_space<vmem>>, vector<1x2xf32>
    %367 = vector.broadcast %366 : vector<1x2xf32> to vector<2x2xf32>
    %368 = arith.addf %365, %367 : vector<2x2xf32>
    %c0_189 = arith.constant 0 : index
    %c0_190 = arith.constant 0 : index
    %369 = vector.load %arg8[%c0_189, %c0_190] : memref<2x2xf32, #tpu.memory_space<vmem>>, vector<2x2xf32>
    tpu.vector_store %arg8[%c0_189, %c0_190], %368 {strides = array<i32>} : memref<2x2xf32, #tpu.memory_space<vmem>>, vector<2x2xf32>,
    return
  }
}

</mosaic_0001>

<llo_original>
// kernel: tpu_custom_call.1
$region0: #{tpu_custom_call.1}
  #allocation0 [shape = 'u32[]', space=smem, size = 0x4, offset = 0x4, fixed_abs, tag = 'smem constant byte address 0x4 - core index']
  #allocation1 [shape = 'u32[144,128]{1,0:T(1,128)}', space=vmem, size = 0x12000, scoped, tag = 'internal scratch']
  %s0 = inlined_call_operand.vmem [shape: f32[16,16], index: 0, kind: input, shape index: {}]
  %s1 = inlined_call_operand.vmem [shape: f32[4,16,64], index: 1, kind: input, shape index: {}]
  %s2 = inlined_call_operand.hbm [shape: f32[4,64,64], index: 2, kind: input, shape index: {}]
  %s3 = inlined_call_operand.vmem [shape: f32[4,1,64], index: 3, kind: input, shape index: {}]
  %s4 = inlined_call_operand.vmem [shape: f32[64,32], index: 4, kind: input, shape index: {}]
  %s5 = inlined_call_operand.vmem [shape: f32[1,32], index: 5, kind: input, shape index: {}]
  %s6 = inlined_call_operand.vmem [shape: f32[32,2], index: 6, kind: input, shape index: {}]
  %s7 = inlined_call_operand.vmem [shape: f32[1,2], index: 7, kind: input, shape index: {}]
  %s8 = inlined_call_operand.hbm [shape: f32[2,2], index: 8, kind: output, shape index: {}]
  %s9 = sld [smem:[#allocation0]]
  $region46: #{tpu_custom_call.1} parent=0
    _
  %s11 = ssub.s32 1, %s9
  %s12 = scalar_select 0, %s11, %s9
  $region1: #{tpu_custom_call.1} parent=0
    #allocation2 [shape = 'u8[131072]{0}', space=vmem, size = 0x20000, scoped, tag = 'input window, operand 2, single buffered']
    #allocation3 [shape = 's32[1]{0}', space=sflag, size = 0x4, scoped, tag = 'scoped memory for tpu_custom_call.1']
    #allocation4 [shape = 's32[1]{0}', space=sflag, size = 0x4, scoped, tag = 'scoped memory for tpu_custom_call.1']
    #allocation5 [shape = 'u8[1024]{0}', space=vmem, size = 0x400, scoped, tag = 'output window, operand 0, single buffered']
    %13 = vsyncpa [#allocation3], 0
    %14 = vsyncpa [#allocation4], 0
    // Predicated region
    $region2: #{tpu_custom_call.1} parent=1 // pred_check
      _
    $region3: #{tpu_custom_call.1} parent=1 // pred_check_branch
      %16 = sbr.rel (0) target = $region5
    $region4: #{tpu_custom_call.1} parent=1 // pred_region
      _
    $region5: #{tpu_custom_call.1} parent=1 // pred_fallthru
      _
    // Predicated region
    $region6: #{tpu_custom_call.1} parent=1 // pred_check
      _
    $region7: #{tpu_custom_call.1} parent=1 // pred_check_branch
      %18 = sbr.rel (0) target = $region9
    $region8: #{tpu_custom_call.1} parent=1 // pred_region
      _
    $region9: #{tpu_custom_call.1} parent=1 // pred_fallthru
      _
    // Predicated region
    $region10: #{tpu_custom_call.1} parent=1 // pred_check
      _
    $region11: #{tpu_custom_call.1} parent=1 // pred_check_branch
      %20 = sbr.rel (0) target = $region13
    $region12: #{tpu_custom_call.1} parent=1 // pred_region
      %s22 = ssub.s32 4096, 4096
      %23 = vsyncadd [#allocation3], %s22
      %s24 = sshll.u32 [#allocation2], 4
      %s25 = int_to_ptr.vmem [resolvable:$true] %s24
      %30 = dma.hbm_to_vmem [thread:$0]  %s2, 4096, %s25, [#allocation3], 128, 128, 8
    $region13: #{tpu_custom_call.1} parent=1 // pred_fallthru
      _
    // Predicated region
    $region14: #{tpu_custom_call.1} parent=1 // pred_check
      _
    $region15: #{tpu_custom_call.1} parent=1 // pred_check_branch
      %32 = sbr.rel (0) target = $region17
    $region16: #{tpu_custom_call.1} parent=1 // pred_region
      _
    $region17: #{tpu_custom_call.1} parent=1 // pred_fallthru
      _
    // Predicated region
    $region18: #{tpu_custom_call.1} parent=1 // pred_check
      _
    $region19: #{tpu_custom_call.1} parent=1 // pred_check_branch
      %34 = sbr.rel (0) target = $region21
    $region20: #{tpu_custom_call.1} parent=1 // pred_region
      _
    $region21: #{tpu_custom_call.1} parent=1 // pred_fallthru
      _
    // Predicated region
    $region22: #{tpu_custom_call.1} parent=1 // pred_check
      _
    $region23: #{tpu_custom_call.1} parent=1 // pred_check_branch
      %36 = sbr.rel (0) target = $region25
    $region24: #{tpu_custom_call.1} parent=1 // pred_region
      _
    $region25: #{tpu_custom_call.1} parent=1 // pred_fallthru
      _
    // Predicated region
    $region26: #{tpu_custom_call.1} parent=1 // pred_check
      _
    $region27: #{tpu_custom_call.1} parent=1 // pred_check_branch
      %38 = sbr.rel (0) target = $region29
    $region28: #{tpu_custom_call.1} parent=1 // pred_region
      _
    $region29: #{tpu_custom_call.1} parent=1 // pred_fallthru
      _
    // Predicated region
    $region30: #{tpu_custom_call.1} parent=1 // pred_check
      _
    $region31: #{tpu_custom_call.1} parent=1 // pred_check_branch
      %40 = sbr.rel (0) target = $region33
    $region32: #{tpu_custom_call.1} parent=1 // pred_region
      _
    $region33: #{tpu_custom_call.1} parent=1 // pred_fallthru
      _
    // Predicated region
    $region34: #{tpu_custom_call.1} parent=1 // pred_check
      _
    $region35: #{tpu_custom_call.1} parent=1 // pred_check_branch
      %42 = sbr.rel (0) target = $region37
    $region36: #{tpu_custom_call.1} parent=1 // pred_region
      %43 = dma.done [#allocation3], 4096
    $region37: #{tpu_custom_call.1} parent=1 // pred_fallthru
      _
    %v44 = vld [vmem:[%s0] sm:$0xff]
    %v45 = vld [vmem:[%s0 + $0x8] sm:$0xff]
    %v46 = vld [vmem:[%s1] sm:$0xff]
    %v47 = vld [vmem:[%s1 + $0x8] sm:$0xff]
    %v48 = vld [vmem:[%s3] sm:$0x1]
    %v50 = vlaneseq
    %v51 = vshrl.u32 %v50, 7
    %v52 = vsub.s32 0, %v51
    %v53 = vrot.slane %v48, %v52
    %vm55 = vcmask 130048
    %v57 = vsel %vm55, %v44, 0
    %v60 = vsel %vm55, %v45, 0
    %62 = vmatprep.subr.mxu0 0.0
    %63 = vmatpush1.msra.mxu0 0.0
    %64 = vmatprep.subr.mxu0 0.0
    %65 = vmatpush1.msra.mxu0 0.0
    %66 = vmatprep.subr.mxu0 0.0
    %67 = vmatpush1.msra.mxu0 0.0
    %68 = vmatprep.subr.mxu0 0.0
    %69 = vmatpush1.msra.mxu0 0.0
    %70 = vmatprep.subr.mxu0 0.0
    %71 = vmatpush1.msra.mxu0 0.0
    %72 = vmatprep.subr.mxu0 0.0
    %73 = vmatpush1.msra.mxu0 0.0
    %74 = vmatprep.subr.mxu0 0.0
    %75 = vmatpush1.msra.mxu0 0.0
    %76 = vmatprep.subr.mxu0 0.0
    %77 = vmatpush1.msra.mxu0 0.0
    %78 = vmatprep.subr.mxu0 0.0
    %79 = vmatpush1.msra.mxu0 0.0
    %80 = vmatprep.subr.mxu0 0.0
    %81 = vmatpush1.msra.mxu0 0.0
    %82 = vmatprep.subr.mxu0 0.0
    %83 = vmatpush1.msra.mxu0 0.0
    %84 = vmatprep.subr.mxu0 0.0
    %85 = vmatpush1.msra.mxu0 0.0
    %86 = vmatprep.subr.mxu0 0.0
    %87 = vmatpush1.msra.mxu0 0.0
    %88 = vmatprep.subr.mxu0 0.0
    %89 = vmatpush1.msra.mxu0 0.0
    %90 = vmatprep.subr.mxu0 0.0
    %91 = vmatpush1.msra.mxu0 %v47
    %92 = vmatprep.subr.mxu0 0.0
    %93 = vmatpush1.msra.mxu0 %v46
    %94 = vmatprep.subr.mxu0 0.0
    %95 = vmatpush2.msra.mxu0 0.0
    %96 = vmatprep.subr.mxu0 0.0
    %97 = vmatpush2.msra.mxu0 0.0
    %98 = vmatprep.subr.mxu0 0.0
    %99 = vmatpush2.msra.mxu0 0.0
    %100 = vmatprep.subr.mxu0 0.0
    %101 = vmatpush2.msra.mxu0 0.0
    %102 = vmatprep.subr.mxu0 0.0
    %103 = vmatpush2.msra.mxu0 0.0
    %104 = vmatprep.subr.mxu0 0.0
    %105 = vmatpush2.msra.mxu0 0.0
    %106 = vmatprep.subr.mxu0 0.0
    %107 = vmatpush2.msra.mxu0 0.0
    %108 = vmatprep.subr.mxu0 0.0
    %109 = vmatpush2.msra.mxu0 0.0
    %110 = vmatprep.subr.mxu0 0.0
    %111 = vmatpush2.msra.mxu0 0.0
    %112 = vmatprep.subr.mxu0 0.0
    %113 = vmatpush2.msra.mxu0 0.0
    %114 = vmatprep.subr.mxu0 0.0
    %115 = vmatpush2.msra.mxu0 0.0
    %116 = vmatprep.subr.mxu0 0.0
    %117 = vmatpush2.msra.mxu0 0.0
    %118 = vmatprep.subr.mxu0 0.0
    %119 = vmatpush2.msra.mxu0 0.0
    %120 = vmatprep.subr.mxu0 0.0
    %121 = vmatpush2.msra.mxu0 0.0
    %122 = vmatprep.subr.mxu0 0.0
    %123 = vmatpush2.msra.mxu0 0.0
    %124 = vmatprep.subr.mxu0 0.0
    %125 = vmatpush2.msra.mxu0 0.0
    %126 = vmatprep.mubr.f32.mxu0 0.0
    %127 = vmatmul.mubr.f32.gmra.mxu0 %v57
    %v128 = vpop.f32.mrf.mxu0
    %v129 = vadd.f32 %v53, %v128
    %v130 = vpop.f32.mrf.mxu0
    %131 = vmatprep.mubr.f32.mxu0 0.0
    %132 = vmatmul.mubr.f32.gmra.mxu0 %v60
    %v133 = vpop.f32.mrf.mxu0
    %v134 = vadd.f32 %v53, %v133
    %v135 = vpop.f32.mrf.mxu0
    %136 = vdwg.mxu0
    %s137 = scalar_lea.vmem %s1, 16
    %v138 = vld [vmem:[%s137] sm:$0xff]
    %v139 = vld [vmem:[%s137 + $0x8] sm:$0xff]
    %s140 = scalar_lea.vmem %s3, 1
    %v141 = vld [vmem:[%s140] sm:$0x1]
    %v143 = vlaneseq
    %v144 = vshrl.u32 %v143, 7
    %v145 = vsub.s32 0, %v144
    %v146 = vrot.slane %v141, %v145
    %148 = vmatprep.subr.mxu0 0.0
    %149 = vmatpush1.msra.mxu0 0.0
    %150 = vmatprep.subr.mxu0 0.0
    %151 = vmatpush1.msra.mxu0 0.0
    %152 = vmatprep.subr.mxu0 0.0
    %153 = vmatpush1.msra.mxu0 0.0
    %154 = vmatprep.subr.mxu0 0.0
    %155 = vmatpush1.msra.mxu0 0.0
    %156 = vmatprep.subr.mxu0 0.0
    %157 = vmatpush1.msra.mxu0 0.0
    %158 = vmatprep.subr.mxu0 0.0
    %159 = vmatpush1.msra.mxu0 0.0
    %160 = vmatprep.subr.mxu0 0.0
    %161 = vmatpush1.msra.mxu0 0.0
    %162 = vmatprep.subr.mxu0 0.0
    %163 = vmatpush1.msra.mxu0 0.0
    %164 = vmatprep.subr.mxu0 0.0
    %165 = vmatpush1.msra.mxu0 0.0
    %166 = vmatprep.subr.mxu0 0.0
    %167 = vmatpush1.msra.mxu0 0.0
    %168 = vmatprep.subr.mxu0 0.0
    %169 = vmatpush1.msra.mxu0 0.0
    %170 = vmatprep.subr.mxu0 0.0
    %171 = vmatpush1.msra.mxu0 0.0
    %172 = vmatprep.subr.mxu0 0.0
    %173 = vmatpush1.msra.mxu0 0.0
    %174 = vmatprep.subr.mxu0 0.0
    %175 = vmatpush1.msra.mxu0 0.0
    %176 = vmatprep.subr.mxu0 0.0
    %177 = vmatpush1.msra.mxu0 %v139
    %178 = vmatprep.subr.mxu0 0.0
    %179 = vmatpush1.msra.mxu0 %v138
    %180 = vmatprep.subr.mxu0 0.0
    %181 = vmatpush2.msra.mxu0 0.0
    %182 = vmatprep.subr.mxu0 0.0
    %183 = vmatpush2.msra.mxu0 0.0
    %184 = vmatprep.subr.mxu0 0.0
    %185 = vmatpush2.msra.mxu0 0.0
    %186 = vmatprep.subr.mxu0 0.0
    %187 = vmatpush2.msra.mxu0 0.0
    %188 = vmatprep.subr.mxu0 0.0
    %189 = vmatpush2.msra.mxu0 0.0
    %190 = vmatprep.subr.mxu0 0.0
    %191 = vmatpush2.msra.mxu0 0.0
    %192 = vmatprep.subr.mxu0 0.0
    %193 = vmatpush2.msra.mxu0 0.0
    %194 = vmatprep.subr.mxu0 0.0
    %195 = vmatpush2.msra.mxu0 0.0
    %196 = vmatprep.subr.mxu0 0.0
    %197 = vmatpush2.msra.mxu0 0.0
    %198 = vmatprep.subr.mxu0 0.0
    %199 = vmatpush2.msra.mxu0 0.0
    %200 = vmatprep.subr.mxu0 0.0
    %201 = vmatpush2.msra.mxu0 0.0
    %202 = vmatprep.subr.mxu0 0.0
    %203 = vmatpush2.msra.mxu0 0.0
    %204 = vmatprep.subr.mxu0 0.0
    %205 = vmatpush2.msra.mxu0 0.0
    %206 = vmatprep.subr.mxu0 0.0
    %207 = vmatpush2.msra.mxu0 0.0
    %208 = vmatprep.subr.mxu0 0.0
    %209 = vmatpush2.msra.mxu0 0.0
    %210 = vmatprep.subr.mxu0 0.0
    %211 = vmatpush2.msra.mxu0 0.0
    %212 = vmatprep.mubr.f32.mxu0 0.0
    %213 = vmatmul.mubr.f32.gmra.mxu0 %v57
    %v214 = vpop.f32.mrf.mxu0
    %v215 = vadd.f32 %v146, %v214
    %v216 = vpop.f32.mrf.mxu0
    %217 = vmatprep.mubr.f32.mxu0 0.0
    %218 = vmatmul.mubr.f32.gmra.mxu0 %v60
    %v219 = vpop.f32.mrf.mxu0
    %v220 = vadd.f32 %v146, %v219
    %v221 = vpop.f32.mrf.mxu0
    %222 = vdwg.mxu0
    %s223 = scalar_lea.vmem %s1, 32
    %v224 = vld [vmem:[%s223] sm:$0xff]
    %v225 = vld [vmem:[%s223 + $0x8] sm:$0xff]
    %s226 = scalar_lea.vmem %s3, 2
    %v227 = vld [vmem:[%s226] sm:$0x1]
    %v229 = vlaneseq
    %v230 = vshrl.u32 %v229, 7
    %v231 = vsub.s32 0, %v230
    %v232 = vrot.slane %v227, %v231
    %234 = vmatprep.subr.mxu0 0.0
    %235 = vmatpush1.msra.mxu0 0.0
    %236 = vmatprep.subr.mxu0 0.0
    %237 = vmatpush1.msra.mxu0 0.0
    %238 = vmatprep.subr.mxu0 0.0
    %239 = vmatpush1.msra.mxu0 0.0
    %240 = vmatprep.subr.mxu0 0.0
    %241 = vmatpush1.msra.mxu0 0.0
    %242 = vmatprep.subr.mxu0 0.0
    %243 = vmatpush1.msra.mxu0 0.0
    %244 = vmatprep.subr.mxu0 0.0
    %245 = vmatpush1.msra.mxu0 0.0
    %246 = vmatprep.subr.mxu0 0.0
    %247 = vmatpush1.msra.mxu0 0.0
    %248 = vmatprep.subr.mxu0 0.0
    %249 = vmatpush1.msra.mxu0 0.0
    %250 = vmatprep.subr.mxu0 0.0
    %251 = vmatpush1.msra.mxu0 0.0
    %252 = vmatprep.subr.mxu0 0.0
    %253 = vmatpush1.msra.mxu0 0.0
    %254 = vmatprep.subr.mxu0 0.0
    %255 = vmatpush1.msra.mxu0 0.0
    %256 = vmatprep.subr.mxu0 0.0
    %257 = vmatpush1.msra.mxu0 0.0
    %258 = vmatprep.subr.mxu0 0.0
    %259 = vmatpush1.msra.mxu0 0.0
    %260 = vmatprep.subr.mxu0 0.0
    %261 = vmatpush1.msra.mxu0 0.0
    %262 = vmatprep.subr.mxu0 0.0
    %263 = vmatpush1.msra.mxu0 %v225
    %264 = vmatprep.subr.mxu0 0.0
    %265 = vmatpush1.msra.mxu0 %v224
    %266 = vmatprep.subr.mxu0 0.0
    %267 = vmatpush2.msra.mxu0 0.0
    %268 = vmatprep.subr.mxu0 0.0
    %269 = vmatpush2.msra.mxu0 0.0
    %270 = vmatprep.subr.mxu0 0.0
    %271 = vmatpush2.msra.mxu0 0.0
    %272 = vmatprep.subr.mxu0 0.0
    %273 = vmatpush2.msra.mxu0 0.0
    %274 = vmatprep.subr.mxu0 0.0
    %275 = vmatpush2.msra.mxu0 0.0
    %276 = vmatprep.subr.mxu0 0.0
    %277 = vmatpush2.msra.mxu0 0.0
    %278 = vmatprep.subr.mxu0 0.0
    %279 = vmatpush2.msra.mxu0 0.0
    %280 = vmatprep.subr.mxu0 0.0
    %281 = vmatpush2.msra.mxu0 0.0
    %282 = vmatprep.subr.mxu0 0.0
    %283 = vmatpush2.msra.mxu0 0.0
    %284 = vmatprep.subr.mxu0 0.0
    %285 = vmatpush2.msra.mxu0 0.0
    %286 = vmatprep.subr.mxu0 0.0
    %287 = vmatpush2.msra.mxu0 0.0
    %288 = vmatprep.subr.mxu0 0.0
    %289 = vmatpush2.msra.mxu0 0.0
    %290 = vmatprep.subr.mxu0 0.0
    %291 = vmatpush2.msra.mxu0 0.0
    %292 = vmatprep.subr.mxu0 0.0
    %293 = vmatpush2.msra.mxu0 0.0
    %294 = vmatprep.subr.mxu0 0.0
    %295 = vmatpush2.msra.mxu0 0.0
    %296 = vmatprep.subr.mxu0 0.0
    %297 = vmatpush2.msra.mxu0 0.0
    %298 = vmatprep.mubr.f32.mxu0 0.0
    %299 = vmatmul.mubr.f32.gmra.mxu0 %v57
    %v300 = vpop.f32.mrf.mxu0
    %v301 = vadd.f32 %v232, %v300
    %v302 = vpop.f32.mrf.mxu0
    %303 = vmatprep.mubr.f32.mxu0 0.0
    %304 = vmatmul.mubr.f32.gmra.mxu0 %v60
    %v305 = vpop.f32.mrf.mxu0
    %v306 = vadd.f32 %v232, %v305
    %v307 = vpop.f32.mrf.mxu0
    %308 = vdwg.mxu0
    %s309 = scalar_lea.vmem %s1, 48
    %v310 = vld [vmem:[%s309] sm:$0xff]
    %v311 = vld [vmem:[%s309 + $0x8] sm:$0xff]
    %s312 = scalar_lea.vmem %s3, 3
    %v313 = vld [vmem:[%s312] sm:$0x1]
    %v315 = vlaneseq
    %v316 = vshrl.u32 %v315, 7
    %v317 = vsub.s32 0, %v316
    %v318 = vrot.slane %v313, %v317
    %320 = vmatprep.subr.mxu0 0.0
    %321 = vmatpush1.msra.mxu0 0.0
    %322 = vmatprep.subr.mxu0 0.0
    %323 = vmatpush1.msra.mxu0 0.0
    %324 = vmatprep.subr.mxu0 0.0
    %325 = vmatpush1.msra.mxu0 0.0
    %326 = vmatprep.subr.mxu0 0.0
    %327 = vmatpush1.msra.mxu0 0.0
    %328 = vmatprep.subr.mxu0 0.0
    %329 = vmatpush1.msra.mxu0 0.0
    %330 = vmatprep.subr.mxu0 0.0
    %331 = vmatpush1.msra.mxu0 0.0
    %332 = vmatprep.subr.mxu0 0.0
    %333 = vmatpush1.msra.mxu0 0.0
    %334 = vmatprep.subr.mxu0 0.0
    %335 = vmatpush1.msra.mxu0 0.0
    %336 = vmatprep.subr.mxu0 0.0
    %337 = vmatpush1.msra.mxu0 0.0
    %338 = vmatprep.subr.mxu0 0.0
    %339 = vmatpush1.msra.mxu0 0.0
    %340 = vmatprep.subr.mxu0 0.0
    %341 = vmatpush1.msra.mxu0 0.0
    %342 = vmatprep.subr.mxu0 0.0
    %343 = vmatpush1.msra.mxu0 0.0
    %344 = vmatprep.subr.mxu0 0.0
    %345 = vmatpush1.msra.mxu0 0.0
    %346 = vmatprep.subr.mxu0 0.0
    %347 = vmatpush1.msra.mxu0 0.0
    %348 = vmatprep.subr.mxu0 0.0
    %349 = vmatpush1.msra.mxu0 %v311
    %350 = vmatprep.subr.mxu0 0.0
    %351 = vmatpush1.msra.mxu0 %v310
    %352 = vmatprep.subr.mxu0 0.0
    %353 = vmatpush2.msra.mxu0 0.0
    %354 = vmatprep.subr.mxu0 0.0
    %355 = vmatpush2.msra.mxu0 0.0
    %356 = vmatprep.subr.mxu0 0.0
    %357 = vmatpush2.msra.mxu0 0.0
    %358 = vmatprep.subr.mxu0 0.0
    %359 = vmatpush2.msra.mxu0 0.0
    %360 = vmatprep.subr.mxu0 0.0
    %361 = vmatpush2.msra.mxu0 0.0
    %362 = vmatprep.subr.mxu0 0.0
    %363 = vmatpush2.msra.mxu0 0.0
    %364 = vmatprep.subr.mxu0 0.0
    %365 = vmatpush2.msra.mxu0 0.0
    %366 = vmatprep.subr.mxu0 0.0
    %367 = vmatpush2.msra.mxu0 0.0
    %368 = vmatprep.subr.mxu0 0.0
    %369 = vmatpush2.msra.mxu0 0.0
    %370 = vmatprep.subr.mxu0 0.0
    %371 = vmatpush2.msra.mxu0 0.0
    %372 = vmatprep.subr.mxu0 0.0
    %373 = vmatpush2.msra.mxu0 0.0
    %374 = vmatprep.subr.mxu0 0.0
    %375 = vmatpush2.msra.mxu0 0.0
    %376 = vmatprep.subr.mxu0 0.0
    %377 = vmatpush2.msra.mxu0 0.0
    %378 = vmatprep.subr.mxu0 0.0
    %379 = vmatpush2.msra.mxu0 0.0
    %380 = vmatprep.subr.mxu0 0.0
    %381 = vmatpush2.msra.mxu0 0.0
    %382 = vmatprep.subr.mxu0 0.0
    %383 = vmatpush2.msra.mxu0 0.0
    %384 = vmatprep.mubr.f32.mxu0 0.0
    %385 = vmatmul.mubr.f32.gmra.mxu0 %v57
    %v386 = vpop.f32.mrf.mxu0
    %v387 = vadd.f32 %v318, %v386
    %v388 = vpop.f32.mrf.mxu0
    %389 = vmatprep.mubr.f32.mxu0 0.0
    %390 = vmatmul.mubr.f32.gmra.mxu0 %v60
    %v391 = vpop.f32.mrf.mxu0
    %v392 = vadd.f32 %v318, %v391
    %v393 = vpop.f32.mrf.mxu0
    %394 = vdwg.mxu0
    %v395 = vld [vmem:[#allocation2] sm:$0xff]
    %v396 = vld [vmem:[#allocation2 + $0x8] sm:$0xff]
    %v397 = vld [vmem:[#allocation2 + $0x10] sm:$0xff]
    %v398 = vld [vmem:[#allocation2 + $0x18] sm:$0xff]
    %v399 = vld [vmem:[#allocation2 + $0x20] sm:$0xff]
    %v400 = vld [vmem:[#allocation2 + $0x28] sm:$0xff]
    %v401 = vld [vmem:[#allocation2 + $0x30] sm:$0xff]
    %v402 = vld [vmem:[#allocation2 + $0x38] sm:$0xff]
    %vm403 = vcmask 523264
    %v405 = vsel %vm403, 0.0, 0
    %407 = vmatprep.subr.mxu0 0.0
    %408 = vmatpush1.msra.mxu0 0.0
    %409 = vmatprep.subr.mxu0 0.0
    %410 = vmatpush1.msra.mxu0 0.0
    %411 = vmatprep.subr.mxu0 0.0
    %412 = vmatpush1.msra.mxu0 0.0
    %413 = vmatprep.subr.mxu0 0.0
    %414 = vmatpush1.msra.mxu0 0.0
    %415 = vmatprep.subr.mxu0 0.0
    %416 = vmatpush1.msra.mxu0 0.0
    %417 = vmatprep.subr.mxu0 0.0
    %418 = vmatpush1.msra.mxu0 0.0
    %419 = vmatprep.subr.mxu0 0.0
    %420 = vmatpush1.msra.mxu0 0.0
    %421 = vmatprep.subr.mxu0 0.0
    %422 = vmatpush1.msra.mxu0 0.0
    %423 = vmatprep.subr.mxu0 0.0
    %424 = vmatpush1.msra.mxu0 %v402
    %425 = vmatprep.subr.mxu0 0.0
    %426 = vmatpush1.msra.mxu0 %v401
    %427 = vmatprep.subr.mxu0 0.0
    %428 = vmatpush1.msra.mxu0 %v400
    %429 = vmatprep.subr.mxu0 0.0
    %430 = vmatpush1.msra.mxu0 %v399
    %431 = vmatprep.subr.mxu0 0.0
    %432 = vmatpush1.msra.mxu0 %v398
    %433 = vmatprep.subr.mxu0 0.0
    %434 = vmatpush1.msra.mxu0 %v397
    %435 = vmatprep.subr.mxu0 0.0
    %436 = vmatpush1.msra.mxu0 %v396
    %437 = vmatprep.subr.mxu0 0.0
    %438 = vmatpush1.msra.mxu0 %v395
    %439 = vmatprep.subr.mxu0 0.0
    %440 = vmatpush2.msra.mxu0 0.0
    %441 = vmatprep.subr.mxu0 0.0
    %442 = vmatpush2.msra.mxu0 0.0
    %443 = vmatprep.subr.mxu0 0.0
    %444 = vmatpush2.msra.mxu0 0.0
    %445 = vmatprep.subr.mxu0 0.0
    %446 = vmatpush2.msra.mxu0 0.0
    %447 = vmatprep.subr.mxu0 0.0
    %448 = vmatpush2.msra.mxu0 0.0
    %449 = vmatprep.subr.mxu0 0.0
    %450 = vmatpush2.msra.mxu0 0.0
    %451 = vmatprep.subr.mxu0 0.0
    %452 = vmatpush2.msra.mxu0 0.0
    %453 = vmatprep.subr.mxu0 0.0
    %454 = vmatpush2.msra.mxu0 0.0
    %455 = vmatprep.subr.mxu0 0.0
    %456 = vmatpush2.msra.mxu0 0.0
    %457 = vmatprep.subr.mxu0 0.0
    %458 = vmatpush2.msra.mxu0 0.0
    %459 = vmatprep.subr.mxu0 0.0
    %460 = vmatpush2.msra.mxu0 0.0
    %461 = vmatprep.subr.mxu0 0.0
    %462 = vmatpush2.msra.mxu0 0.0
    %463 = vmatprep.subr.mxu0 0.0
    %464 = vmatpush2.msra.mxu0 0.0
    %465 = vmatprep.subr.mxu0 0.0
    %466 = vmatpush2.msra.mxu0 0.0
    %467 = vmatprep.subr.mxu0 0.0
    %468 = vmatpush2.msra.mxu0 0.0
    %469 = vmatprep.subr.mxu0 0.0
    %470 = vmatpush2.msra.mxu0 0.0
    %471 = vmatprep.mubr.f32.mxu0 0.0
    %472 = vmatmul.mubr.f32.gmra.mxu0 %v405
    %v473 = vpop.f32.mrf.mxu0
    %v474 = vadd.f32 0.0, %v473
    %v475 = vpop.f32.mrf.mxu0
    %476 = vdwg.mxu0
    %v477 = vadd.f32 %v129, %v474
    %v478 = vxor.u32 %v477, 2147483648
    %v479 = vmul.f32 %v478, 1.442695
    %v480 = vpow.pop %v479
    %v481 = vadd.f32 %v480, 1.0
    %v482 = vrcp.pop %v481
    %v483 = vmul.f32 1.0, %v482
    %s484 = scalar_lea.vmem [#allocation2], 64
    %v485 = vld [vmem:[%s484] sm:$0xff]
    %v486 = vld [vmem:[%s484 + $0x8] sm:$0xff]
    %v487 = vld [vmem:[%s484 + $0x10] sm:$0xff]
    %v488 = vld [vmem:[%s484 + $0x18] sm:$0xff]
    %v489 = vld [vmem:[%s484 + $0x20] sm:$0xff]
    %v490 = vld [vmem:[%s484 + $0x28] sm:$0xff]
    %v491 = vld [vmem:[%s484 + $0x30] sm:$0xff]
    %v492 = vld [vmem:[%s484 + $0x38] sm:$0xff]
    %493 = vmatprep.subr.mxu0 0.0
    %494 = vmatpush1.msra.mxu0 0.0
    %495 = vmatprep.subr.mxu0 0.0
    %496 = vmatpush1.msra.mxu0 0.0
    %497 = vmatprep.subr.mxu0 0.0
    %498 = vmatpush1.msra.mxu0 0.0
    %499 = vmatprep.subr.mxu0 0.0
    %500 = vmatpush1.msra.mxu0 0.0
    %501 = vmatprep.subr.mxu0 0.0
    %502 = vmatpush1.msra.mxu0 0.0
    %503 = vmatprep.subr.mxu0 0.0
    %504 = vmatpush1.msra.mxu0 0.0
    %505 = vmatprep.subr.mxu0 0.0
    %506 = vmatpush1.msra.mxu0 0.0
    %507 = vmatprep.subr.mxu0 0.0
    %508 = vmatpush1.msra.mxu0 0.0
    %509 = vmatprep.subr.mxu0 0.0
    %510 = vmatpush1.msra.mxu0 %v492
    %511 = vmatprep.subr.mxu0 0.0
    %512 = vmatpush1.msra.mxu0 %v491
    %513 = vmatprep.subr.mxu0 0.0
    %514 = vmatpush1.msra.mxu0 %v490
    %515 = vmatprep.subr.mxu0 0.0
    %516 = vmatpush1.msra.mxu0 %v489
    %517 = vmatprep.subr.mxu0 0.0
    %518 = vmatpush1.msra.mxu0 %v488
    %519 = vmatprep.subr.mxu0 0.0
    %520 = vmatpush1.msra.mxu0 %v487
    %521 = vmatprep.subr.mxu0 0.0
    %522 = vmatpush1.msra.mxu0 %v486
    %523 = vmatprep.subr.mxu0 0.0
    %524 = vmatpush1.msra.mxu0 %v485
    %525 = vmatprep.subr.mxu0 0.0
    %526 = vmatpush2.msra.mxu0 0.0
    %527 = vmatprep.subr.mxu0 0.0
    %528 = vmatpush2.msra.mxu0 0.0
    %529 = vmatprep.subr.mxu0 0.0
    %530 = vmatpush2.msra.mxu0 0.0
    %531 = vmatprep.subr.mxu0 0.0
    %532 = vmatpush2.msra.mxu0 0.0
    %533 = vmatprep.subr.mxu0 0.0
    %534 = vmatpush2.msra.mxu0 0.0
    %535 = vmatprep.subr.mxu0 0.0
    %536 = vmatpush2.msra.mxu0 0.0
    %537 = vmatprep.subr.mxu0 0.0
    %538 = vmatpush2.msra.mxu0 0.0
    %539 = vmatprep.subr.mxu0 0.0
    %540 = vmatpush2.msra.mxu0 0.0
    %541 = vmatprep.subr.mxu0 0.0
    %542 = vmatpush2.msra.mxu0 0.0
    %543 = vmatprep.subr.mxu0 0.0
    %544 = vmatpush2.msra.mxu0 0.0
    %545 = vmatprep.subr.mxu0 0.0
    %546 = vmatpush2.msra.mxu0 0.0
    %547 = vmatprep.subr.mxu0 0.0
    %548 = vmatpush2.msra.mxu0 0.0
    %549 = vmatprep.subr.mxu0 0.0
    %550 = vmatpush2.msra.mxu0 0.0
    %551 = vmatprep.subr.mxu0 0.0
    %552 = vmatpush2.msra.mxu0 0.0
    %553 = vmatprep.subr.mxu0 0.0
    %554 = vmatpush2.msra.mxu0 0.0
    %555 = vmatprep.subr.mxu0 0.0
    %556 = vmatpush2.msra.mxu0 0.0
    %557 = vmatprep.mubr.f32.mxu0 0.0
    %558 = vmatmul.mubr.f32.gmra.mxu0 %v405
    %v559 = vpop.f32.mrf.mxu0
    %v560 = vadd.f32 0.0, %v559
    %v561 = vpop.f32.mrf.mxu0
    %562 = vdwg.mxu0
    %v563 = vadd.f32 %v215, %v560
    %v564 = vxor.u32 %v563, 2147483648
    %v565 = vmul.f32 %v564, 1.442695
    %v566 = vpow.pop %v565
    %v567 = vadd.f32 %v566, 1.0
    %v568 = vrcp.pop %v567
    %v569 = vmul.f32 1.0, %v568
    %s570 = scalar_lea.vmem [#allocation2], 128
    %v571 = vld [vmem:[%s570] sm:$0xff]
    %v572 = vld [vmem:[%s570 + $0x8] sm:$0xff]
    %v573 = vld [vmem:[%s570 + $0x10] sm:$0xff]
    %v574 = vld [vmem:[%s570 + $0x18] sm:$0xff]
    %v575 = vld [vmem:[%s570 + $0x20] sm:$0xff]
    %v576 = vld [vmem:[%s570 + $0x28] sm:$0xff]
    %v577 = vld [vmem:[%s570 + $0x30] sm:$0xff]
    %v578 = vld [vmem:[%s570 + $0x38] sm:$0xff]
    %579 = vmatprep.subr.mxu0 0.0
    %580 = vmatpush1.msra.mxu0 0.0
    %581 = vmatprep.subr.mxu0 0.0
    %582 = vmatpush1.msra.mxu0 0.0
    %583 = vmatprep.subr.mxu0 0.0
    %584 = vmatpush1.msra.mxu0 0.0
    %585 = vmatprep.subr.mxu0 0.0
    %586 = vmatpush1.msra.mxu0 0.0
    %587 = vmatprep.subr.mxu0 0.0
    %588 = vmatpush1.msra.mxu0 0.0
    %589 = vmatprep.subr.mxu0 0.0
    %590 = vmatpush1.msra.mxu0 0.0
    %591 = vmatprep.subr.mxu0 0.0
    %592 = vmatpush1.msra.mxu0 0.0
    %593 = vmatprep.subr.mxu0 0.0
    %594 = vmatpush1.msra.mxu0 0.0
    %595 = vmatprep.subr.mxu0 0.0
    %596 = vmatpush1.msra.mxu0 %v578
    %597 = vmatprep.subr.mxu0 0.0
    %598 = vmatpush1.msra.mxu0 %v577
    %599 = vmatprep.subr.mxu0 0.0
    %600 = vmatpush1.msra.mxu0 %v576
    %601 = vmatprep.subr.mxu0 0.0
    %602 = vmatpush1.msra.mxu0 %v575
    %603 = vmatprep.subr.mxu0 0.0
    %604 = vmatpush1.msra.mxu0 %v574
    %605 = vmatprep.subr.mxu0 0.0
    %606 = vmatpush1.msra.mxu0 %v573
    %607 = vmatprep.subr.mxu0 0.0
    %608 = vmatpush1.msra.mxu0 %v572
    %609 = vmatprep.subr.mxu0 0.0
    %610 = vmatpush1.msra.mxu0 %v571
    %611 = vmatprep.subr.mxu0 0.0
    %612 = vmatpush2.msra.mxu0 0.0
    %613 = vmatprep.subr.mxu0 0.0
    %614 = vmatpush2.msra.mxu0 0.0
    %615 = vmatprep.subr.mxu0 0.0
    %616 = vmatpush2.msra.mxu0 0.0
    %617 = vmatprep.subr.mxu0 0.0
    %618 = vmatpush2.msra.mxu0 0.0
    %619 = vmatprep.subr.mxu0 0.0
    %620 = vmatpush2.msra.mxu0 0.0
    %621 = vmatprep.subr.mxu0 0.0
    %622 = vmatpush2.msra.mxu0 0.0
    %623 = vmatprep.subr.mxu0 0.0
    %624 = vmatpush2.msra.mxu0 0.0
    %625 = vmatprep.subr.mxu0 0.0
    %626 = vmatpush2.msra.mxu0 0.0
    %627 = vmatprep.subr.mxu0 0.0
    %628 = vmatpush2.msra.mxu0 0.0
    %629 = vmatprep.subr.mxu0 0.0
    %630 = vmatpush2.msra.mxu0 0.0
    %631 = vmatprep.subr.mxu0 0.0
    %632 = vmatpush2.msra.mxu0 0.0
    %633 = vmatprep.subr.mxu0 0.0
    %634 = vmatpush2.msra.mxu0 0.0
    %635 = vmatprep.subr.mxu0 0.0
    %636 = vmatpush2.msra.mxu0 0.0
    %637 = vmatprep.subr.mxu0 0.0
    %638 = vmatpush2.msra.mxu0 0.0
    %639 = vmatprep.subr.mxu0 0.0
    %640 = vmatpush2.msra.mxu0 0.0
    %641 = vmatprep.subr.mxu0 0.0
    %642 = vmatpush2.msra.mxu0 0.0
    %643 = vmatprep.mubr.f32.mxu0 0.0
    %644 = vmatmul.mubr.f32.gmra.mxu0 %v405
    %v645 = vpop.f32.mrf.mxu0
    %v646 = vadd.f32 0.0, %v645
    %v647 = vpop.f32.mrf.mxu0
    %648 = vdwg.mxu0
    %v649 = vadd.f32 %v301, %v646
    %v650 = vtanh.pop %v649
    %s651 = scalar_lea.vmem [#allocation2], 192
    %v652 = vld [vmem:[%s651] sm:$0xff]
    %v653 = vld [vmem:[%s651 + $0x8] sm:$0xff]
    %v654 = vld [vmem:[%s651 + $0x10] sm:$0xff]
    %v655 = vld [vmem:[%s651 + $0x18] sm:$0xff]
    %v656 = vld [vmem:[%s651 + $0x20] sm:$0xff]
    %v657 = vld [vmem:[%s651 + $0x28] sm:$0xff]
    %v658 = vld [vmem:[%s651 + $0x30] sm:$0xff]
    %v659 = vld [vmem:[%s651 + $0x38] sm:$0xff]
    %660 = vmatprep.subr.mxu0 0.0
    %661 = vmatpush1.msra.mxu0 0.0
    %662 = vmatprep.subr.mxu0 0.0
    %663 = vmatpush1.msra.mxu0 0.0
    %664 = vmatprep.subr.mxu0 0.0
    %665 = vmatpush1.msra.mxu0 0.0
    %666 = vmatprep.subr.mxu0 0.0
    %667 = vmatpush1.msra.mxu0 0.0
    %668 = vmatprep.subr.mxu0 0.0
    %669 = vmatpush1.msra.mxu0 0.0
    %670 = vmatprep.subr.mxu0 0.0
    %671 = vmatpush1.msra.mxu0 0.0
    %672 = vmatprep.subr.mxu0 0.0
    %673 = vmatpush1.msra.mxu0 0.0
    %674 = vmatprep.subr.mxu0 0.0
    %675 = vmatpush1.msra.mxu0 0.0
    %676 = vmatprep.subr.mxu0 0.0
    %677 = vmatpush1.msra.mxu0 %v659
    %678 = vmatprep.subr.mxu0 0.0
    %679 = vmatpush1.msra.mxu0 %v658
    %680 = vmatprep.subr.mxu0 0.0
    %681 = vmatpush1.msra.mxu0 %v657
    %682 = vmatprep.subr.mxu0 0.0
    %683 = vmatpush1.msra.mxu0 %v656
    %684 = vmatprep.subr.mxu0 0.0
    %685 = vmatpush1.msra.mxu0 %v655
    %686 = vmatprep.subr.mxu0 0.0
    %687 = vmatpush1.msra.mxu0 %v654
    %688 = vmatprep.subr.mxu0 0.0
    %689 = vmatpush1.msra.mxu0 %v653
    %690 = vmatprep.subr.mxu0 0.0
    %691 = vmatpush1.msra.mxu0 %v652
    %692 = vmatprep.subr.mxu0 0.0
    %693 = vmatpush2.msra.mxu0 0.0
    %694 = vmatprep.subr.mxu0 0.0
    %695 = vmatpush2.msra.mxu0 0.0
    %696 = vmatprep.subr.mxu0 0.0
    %697 = vmatpush2.msra.mxu0 0.0
    %698 = vmatprep.subr.mxu0 0.0
    %699 = vmatpush2.msra.mxu0 0.0
    %700 = vmatprep.subr.mxu0 0.0
    %701 = vmatpush2.msra.mxu0 0.0
    %702 = vmatprep.subr.mxu0 0.0
    %703 = vmatpush2.msra.mxu0 0.0
    %704 = vmatprep.subr.mxu0 0.0
    %705 = vmatpush2.msra.mxu0 0.0
    %706 = vmatprep.subr.mxu0 0.0
    %707 = vmatpush2.msra.mxu0 0.0
    %708 = vmatprep.subr.mxu0 0.0
    %709 = vmatpush2.msra.mxu0 0.0
    %710 = vmatprep.subr.mxu0 0.0
    %711 = vmatpush2.msra.mxu0 0.0
    %712 = vmatprep.subr.mxu0 0.0
    %713 = vmatpush2.msra.mxu0 0.0
    %714 = vmatprep.subr.mxu0 0.0
    %715 = vmatpush2.msra.mxu0 0.0
    %716 = vmatprep.subr.mxu0 0.0
    %717 = vmatpush2.msra.mxu0 0.0
    %718 = vmatprep.subr.mxu0 0.0
    %719 = vmatpush2.msra.mxu0 0.0
    %720 = vmatprep.subr.mxu0 0.0
    %721 = vmatpush2.msra.mxu0 0.0
    %722 = vmatprep.subr.mxu0 0.0
    %723 = vmatpush2.msra.mxu0 0.0
    %724 = vmatprep.mubr.f32.mxu0 0.0
    %725 = vmatmul.mubr.f32.gmra.mxu0 %v405
    %v726 = vpop.f32.mrf.mxu0
    %v727 = vadd.f32 0.0, %v726
    %v728 = vpop.f32.mrf.mxu0
    %729 = vdwg.mxu0
    %v730 = vadd.f32 %v387, %v727
    %v731 = vxor.u32 %v730, 2147483648
    %v732 = vmul.f32 %v731, 1.442695
    %v733 = vpow.pop %v732
    %v734 = vadd.f32 %v733, 1.0
    %v735 = vrcp.pop %v734
    %v736 = vmul.f32 1.0, %v735
    %v737 = vmul.f32 %v569, 0.0
    %v738 = vmul.f32 %v483, %v650
    %v739 = vadd.f32 %v737, %v738
    %v740 = vtanh.pop %v739
    %v741 = vmul.f32 %v736, %v740
    %v743 = vsel %vm403, %v741, 0
    %745 = vmatprep.subr.mxu0 0.0
    %746 = vmatpush1.msra.mxu0 0.0
    %747 = vmatprep.subr.mxu0 0.0
    %748 = vmatpush1.msra.mxu0 0.0
    %749 = vmatprep.subr.mxu0 0.0
    %750 = vmatpush1.msra.mxu0 0.0
    %751 = vmatprep.subr.mxu0 0.0
    %752 = vmatpush1.msra.mxu0 0.0
    %753 = vmatprep.subr.mxu0 0.0
    %754 = vmatpush1.msra.mxu0 0.0
    %755 = vmatprep.subr.mxu0 0.0
    %756 = vmatpush1.msra.mxu0 0.0
    %757 = vmatprep.subr.mxu0 0.0
    %758 = vmatpush1.msra.mxu0 0.0
    %759 = vmatprep.subr.mxu0 0.0
    %760 = vmatpush1.msra.mxu0 0.0
    %761 = vmatprep.subr.mxu0 0.0
    %762 = vmatpush1.msra.mxu0 %v402
    %763 = vmatprep.subr.mxu0 0.0
    %764 = vmatpush1.msra.mxu0 %v401
    %765 = vmatprep.subr.mxu0 0.0
    %766 = vmatpush1.msra.mxu0 %v400
    %767 = vmatprep.subr.mxu0 0.0
    %768 = vmatpush1.msra.mxu0 %v399
    %769 = vmatprep.subr.mxu0 0.0
    %770 = vmatpush1.msra.mxu0 %v398
    %771 = vmatprep.subr.mxu0 0.0
    %772 = vmatpush1.msra.mxu0 %v397
    %773 = vmatprep.subr.mxu0 0.0
    %774 = vmatpush1.msra.mxu0 %v396
    %775 = vmatprep.subr.mxu0 0.0
    %776 = vmatpush1.msra.mxu0 %v395
    %777 = vmatprep.subr.mxu0 0.0
    %778 = vmatpush2.msra.mxu0 0.0
    %779 = vmatprep.subr.mxu0 0.0
    %780 = vmatpush2.msra.mxu0 0.0
    %781 = vmatprep.subr.mxu0 0.0
    %782 = vmatpush2.msra.mxu0 0.0
    %783 = vmatprep.subr.mxu0 0.0
    %784 = vmatpush2.msra.mxu0 0.0
    %785 = vmatprep.subr.mxu0 0.0
    %786 = vmatpush2.msra.mxu0 0.0
    %787 = vmatprep.subr.mxu0 0.0
    %788 = vmatpush2.msra.mxu0 0.0
    %789 = vmatprep.subr.mxu0 0.0
    %790 = vmatpush2.msra.mxu0 0.0
    %791 = vmatprep.subr.mxu0 0.0
    %792 = vmatpush2.msra.mxu0 0.0
    %793 = vmatprep.subr.mxu0 0.0
    %794 = vmatpush2.msra.mxu0 0.0
    %795 = vmatprep.subr.mxu0 0.0
    %796 = vmatpush2.msra.mxu0 0.0
    %797 = vmatprep.subr.mxu0 0.0
    %798 = vmatpush2.msra.mxu0 0.0
    %799 = vmatprep.subr.mxu0 0.0
    %800 = vmatpush2.msra.mxu0 0.0
    %801 = vmatprep.subr.mxu0 0.0
    %802 = vmatpush2.msra.mxu0 0.0
    %803 = vmatprep.subr.mxu0 0.0
    %804 = vmatpush2.msra.mxu0 0.0
    %805 = vmatprep.subr.mxu0 0.0
    %806 = vmatpush2.msra.mxu0 0.0
    %807 = vmatprep.subr.mxu0 0.0
    %808 = vmatpush2.msra.mxu0 0.0
    %809 = vmatprep.mubr.f32.mxu0 0.0
    %810 = vmatmul.mubr.f32.gmra.mxu0 %v743
    %v811 = vpop.f32.mrf.mxu0
    %v812 = vadd.f32 0.0, %v811
    %v813 = vpop.f32.mrf.mxu0
    %814 = vdwg.mxu0
    %v816 = vrot.slane %v812, 6
    %v818 = vadd.f32 %v129, %v816
    %v819 = vxor.u32 %v818, 2147483648
    %v820 = vmul.f32 %v819, 1.442695
    %v821 = vpow.pop %v820
    %v822 = vadd.f32 %v821, 1.0
    %v823 = vrcp.pop %v822
    %v824 = vmul.f32 1.0, %v823
    %825 = vmatprep.subr.mxu0 0.0
    %826 = vmatpush1.msra.mxu0 0.0
    %827 = vmatprep.subr.mxu0 0.0
    %828 = vmatpush1.msra.mxu0 0.0
    %829 = vmatprep.subr.mxu0 0.0
    %830 = vmatpush1.msra.mxu0 0.0
    %831 = vmatprep.subr.mxu0 0.0
    %832 = vmatpush1.msra.mxu0 0.0
    %833 = vmatprep.subr.mxu0 0.0
    %834 = vmatpush1.msra.mxu0 0.0
    %835 = vmatprep.subr.mxu0 0.0
    %836 = vmatpush1.msra.mxu0 0.0
    %837 = vmatprep.subr.mxu0 0.0
    %838 = vmatpush1.msra.mxu0 0.0
    %839 = vmatprep.subr.mxu0 0.0
    %840 = vmatpush1.msra.mxu0 0.0
    %841 = vmatprep.subr.mxu0 0.0
    %842 = vmatpush1.msra.mxu0 %v492
    %843 = vmatprep.subr.mxu0 0.0
    %844 = vmatpush1.msra.mxu0 %v491
    %845 = vmatprep.subr.mxu0 0.0
    %846 = vmatpush1.msra.mxu0 %v490
    %847 = vmatprep.subr.mxu0 0.0
    %848 = vmatpush1.msra.mxu0 %v489
    %849 = vmatprep.subr.mxu0 0.0
    %850 = vmatpush1.msra.mxu0 %v488
    %851 = vmatprep.subr.mxu0 0.0
    %852 = vmatpush1.msra.mxu0 %v487
    %853 = vmatprep.subr.mxu0 0.0
    %854 = vmatpush1.msra.mxu0 %v486
    %855 = vmatprep.subr.mxu0 0.0
    %856 = vmatpush1.msra.mxu0 %v485
    %857 = vmatprep.subr.mxu0 0.0
    %858 = vmatpush2.msra.mxu0 0.0
    %859 = vmatprep.subr.mxu0 0.0
    %860 = vmatpush2.msra.mxu0 0.0
    %861 = vmatprep.subr.mxu0 0.0
    %862 = vmatpush2.msra.mxu0 0.0
    %863 = vmatprep.subr.mxu0 0.0
    %864 = vmatpush2.msra.mxu0 0.0
    %865 = vmatprep.subr.mxu0 0.0
    %866 = vmatpush2.msra.mxu0 0.0
    %867 = vmatprep.subr.mxu0 0.0
    %868 = vmatpush2.msra.mxu0 0.0
    %869 = vmatprep.subr.mxu0 0.0
    %870 = vmatpush2.msra.mxu0 0.0
    %871 = vmatprep.subr.mxu0 0.0
    %872 = vmatpush2.msra.mxu0 0.0
    %873 = vmatprep.subr.mxu0 0.0
    %874 = vmatpush2.msra.mxu0 0.0
    %875 = vmatprep.subr.mxu0 0.0
    %876 = vmatpush2.msra.mxu0 0.0
    %877 = vmatprep.subr.mxu0 0.0
    %878 = vmatpush2.msra.mxu0 0.0
    %879 = vmatprep.subr.mxu0 0.0
    %880 = vmatpush2.msra.mxu0 0.0
    %881 = vmatprep.subr.mxu0 0.0
    %882 = vmatpush2.msra.mxu0 0.0
    %883 = vmatprep.subr.mxu0 0.0
    %884 = vmatpush2.msra.mxu0 0.0
    %885 = vmatprep.subr.mxu0 0.0
    %886 = vmatpush2.msra.mxu0 0.0
    %887 = vmatprep.subr.mxu0 0.0
    %888 = vmatpush2.msra.mxu0 0.0
    %889 = vmatprep.mubr.f32.mxu0 0.0
    %890 = vmatmul.mubr.f32.gmra.mxu0 %v743
    %v891 = vpop.f32.mrf.mxu0
    %v892 = vadd.f32 0.0, %v891
    %v893 = vpop.f32.mrf.mxu0
    %894 = vdwg.mxu0
    %v896 = vrot.slane %v892, 6
    %v898 = vadd.f32 %v215, %v896
    %v899 = vxor.u32 %v898, 2147483648
    %v900 = vmul.f32 %v899, 1.442695
    %v901 = vpow.pop %v900
    %v902 = vadd.f32 %v901, 1.0
    %v903 = vrcp.pop %v902
    %v904 = vmul.f32 1.0, %v903
    %905 = vmatprep.subr.mxu0 0.0
    %906 = vmatpush1.msra.mxu0 0.0
    %907 = vmatprep.subr.mxu0 0.0
    %908 = vmatpush1.msra.mxu0 0.0
    %909 = vmatprep.subr.mxu0 0.0
    %910 = vmatpush1.msra.mxu0 0.0
    %911 = vmatprep.subr.mxu0 0.0
    %912 = vmatpush1.msra.mxu0 0.0
    %913 = vmatprep.subr.mxu0 0.0
    %914 = vmatpush1.msra.mxu0 0.0
    %915 = vmatprep.subr.mxu0 0.0
    %916 = vmatpush1.msra.mxu0 0.0
    %917 = vmatprep.subr.mxu0 0.0
    %918 = vmatpush1.msra.mxu0 0.0
    %919 = vmatprep.subr.mxu0 0.0
    %920 = vmatpush1.msra.mxu0 0.0
    %921 = vmatprep.subr.mxu0 0.0
    %922 = vmatpush1.msra.mxu0 %v578
    %923 = vmatprep.subr.mxu0 0.0
    %924 = vmatpush1.msra.mxu0 %v577
    %925 = vmatprep.subr.mxu0 0.0
    %926 = vmatpush1.msra.mxu0 %v576
    %927 = vmatprep.subr.mxu0 0.0
    %928 = vmatpush1.msra.mxu0 %v575
    %929 = vmatprep.subr.mxu0 0.0
    %930 = vmatpush1.msra.mxu0 %v574
    %931 = vmatprep.subr.mxu0 0.0
    %932 = vmatpush1.msra.mxu0 %v573
    %933 = vmatprep.subr.mxu0 0.0
    %934 = vmatpush1.msra.mxu0 %v572
    %935 = vmatprep.subr.mxu0 0.0
    %936 = vmatpush1.msra.mxu0 %v571
    %937 = vmatprep.subr.mxu0 0.0
    %938 = vmatpush2.msra.mxu0 0.0
    %939 = vmatprep.subr.mxu0 0.0
    %940 = vmatpush2.msra.mxu0 0.0
    %941 = vmatprep.subr.mxu0 0.0
    %942 = vmatpush2.msra.mxu0 0.0
    %943 = vmatprep.subr.mxu0 0.0
    %944 = vmatpush2.msra.mxu0 0.0
    %945 = vmatprep.subr.mxu0 0.0
    %946 = vmatpush2.msra.mxu0 0.0
    %947 = vmatprep.subr.mxu0 0.0
    %948 = vmatpush2.msra.mxu0 0.0
    %949 = vmatprep.subr.mxu0 0.0
    %950 = vmatpush2.msra.mxu0 0.0
    %951 = vmatprep.subr.mxu0 0.0
    %952 = vmatpush2.msra.mxu0 0.0
    %953 = vmatprep.subr.mxu0 0.0
    %954 = vmatpush2.msra.mxu0 0.0
    %955 = vmatprep.subr.mxu0 0.0
    %956 = vmatpush2.msra.mxu0 0.0
    %957 = vmatprep.subr.mxu0 0.0
    %958 = vmatpush2.msra.mxu0 0.0
    %959 = vmatprep.subr.mxu0 0.0
    %960 = vmatpush2.msra.mxu0 0.0
    %961 = vmatprep.subr.mxu0 0.0
    %962 = vmatpush2.msra.mxu0 0.0
    %963 = vmatprep.subr.mxu0 0.0
    %964 = vmatpush2.msra.mxu0 0.0
    %965 = vmatprep.subr.mxu0 0.0
    %966 = vmatpush2.msra.mxu0 0.0
    %967 = vmatprep.subr.mxu0 0.0
    %968 = vmatpush2.msra.mxu0 0.0
    %969 = vmatprep.mubr.f32.mxu0 0.0
    %970 = vmatmul.mubr.f32.gmra.mxu0 %v743
    %v971 = vpop.f32.mrf.mxu0
    %v972 = vadd.f32 0.0, %v971
    %v973 = vpop.f32.mrf.mxu0
    %974 = vdwg.mxu0
    %v976 = vrot.slane %v972, 6
    %v978 = vadd.f32 %v301, %v976
    %v979 = vtanh.pop %v978
    %980 = vmatprep.subr.mxu0 0.0
    %981 = vmatpush1.msra.mxu0 0.0
    %982 = vmatprep.subr.mxu0 0.0
    %983 = vmatpush1.msra.mxu0 0.0
    %984 = vmatprep.subr.mxu0 0.0
    %985 = vmatpush1.msra.mxu0 0.0
    %986 = vmatprep.subr.mxu0 0.0
    %987 = vmatpush1.msra.mxu0 0.0
    %988 = vmatprep.subr.mxu0 0.0
    %989 = vmatpush1.msra.mxu0 0.0
    %990 = vmatprep.subr.mxu0 0.0
    %991 = vmatpush1.msra.mxu0 0.0
    %992 = vmatprep.subr.mxu0 0.0
    %993 = vmatpush1.msra.mxu0 0.0
    %994 = vmatprep.subr.mxu0 0.0
    %995 = vmatpush1.msra.mxu0 0.0
    %996 = vmatprep.subr.mxu0 0.0
    %997 = vmatpush1.msra.mxu0 %v659
    %998 = vmatprep.subr.mxu0 0.0
    %999 = vmatpush1.msra.mxu0 %v658
    %1000 = vmatprep.subr.mxu0 0.0
    %1001 = vmatpush1.msra.mxu0 %v657
    %1002 = vmatprep.subr.mxu0 0.0
    %1003 = vmatpush1.msra.mxu0 %v656
    %1004 = vmatprep.subr.mxu0 0.0
    %1005 = vmatpush1.msra.mxu0 %v655
    %1006 = vmatprep.subr.mxu0 0.0
    %1007 = vmatpush1.msra.mxu0 %v654
    %1008 = vmatprep.subr.mxu0 0.0
    %1009 = vmatpush1.msra.mxu0 %v653
    %1010 = vmatprep.subr.mxu0 0.0
    %1011 = vmatpush1.msra.mxu0 %v652
    %1012 = vmatprep.subr.mxu0 0.0
    %1013 = vmatpush2.msra.mxu0 0.0
    %1014 = vmatprep.subr.mxu0 0.0
    %1015 = vmatpush2.msra.mxu0 0.0
    %1016 = vmatprep.subr.mxu0 0.0
    %1017 = vmatpush2.msra.mxu0 0.0
    %1018 = vmatprep.subr.mxu0 0.0
    %1019 = vmatpush2.msra.mxu0 0.0
    %1020 = vmatprep.subr.mxu0 0.0
    %1021 = vmatpush2.msra.mxu0 0.0
    %1022 = vmatprep.subr.mxu0 0.0
    %1023 = vmatpush2.msra.mxu0 0.0
    %1024 = vmatprep.subr.mxu0 0.0
    %1025 = vmatpush2.msra.mxu0 0.0
    %1026 = vmatprep.subr.mxu0 0.0
    %1027 = vmatpush2.msra.mxu0 0.0
    %1028 = vmatprep.subr.mxu0 0.0
    %1029 = vmatpush2.msra.mxu0 0.0
    %1030 = vmatprep.subr.mxu0 0.0
    %1031 = vmatpush2.msra.mxu0 0.0
    %1032 = vmatprep.subr.mxu0 0.0
    %1033 = vmatpush2.msra.mxu0 0.0
    %1034 = vmatprep.subr.mxu0 0.0
    %1035 = vmatpush2.msra.mxu0 0.0
    %1036 = vmatprep.subr.mxu0 0.0
    %1037 = vmatpush2.msra.mxu0 0.0
    %1038 = vmatprep.subr.mxu0 0.0
    %1039 = vmatpush2.msra.mxu0 0.0
    %1040 = vmatprep.subr.mxu0 0.0
    %1041 = vmatpush2.msra.mxu0 0.0
    %1042 = vmatprep.subr.mxu0 0.0
    %1043 = vmatpush2.msra.mxu0 0.0
    %1044 = vmatprep.mubr.f32.mxu0 0.0
    %1045 = vmatmul.mubr.f32.gmra.mxu0 %v743
    %v1046 = vpop.f32.mrf.mxu0
    %v1047 = vadd.f32 0.0, %v1046
    %v1048 = vpop.f32.mrf.mxu0
    %1049 = vdwg.mxu0
    %v1051 = vrot.slane %v1047, 6
    %v1053 = vadd.f32 %v387, %v1051
    %v1054 = vxor.u32 %v1053, 2147483648
    %v1055 = vmul.f32 %v1054, 1.442695
    %v1056 = vpow.pop %v1055
    %v1057 = vadd.f32 %v1056, 1.0
    %v1058 = vrcp.pop %v1057
    %v1059 = vmul.f32 1.0, %v1058
    %v1061 = vrot.slane %v739, 6
    %v1063 = vmul.f32 %v904, %v1061
    %v1064 = vmul.f32 %v824, %v979
    %v1065 = vadd.f32 %v1063, %v1064
    %v1066 = vtanh.pop %v1065
    %v1067 = vmul.f32 %v1059, %v1066
    %v1069 = vrot.slane %v1067, 2
    %v1070 = vsel %vm403, %v1069, 0
    %1072 = vmatprep.subr.mxu0 0.0
    %1073 = vmatpush1.msra.mxu0 0.0
    %1074 = vmatprep.subr.mxu0 0.0
    %1075 = vmatpush1.msra.mxu0 0.0
    %1076 = vmatprep.subr.mxu0 0.0
    %1077 = vmatpush1.msra.mxu0 0.0
    %1078 = vmatprep.subr.mxu0 0.0
    %1079 = vmatpush1.msra.mxu0 0.0
    %1080 = vmatprep.subr.mxu0 0.0
    %1081 = vmatpush1.msra.mxu0 0.0
    %1082 = vmatprep.subr.mxu0 0.0
    %1083 = vmatpush1.msra.mxu0 0.0
    %1084 = vmatprep.subr.mxu0 0.0
    %1085 = vmatpush1.msra.mxu0 0.0
    %1086 = vmatprep.subr.mxu0 0.0
    %1087 = vmatpush1.msra.mxu0 0.0
    %1088 = vmatprep.subr.mxu0 0.0
    %1089 = vmatpush1.msra.mxu0 %v402
    %1090 = vmatprep.subr.mxu0 0.0
    %1091 = vmatpush1.msra.mxu0 %v401
    %1092 = vmatprep.subr.mxu0 0.0
    %1093 = vmatpush1.msra.mxu0 %v400
    %1094 = vmatprep.subr.mxu0 0.0
    %1095 = vmatpush1.msra.mxu0 %v399
    %1096 = vmatprep.subr.mxu0 0.0
    %1097 = vmatpush1.msra.mxu0 %v398
    %1098 = vmatprep.subr.mxu0 0.0
    %1099 = vmatpush1.msra.mxu0 %v397
    %1100 = vmatprep.subr.mxu0 0.0
    %1101 = vmatpush1.msra.mxu0 %v396
    %1102 = vmatprep.subr.mxu0 0.0
    %1103 = vmatpush1.msra.mxu0 %v395
    %1104 = vmatprep.subr.mxu0 0.0
    %1105 = vmatpush2.msra.mxu0 0.0
    %1106 = vmatprep.subr.mxu0 0.0
    %1107 = vmatpush2.msra.mxu0 0.0
    %1108 = vmatprep.subr.mxu0 0.0
    %1109 = vmatpush2.msra.mxu0 0.0
    %1110 = vmatprep.subr.mxu0 0.0
    %1111 = vmatpush2.msra.mxu0 0.0
    %1112 = vmatprep.subr.mxu0 0.0
    %1113 = vmatpush2.msra.mxu0 0.0
    %1114 = vmatprep.subr.mxu0 0.0
    %1115 = vmatpush2.msra.mxu0 0.0
    %1116 = vmatprep.subr.mxu0 0.0
    %1117 = vmatpush2.msra.mxu0 0.0
    %1118 = vmatprep.subr.mxu0 0.0
    %1119 = vmatpush2.msra.mxu0 0.0
    %1120 = vmatprep.subr.mxu0 0.0
    %1121 = vmatpush2.msra.mxu0 0.0
    %1122 = vmatprep.subr.mxu0 0.0
    %1123 = vmatpush2.msra.mxu0 0.0
    %1124 = vmatprep.subr.mxu0 0.0
    %1125 = vmatpush2.msra.mxu0 0.0
    %1126 = vmatprep.subr.mxu0 0.0
    %1127 = vmatpush2.msra.mxu0 0.0
    %1128 = vmatprep.subr.mxu0 0.0
    %1129 = vmatpush2.msra.mxu0 0.0
    %1130 = vmatprep.subr.mxu0 0.0
    %1131 = vmatpush2.msra.mxu0 0.0
    %1132 = vmatprep.subr.mxu0 0.0
    %1133 = vmatpush2.msra.mxu0 0.0
    %1134 = vmatprep.subr.mxu0 0.0
    %1135 = vmatpush2.msra.mxu0 0.0
    %1136 = vmatprep.mubr.f32.mxu0 0.0
    %1137 = vmatmul.mubr.f32.gmra.mxu0 %v1070
    %v1138 = vpop.f32.mrf.mxu0
    %v1139 = vadd.f32 0.0, %v1138
    %v1140 = vpop.f32.mrf.mxu0
    %1141 = vdwg.mxu0
    %v1143 = vrot.slane %v1139, 4
    %v1145 = vadd.f32 %v129, %v1143
    %v1146 = vxor.u32 %v1145, 2147483648
    %v1147 = vmul.f32 %v1146, 1.442695
    %v1148 = vpow.pop %v1147
    %v1149 = vadd.f32 %v1148, 1.0
    %v1150 = vrcp.pop %v1149
    %v1151 = vmul.f32 1.0, %v1150
    %1152 = vmatprep.subr.mxu0 0.0
    %1153 = vmatpush1.msra.mxu0 0.0
    %1154 = vmatprep.subr.mxu0 0.0
    %1155 = vmatpush1.msra.mxu0 0.0
    %1156 = vmatprep.subr.mxu0 0.0
    %1157 = vmatpush1.msra.mxu0 0.0
    %1158 = vmatprep.subr.mxu0 0.0
    %1159 = vmatpush1.msra.mxu0 0.0
    %1160 = vmatprep.subr.mxu0 0.0
    %1161 = vmatpush1.msra.mxu0 0.0
    %1162 = vmatprep.subr.mxu0 0.0
    %1163 = vmatpush1.msra.mxu0 0.0
    %1164 = vmatprep.subr.mxu0 0.0
    %1165 = vmatpush1.msra.mxu0 0.0
    %1166 = vmatprep.subr.mxu0 0.0
    %1167 = vmatpush1.msra.mxu0 0.0
    %1168 = vmatprep.subr.mxu0 0.0
    %1169 = vmatpush1.msra.mxu0 %v492
    %1170 = vmatprep.subr.mxu0 0.0
    %1171 = vmatpush1.msra.mxu0 %v491
    %1172 = vmatprep.subr.mxu0 0.0
    %1173 = vmatpush1.msra.mxu0 %v490
    %1174 = vmatprep.subr.mxu0 0.0
    %1175 = vmatpush1.msra.mxu0 %v489
    %1176 = vmatprep.subr.mxu0 0.0
    %1177 = vmatpush1.msra.mxu0 %v488
    %1178 = vmatprep.subr.mxu0 0.0
    %1179 = vmatpush1.msra.mxu0 %v487
    %1180 = vmatprep.subr.mxu0 0.0
    %1181 = vmatpush1.msra.mxu0 %v486
    %1182 = vmatprep.subr.mxu0 0.0
    %1183 = vmatpush1.msra.mxu0 %v485
    %1184 = vmatprep.subr.mxu0 0.0
    %1185 = vmatpush2.msra.mxu0 0.0
    %1186 = vmatprep.subr.mxu0 0.0
    %1187 = vmatpush2.msra.mxu0 0.0
    %1188 = vmatprep.subr.mxu0 0.0
    %1189 = vmatpush2.msra.mxu0 0.0
    %1190 = vmatprep.subr.mxu0 0.0
    %1191 = vmatpush2.msra.mxu0 0.0
    %1192 = vmatprep.subr.mxu0 0.0
    %1193 = vmatpush2.msra.mxu0 0.0
    %1194 = vmatprep.subr.mxu0 0.0
    %1195 = vmatpush2.msra.mxu0 0.0
    %1196 = vmatprep.subr.mxu0 0.0
    %1197 = vmatpush2.msra.mxu0 0.0
    %1198 = vmatprep.subr.mxu0 0.0
    %1199 = vmatpush2.msra.mxu0 0.0
    %1200 = vmatprep.subr.mxu0 0.0
    %1201 = vmatpush2.msra.mxu0 0.0
    %1202 = vmatprep.subr.mxu0 0.0
    %1203 = vmatpush2.msra.mxu0 0.0
    %1204 = vmatprep.subr.mxu0 0.0
    %1205 = vmatpush2.msra.mxu0 0.0
    %1206 = vmatprep.subr.mxu0 0.0
    %1207 = vmatpush2.msra.mxu0 0.0
    %1208 = vmatprep.subr.mxu0 0.0
    %1209 = vmatpush2.msra.mxu0 0.0
    %1210 = vmatprep.subr.mxu0 0.0
    %1211 = vmatpush2.msra.mxu0 0.0
    %1212 = vmatprep.subr.mxu0 0.0
    %1213 = vmatpush2.msra.mxu0 0.0
    %1214 = vmatprep.subr.mxu0 0.0
    %1215 = vmatpush2.msra.mxu0 0.0
    %1216 = vmatprep.mubr.f32.mxu0 0.0
    %1217 = vmatmul.mubr.f32.gmra.mxu0 %v1070
    %v1218 = vpop.f32.mrf.mxu0
    %v1219 = vadd.f32 0.0, %v1218
    %v1220 = vpop.f32.mrf.mxu0
    %1221 = vdwg.mxu0
    %v1223 = vrot.slane %v1219, 4
    %v1225 = vadd.f32 %v215, %v1223
    %v1226 = vxor.u32 %v1225, 2147483648
    %v1227 = vmul.f32 %v1226, 1.442695
    %v1228 = vpow.pop %v1227
    %v1229 = vadd.f32 %v1228, 1.0
    %v1230 = vrcp.pop %v1229
    %v1231 = vmul.f32 1.0, %v1230
    %1232 = vmatprep.subr.mxu0 0.0
    %1233 = vmatpush1.msra.mxu0 0.0
    %1234 = vmatprep.subr.mxu0 0.0
    %1235 = vmatpush1.msra.mxu0 0.0
    %1236 = vmatprep.subr.mxu0 0.0
    %1237 = vmatpush1.msra.mxu0 0.0
    %1238 = vmatprep.subr.mxu0 0.0
    %1239 = vmatpush1.msra.mxu0 0.0
    %1240 = vmatprep.subr.mxu0 0.0
    %1241 = vmatpush1.msra.mxu0 0.0
    %1242 = vmatprep.subr.mxu0 0.0
    %1243 = vmatpush1.msra.mxu0 0.0
    %1244 = vmatprep.subr.mxu0 0.0
    %1245 = vmatpush1.msra.mxu0 0.0
    %1246 = vmatprep.subr.mxu0 0.0
    %1247 = vmatpush1.msra.mxu0 0.0
    %1248 = vmatprep.subr.mxu0 0.0
    %1249 = vmatpush1.msra.mxu0 %v578
    %1250 = vmatprep.subr.mxu0 0.0
    %1251 = vmatpush1.msra.mxu0 %v577
    %1252 = vmatprep.subr.mxu0 0.0
    %1253 = vmatpush1.msra.mxu0 %v576
    %1254 = vmatprep.subr.mxu0 0.0
    %1255 = vmatpush1.msra.mxu0 %v575
    %1256 = vmatprep.subr.mxu0 0.0
    %1257 = vmatpush1.msra.mxu0 %v574
    %1258 = vmatprep.subr.mxu0 0.0
    %1259 = vmatpush1.msra.mxu0 %v573
    %1260 = vmatprep.subr.mxu0 0.0
    %1261 = vmatpush1.msra.mxu0 %v572
    %1262 = vmatprep.subr.mxu0 0.0
    %1263 = vmatpush1.msra.mxu0 %v571
    %1264 = vmatprep.subr.mxu0 0.0
    %1265 = vmatpush2.msra.mxu0 0.0
    %1266 = vmatprep.subr.mxu0 0.0
    %1267 = vmatpush2.msra.mxu0 0.0
    %1268 = vmatprep.subr.mxu0 0.0
    %1269 = vmatpush2.msra.mxu0 0.0
    %1270 = vmatprep.subr.mxu0 0.0
    %1271 = vmatpush2.msra.mxu0 0.0
    %1272 = vmatprep.subr.mxu0 0.0
    %1273 = vmatpush2.msra.mxu0 0.0
    %1274 = vmatprep.subr.mxu0 0.0
    %1275 = vmatpush2.msra.mxu0 0.0
    %1276 = vmatprep.subr.mxu0 0.0
    %1277 = vmatpush2.msra.mxu0 0.0
    %1278 = vmatprep.subr.mxu0 0.0
    %1279 = vmatpush2.msra.mxu0 0.0
    %1280 = vmatprep.subr.mxu0 0.0
    %1281 = vmatpush2.msra.mxu0 0.0
    %1282 = vmatprep.subr.mxu0 0.0
    %1283 = vmatpush2.msra.mxu0 0.0
    %1284 = vmatprep.subr.mxu0 0.0
    %1285 = vmatpush2.msra.mxu0 0.0
    %1286 = vmatprep.subr.mxu0 0.0
    %1287 = vmatpush2.msra.mxu0 0.0
    %1288 = vmatprep.subr.mxu0 0.0
    %1289 = vmatpush2.msra.mxu0 0.0
    %1290 = vmatprep.subr.mxu0 0.0
    %1291 = vmatpush2.msra.mxu0 0.0
    %1292 = vmatprep.subr.mxu0 0.0
    %1293 = vmatpush2.msra.mxu0 0.0
    %1294 = vmatprep.subr.mxu0 0.0
    %1295 = vmatpush2.msra.mxu0 0.0
    %1296 = vmatprep.mubr.f32.mxu0 0.0
    %1297 = vmatmul.mubr.f32.gmra.mxu0 %v1070
    %v1298 = vpop.f32.mrf.mxu0
    %v1299 = vadd.f32 0.0, %v1298
    %v1300 = vpop.f32.mrf.mxu0
    %1301 = vdwg.mxu0
    %v1303 = vrot.slane %v1299, 4
    %v1305 = vadd.f32 %v301, %v1303
    %v1306 = vtanh.pop %v1305
    %1307 = vmatprep.subr.mxu0 0.0
    %1308 = vmatpush1.msra.mxu0 0.0
    %1309 = vmatprep.subr.mxu0 0.0
    %1310 = vmatpush1.msra.mxu0 0.0
    %1311 = vmatprep.subr.mxu0 0.0
    %1312 = vmatpush1.msra.mxu0 0.0
    %1313 = vmatprep.subr.mxu0 0.0
    %1314 = vmatpush1.msra.mxu0 0.0
    %1315 = vmatprep.subr.mxu0 0.0
    %1316 = vmatpush1.msra.mxu0 0.0
    %1317 = vmatprep.subr.mxu0 0.0
    %1318 = vmatpush1.msra.mxu0 0.0
    %1319 = vmatprep.subr.mxu0 0.0
    %1320 = vmatpush1.msra.mxu0 0.0
    %1321 = vmatprep.subr.mxu0 0.0
    %1322 = vmatpush1.msra.mxu0 0.0
    %1323 = vmatprep.subr.mxu0 0.0
    %1324 = vmatpush1.msra.mxu0 %v659
    %1325 = vmatprep.subr.mxu0 0.0
    %1326 = vmatpush1.msra.mxu0 %v658
    %1327 = vmatprep.subr.mxu0 0.0
    %1328 = vmatpush1.msra.mxu0 %v657
    %1329 = vmatprep.subr.mxu0 0.0
    %1330 = vmatpush1.msra.mxu0 %v656
    %1331 = vmatprep.subr.mxu0 0.0
    %1332 = vmatpush1.msra.mxu0 %v655
    %1333 = vmatprep.subr.mxu0 0.0
    %1334 = vmatpush1.msra.mxu0 %v654
    %1335 = vmatprep.subr.mxu0 0.0
    %1336 = vmatpush1.msra.mxu0 %v653
    %1337 = vmatprep.subr.mxu0 0.0
    %1338 = vmatpush1.msra.mxu0 %v652
    %1339 = vmatprep.subr.mxu0 0.0
    %1340 = vmatpush2.msra.mxu0 0.0
    %1341 = vmatprep.subr.mxu0 0.0
    %1342 = vmatpush2.msra.mxu0 0.0
    %1343 = vmatprep.subr.mxu0 0.0
    %1344 = vmatpush2.msra.mxu0 0.0
    %1345 = vmatprep.subr.mxu0 0.0
    %1346 = vmatpush2.msra.mxu0 0.0
    %1347 = vmatprep.subr.mxu0 0.0
    %1348 = vmatpush2.msra.mxu0 0.0
    %1349 = vmatprep.subr.mxu0 0.0
    %1350 = vmatpush2.msra.mxu0 0.0
    %1351 = vmatprep.subr.mxu0 0.0
    %1352 = vmatpush2.msra.mxu0 0.0
    %1353 = vmatprep.subr.mxu0 0.0
    %1354 = vmatpush2.msra.mxu0 0.0
    %1355 = vmatprep.subr.mxu0 0.0
    %1356 = vmatpush2.msra.mxu0 0.0
    %1357 = vmatprep.subr.mxu0 0.0
    %1358 = vmatpush2.msra.mxu0 0.0
    %1359 = vmatprep.subr.mxu0 0.0
    %1360 = vmatpush2.msra.mxu0 0.0
    %1361 = vmatprep.subr.mxu0 0.0
    %1362 = vmatpush2.msra.mxu0 0.0
    %1363 = vmatprep.subr.mxu0 0.0
    %1364 = vmatpush2.msra.mxu0 0.0
    %1365 = vmatprep.subr.mxu0 0.0
    %1366 = vmatpush2.msra.mxu0 0.0
    %1367 = vmatprep.subr.mxu0 0.0
    %1368 = vmatpush2.msra.mxu0 0.0
    %1369 = vmatprep.subr.mxu0 0.0
    %1370 = vmatpush2.msra.mxu0 0.0
    %1371 = vmatprep.mubr.f32.mxu0 0.0
    %1372 = vmatmul.mubr.f32.gmra.mxu0 %v1070
    %v1373 = vpop.f32.mrf.mxu0
    %v1374 = vadd.f32 0.0, %v1373
    %v1375 = vpop.f32.mrf.mxu0
    %1376 = vdwg.mxu0
    %v1378 = vrot.slane %v1374, 4
    %v1380 = vadd.f32 %v387, %v1378
    %v1381 = vxor.u32 %v1380, 2147483648
    %v1382 = vmul.f32 %v1381, 1.442695
    %v1383 = vpow.pop %v1382
    %v1384 = vadd.f32 %v1383, 1.0
    %v1385 = vrcp.pop %v1384
    %v1386 = vmul.f32 1.0, %v1385
    %v1388 = vrot.slane %v1065, 6
    %v1390 = vmul.f32 %v1231, %v1388
    %v1391 = vmul.f32 %v1151, %v1306
    %v1392 = vadd.f32 %v1390, %v1391
    %v1393 = vtanh.pop %v1392
    %v1394 = vmul.f32 %v1386, %v1393
    %v1396 = vrot.slane %v1394, 4
    %v1397 = vsel %vm403, %v1396, 0
    %1399 = vmatprep.subr.mxu0 0.0
    %1400 = vmatpush1.msra.mxu0 0.0
    %1401 = vmatprep.subr.mxu0 0.0
    %1402 = vmatpush1.msra.mxu0 0.0
    %1403 = vmatprep.subr.mxu0 0.0
    %1404 = vmatpush1.msra.mxu0 0.0
    %1405 = vmatprep.subr.mxu0 0.0
    %1406 = vmatpush1.msra.mxu0 0.0
    %1407 = vmatprep.subr.mxu0 0.0
    %1408 = vmatpush1.msra.mxu0 0.0
    %1409 = vmatprep.subr.mxu0 0.0
    %1410 = vmatpush1.msra.mxu0 0.0
    %1411 = vmatprep.subr.mxu0 0.0
    %1412 = vmatpush1.msra.mxu0 0.0
    %1413 = vmatprep.subr.mxu0 0.0
    %1414 = vmatpush1.msra.mxu0 0.0
    %1415 = vmatprep.subr.mxu0 0.0
    %1416 = vmatpush1.msra.mxu0 %v402
    %1417 = vmatprep.subr.mxu0 0.0
    %1418 = vmatpush1.msra.mxu0 %v401
    %1419 = vmatprep.subr.mxu0 0.0
    %1420 = vmatpush1.msra.mxu0 %v400
    %1421 = vmatprep.subr.mxu0 0.0
    %1422 = vmatpush1.msra.mxu0 %v399
    %1423 = vmatprep.subr.mxu0 0.0
    %1424 = vmatpush1.msra.mxu0 %v398
    %1425 = vmatprep.subr.mxu0 0.0
    %1426 = vmatpush1.msra.mxu0 %v397
    %1427 = vmatprep.subr.mxu0 0.0
    %1428 = vmatpush1.msra.mxu0 %v396
    %1429 = vmatprep.subr.mxu0 0.0
    %1430 = vmatpush1.msra.mxu0 %v395
    %1431 = vmatprep.subr.mxu0 0.0
    %1432 = vmatpush2.msra.mxu0 0.0
    %1433 = vmatprep.subr.mxu0 0.0
    %1434 = vmatpush2.msra.mxu0 0.0
    %1435 = vmatprep.subr.mxu0 0.0
    %1436 = vmatpush2.msra.mxu0 0.0
    %1437 = vmatprep.subr.mxu0 0.0
    %1438 = vmatpush2.msra.mxu0 0.0
    %1439 = vmatprep.subr.mxu0 0.0
    %1440 = vmatpush2.msra.mxu0 0.0
    %1441 = vmatprep.subr.mxu0 0.0
    %1442 = vmatpush2.msra.mxu0 0.0
    %1443 = vmatprep.subr.mxu0 0.0
    %1444 = vmatpush2.msra.mxu0 0.0
    %1445 = vmatprep.subr.mxu0 0.0
    %1446 = vmatpush2.msra.mxu0 0.0
    %1447 = vmatprep.subr.mxu0 0.0
    %1448 = vmatpush2.msra.mxu0 0.0
    %1449 = vmatprep.subr.mxu0 0.0
    %1450 = vmatpush2.msra.mxu0 0.0
    %1451 = vmatprep.subr.mxu0 0.0
    %1452 = vmatpush2.msra.mxu0 0.0
    %1453 = vmatprep.subr.mxu0 0.0
    %1454 = vmatpush2.msra.mxu0 0.0
    %1455 = vmatprep.subr.mxu0 0.0
    %1456 = vmatpush2.msra.mxu0 0.0
    %1457 = vmatprep.subr.mxu0 0.0
    %1458 = vmatpush2.msra.mxu0 0.0
    %1459 = vmatprep.subr.mxu0 0.0
    %1460 = vmatpush2.msra.mxu0 0.0
    %1461 = vmatprep.subr.mxu0 0.0
    %1462 = vmatpush2.msra.mxu0 0.0
    %1463 = vmatprep.mubr.f32.mxu0 0.0
    %1464 = vmatmul.mubr.f32.gmra.mxu0 %v1397
    %v1465 = vpop.f32.mrf.mxu0
    %v1466 = vadd.f32 0.0, %v1465
    %v1467 = vpop.f32.mrf.mxu0
    %1468 = vdwg.mxu0
    %v1470 = vrot.slane %v1466, 2
    %v1472 = vadd.f32 %v129, %v1470
    %v1473 = vxor.u32 %v1472, 2147483648
    %v1474 = vmul.f32 %v1473, 1.442695
    %v1475 = vpow.pop %v1474
    %v1476 = vadd.f32 %v1475, 1.0
    %v1477 = vrcp.pop %v1476
    %v1478 = vmul.f32 1.0, %v1477
    %1479 = vmatprep.subr.mxu0 0.0
    %1480 = vmatpush1.msra.mxu0 0.0
    %1481 = vmatprep.subr.mxu0 0.0
    %1482 = vmatpush1.msra.mxu0 0.0
    %1483 = vmatprep.subr.mxu0 0.0
    %1484 = vmatpush1.msra.mxu0 0.0
    %1485 = vmatprep.subr.mxu0 0.0
    %1486 = vmatpush1.msra.mxu0 0.0
    %1487 = vmatprep.subr.mxu0 0.0
    %1488 = vmatpush1.msra.mxu0 0.0
    %1489 = vmatprep.subr.mxu0 0.0
    %1490 = vmatpush1.msra.mxu0 0.0
    %1491 = vmatprep.subr.mxu0 0.0
    %1492 = vmatpush1.msra.mxu0 0.0
    %1493 = vmatprep.subr.mxu0 0.0
    %1494 = vmatpush1.msra.mxu0 0.0
    %1495 = vmatprep.subr.mxu0 0.0
    %1496 = vmatpush1.msra.mxu0 %v492
    %1497 = vmatprep.subr.mxu0 0.0
    %1498 = vmatpush1.msra.mxu0 %v491
    %1499 = vmatprep.subr.mxu0 0.0
    %1500 = vmatpush1.msra.mxu0 %v490
    %1501 = vmatprep.subr.mxu0 0.0
    %1502 = vmatpush1.msra.mxu0 %v489
    %1503 = vmatprep.subr.mxu0 0.0
    %1504 = vmatpush1.msra.mxu0 %v488
    %1505 = vmatprep.subr.mxu0 0.0
    %1506 = vmatpush1.msra.mxu0 %v487
    %1507 = vmatprep.subr.mxu0 0.0
    %1508 = vmatpush1.msra.mxu0 %v486
    %1509 = vmatprep.subr.mxu0 0.0
    %1510 = vmatpush1.msra.mxu0 %v485
    %1511 = vmatprep.subr.mxu0 0.0
    %1512 = vmatpush2.msra.mxu0 0.0
    %1513 = vmatprep.subr.mxu0 0.0
    %1514 = vmatpush2.msra.mxu0 0.0
    %1515 = vmatprep.subr.mxu0 0.0
    %1516 = vmatpush2.msra.mxu0 0.0
    %1517 = vmatprep.subr.mxu0 0.0
    %1518 = vmatpush2.msra.mxu0 0.0
    %1519 = vmatprep.subr.mxu0 0.0
    %1520 = vmatpush2.msra.mxu0 0.0
    %1521 = vmatprep.subr.mxu0 0.0
    %1522 = vmatpush2.msra.mxu0 0.0
    %1523 = vmatprep.subr.mxu0 0.0
    %1524 = vmatpush2.msra.mxu0 0.0
    %1525 = vmatprep.subr.mxu0 0.0
    %1526 = vmatpush2.msra.mxu0 0.0
    %1527 = vmatprep.subr.mxu0 0.0
    %1528 = vmatpush2.msra.mxu0 0.0
    %1529 = vmatprep.subr.mxu0 0.0
    %1530 = vmatpush2.msra.mxu0 0.0
    %1531 = vmatprep.subr.mxu0 0.0
    %1532 = vmatpush2.msra.mxu0 0.0
    %1533 = vmatprep.subr.mxu0 0.0
    %1534 = vmatpush2.msra.mxu0 0.0
    %1535 = vmatprep.subr.mxu0 0.0
    %1536 = vmatpush2.msra.mxu0 0.0
    %1537 = vmatprep.subr.mxu0 0.0
    %1538 = vmatpush2.msra.mxu0 0.0
    %1539 = vmatprep.subr.mxu0 0.0
    %1540 = vmatpush2.msra.mxu0 0.0
    %1541 = vmatprep.subr.mxu0 0.0
    %1542 = vmatpush2.msra.mxu0 0.0
    %1543 = vmatprep.mubr.f32.mxu0 0.0
    %1544 = vmatmul.mubr.f32.gmra.mxu0 %v1397
    %v1545 = vpop.f32.mrf.mxu0
    %v1546 = vadd.f32 0.0, %v1545
    %v1547 = vpop.f32.mrf.mxu0
    %1548 = vdwg.mxu0
    %v1550 = vrot.slane %v1546, 2
    %v1552 = vadd.f32 %v215, %v1550
    %v1553 = vxor.u32 %v1552, 2147483648
    %v1554 = vmul.f32 %v1553, 1.442695
    %v1555 = vpow.pop %v1554
    %v1556 = vadd.f32 %v1555, 1.0
    %v1557 = vrcp.pop %v1556
    %v1558 = vmul.f32 1.0, %v1557
    %1559 = vmatprep.subr.mxu0 0.0
    %1560 = vmatpush1.msra.mxu0 0.0
    %1561 = vmatprep.subr.mxu0 0.0
    %1562 = vmatpush1.msra.mxu0 0.0
    %1563 = vmatprep.subr.mxu0 0.0
    %1564 = vmatpush1.msra.mxu0 0.0
    %1565 = vmatprep.subr.mxu0 0.0
    %1566 = vmatpush1.msra.mxu0 0.0
    %1567 = vmatprep.subr.mxu0 0.0
    %1568 = vmatpush1.msra.mxu0 0.0
    %1569 = vmatprep.subr.mxu0 0.0
    %1570 = vmatpush1.msra.mxu0 0.0
    %1571 = vmatprep.subr.mxu0 0.0
    %1572 = vmatpush1.msra.mxu0 0.0
    %1573 = vmatprep.subr.mxu0 0.0
    %1574 = vmatpush1.msra.mxu0 0.0
    %1575 = vmatprep.subr.mxu0 0.0
    %1576 = vmatpush1.msra.mxu0 %v578
    %1577 = vmatprep.subr.mxu0 0.0
    %1578 = vmatpush1.msra.mxu0 %v577
    %1579 = vmatprep.subr.mxu0 0.0
    %1580 = vmatpush1.msra.mxu0 %v576
    %1581 = vmatprep.subr.mxu0 0.0
    %1582 = vmatpush1.msra.mxu0 %v575
    %1583 = vmatprep.subr.mxu0 0.0
    %1584 = vmatpush1.msra.mxu0 %v574
    %1585 = vmatprep.subr.mxu0 0.0
    %1586 = vmatpush1.msra.mxu0 %v573
    %1587 = vmatprep.subr.mxu0 0.0
    %1588 = vmatpush1.msra.mxu0 %v572
    %1589 = vmatprep.subr.mxu0 0.0
    %1590 = vmatpush1.msra.mxu0 %v571
    %1591 = vmatprep.subr.mxu0 0.0
    %1592 = vmatpush2.msra.mxu0 0.0
    %1593 = vmatprep.subr.mxu0 0.0
    %1594 = vmatpush2.msra.mxu0 0.0
    %1595 = vmatprep.subr.mxu0 0.0
    %1596 = vmatpush2.msra.mxu0 0.0
    %1597 = vmatprep.subr.mxu0 0.0
    %1598 = vmatpush2.msra.mxu0 0.0
    %1599 = vmatprep.subr.mxu0 0.0
    %1600 = vmatpush2.msra.mxu0 0.0
    %1601 = vmatprep.subr.mxu0 0.0
    %1602 = vmatpush2.msra.mxu0 0.0
    %1603 = vmatprep.subr.mxu0 0.0
    %1604 = vmatpush2.msra.mxu0 0.0
    %1605 = vmatprep.subr.mxu0 0.0
    %1606 = vmatpush2.msra.mxu0 0.0
    %1607 = vmatprep.subr.mxu0 0.0
    %1608 = vmatpush2.msra.mxu0 0.0
    %1609 = vmatprep.subr.mxu0 0.0
    %1610 = vmatpush2.msra.mxu0 0.0
    %1611 = vmatprep.subr.mxu0 0.0
    %1612 = vmatpush2.msra.mxu0 0.0
    %1613 = vmatprep.subr.mxu0 0.0
    %1614 = vmatpush2.msra.mxu0 0.0
    %1615 = vmatprep.subr.mxu0 0.0
    %1616 = vmatpush2.msra.mxu0 0.0
    %1617 = vmatprep.subr.mxu0 0.0
    %1618 = vmatpush2.msra.mxu0 0.0
    %1619 = vmatprep.subr.mxu0 0.0
    %1620 = vmatpush2.msra.mxu0 0.0
    %1621 = vmatprep.subr.mxu0 0.0
    %1622 = vmatpush2.msra.mxu0 0.0
    %1623 = vmatprep.mubr.f32.mxu0 0.0
    %1624 = vmatmul.mubr.f32.gmra.mxu0 %v1397
    %v1625 = vpop.f32.mrf.mxu0
    %v1626 = vadd.f32 0.0, %v1625
    %v1627 = vpop.f32.mrf.mxu0
    %1628 = vdwg.mxu0
    %v1630 = vrot.slane %v1626, 2
    %v1632 = vadd.f32 %v301, %v1630
    %v1633 = vtanh.pop %v1632
    %1634 = vmatprep.subr.mxu0 0.0
    %1635 = vmatpush1.msra.mxu0 0.0
    %1636 = vmatprep.subr.mxu0 0.0
    %1637 = vmatpush1.msra.mxu0 0.0
    %1638 = vmatprep.subr.mxu0 0.0
    %1639 = vmatpush1.msra.mxu0 0.0
    %1640 = vmatprep.subr.mxu0 0.0
    %1641 = vmatpush1.msra.mxu0 0.0
    %1642 = vmatprep.subr.mxu0 0.0
    %1643 = vmatpush1.msra.mxu0 0.0
    %1644 = vmatprep.subr.mxu0 0.0
    %1645 = vmatpush1.msra.mxu0 0.0
    %1646 = vmatprep.subr.mxu0 0.0
    %1647 = vmatpush1.msra.mxu0 0.0
    %1648 = vmatprep.subr.mxu0 0.0
    %1649 = vmatpush1.msra.mxu0 0.0
    %1650 = vmatprep.subr.mxu0 0.0
    %1651 = vmatpush1.msra.mxu0 %v659
    %1652 = vmatprep.subr.mxu0 0.0
    %1653 = vmatpush1.msra.mxu0 %v658
    %1654 = vmatprep.subr.mxu0 0.0
    %1655 = vmatpush1.msra.mxu0 %v657
    %1656 = vmatprep.subr.mxu0 0.0
    %1657 = vmatpush1.msra.mxu0 %v656
    %1658 = vmatprep.subr.mxu0 0.0
    %1659 = vmatpush1.msra.mxu0 %v655
    %1660 = vmatprep.subr.mxu0 0.0
    %1661 = vmatpush1.msra.mxu0 %v654
    %1662 = vmatprep.subr.mxu0 0.0
    %1663 = vmatpush1.msra.mxu0 %v653
    %1664 = vmatprep.subr.mxu0 0.0
    %1665 = vmatpush1.msra.mxu0 %v652
    %1666 = vmatprep.subr.mxu0 0.0
    %1667 = vmatpush2.msra.mxu0 0.0
    %1668 = vmatprep.subr.mxu0 0.0
    %1669 = vmatpush2.msra.mxu0 0.0
    %1670 = vmatprep.subr.mxu0 0.0
    %1671 = vmatpush2.msra.mxu0 0.0
    %1672 = vmatprep.subr.mxu0 0.0
    %1673 = vmatpush2.msra.mxu0 0.0
    %1674 = vmatprep.subr.mxu0 0.0
    %1675 = vmatpush2.msra.mxu0 0.0
    %1676 = vmatprep.subr.mxu0 0.0
    %1677 = vmatpush2.msra.mxu0 0.0
    %1678 = vmatprep.subr.mxu0 0.0
    %1679 = vmatpush2.msra.mxu0 0.0
    %1680 = vmatprep.subr.mxu0 0.0
    %1681 = vmatpush2.msra.mxu0 0.0
    %1682 = vmatprep.subr.mxu0 0.0
    %1683 = vmatpush2.msra.mxu0 0.0
    %1684 = vmatprep.subr.mxu0 0.0
    %1685 = vmatpush2.msra.mxu0 0.0
    %1686 = vmatprep.subr.mxu0 0.0
    %1687 = vmatpush2.msra.mxu0 0.0
    %1688 = vmatprep.subr.mxu0 0.0
    %1689 = vmatpush2.msra.mxu0 0.0
    %1690 = vmatprep.subr.mxu0 0.0
    %1691 = vmatpush2.msra.mxu0 0.0
    %1692 = vmatprep.subr.mxu0 0.0
    %1693 = vmatpush2.msra.mxu0 0.0
    %1694 = vmatprep.subr.mxu0 0.0
    %1695 = vmatpush2.msra.mxu0 0.0
    %1696 = vmatprep.subr.mxu0 0.0
    %1697 = vmatpush2.msra.mxu0 0.0
    %1698 = vmatprep.mubr.f32.mxu0 0.0
    %1699 = vmatmul.mubr.f32.gmra.mxu0 %v1397
    %v1700 = vpop.f32.mrf.mxu0
    %v1701 = vadd.f32 0.0, %v1700
    %v1702 = vpop.f32.mrf.mxu0
    %1703 = vdwg.mxu0
    %v1705 = vrot.slane %v1701, 2
    %v1707 = vadd.f32 %v387, %v1705
    %v1708 = vxor.u32 %v1707, 2147483648
    %v1709 = vmul.f32 %v1708, 1.442695
    %v1710 = vpow.pop %v1709
    %v1711 = vadd.f32 %v1710, 1.0
    %v1712 = vrcp.pop %v1711
    %v1713 = vmul.f32 1.0, %v1712
    %v1715 = vrot.slane %v1392, 6
    %v1717 = vmul.f32 %v1558, %v1715
    %v1718 = vmul.f32 %v1478, %v1633
    %v1719 = vadd.f32 %v1717, %v1718
    %v1720 = vtanh.pop %v1719
    %v1721 = vmul.f32 %v1713, %v1720
    %v1723 = vrot.slane %v1721, 6
    %v1724 = vsel %vm403, %v1723, 0
    %1726 = vmatprep.subr.mxu0 0.0
    %1727 = vmatpush1.msra.mxu0 0.0
    %1728 = vmatprep.subr.mxu0 0.0
    %1729 = vmatpush1.msra.mxu0 0.0
    %1730 = vmatprep.subr.mxu0 0.0
    %1731 = vmatpush1.msra.mxu0 0.0
    %1732 = vmatprep.subr.mxu0 0.0
    %1733 = vmatpush1.msra.mxu0 0.0
    %1734 = vmatprep.subr.mxu0 0.0
    %1735 = vmatpush1.msra.mxu0 0.0
    %1736 = vmatprep.subr.mxu0 0.0
    %1737 = vmatpush1.msra.mxu0 0.0
    %1738 = vmatprep.subr.mxu0 0.0
    %1739 = vmatpush1.msra.mxu0 0.0
    %1740 = vmatprep.subr.mxu0 0.0
    %1741 = vmatpush1.msra.mxu0 0.0
    %1742 = vmatprep.subr.mxu0 0.0
    %1743 = vmatpush1.msra.mxu0 %v402
    %1744 = vmatprep.subr.mxu0 0.0
    %1745 = vmatpush1.msra.mxu0 %v401
    %1746 = vmatprep.subr.mxu0 0.0
    %1747 = vmatpush1.msra.mxu0 %v400
    %1748 = vmatprep.subr.mxu0 0.0
    %1749 = vmatpush1.msra.mxu0 %v399
    %1750 = vmatprep.subr.mxu0 0.0
    %1751 = vmatpush1.msra.mxu0 %v398
    %1752 = vmatprep.subr.mxu0 0.0
    %1753 = vmatpush1.msra.mxu0 %v397
    %1754 = vmatprep.subr.mxu0 0.0
    %1755 = vmatpush1.msra.mxu0 %v396
    %1756 = vmatprep.subr.mxu0 0.0
    %1757 = vmatpush1.msra.mxu0 %v395
    %1758 = vmatprep.subr.mxu0 0.0
    %1759 = vmatpush2.msra.mxu0 0.0
    %1760 = vmatprep.subr.mxu0 0.0
    %1761 = vmatpush2.msra.mxu0 0.0
    %1762 = vmatprep.subr.mxu0 0.0
    %1763 = vmatpush2.msra.mxu0 0.0
    %1764 = vmatprep.subr.mxu0 0.0
    %1765 = vmatpush2.msra.mxu0 0.0
    %1766 = vmatprep.subr.mxu0 0.0
    %1767 = vmatpush2.msra.mxu0 0.0
    %1768 = vmatprep.subr.mxu0 0.0
    %1769 = vmatpush2.msra.mxu0 0.0
    %1770 = vmatprep.subr.mxu0 0.0
    %1771 = vmatpush2.msra.mxu0 0.0
    %1772 = vmatprep.subr.mxu0 0.0
    %1773 = vmatpush2.msra.mxu0 0.0
    %1774 = vmatprep.subr.mxu0 0.0
    %1775 = vmatpush2.msra.mxu0 0.0
    %1776 = vmatprep.subr.mxu0 0.0
    %1777 = vmatpush2.msra.mxu0 0.0
    %1778 = vmatprep.subr.mxu0 0.0
    %1779 = vmatpush2.msra.mxu0 0.0
    %1780 = vmatprep.subr.mxu0 0.0
    %1781 = vmatpush2.msra.mxu0 0.0
    %1782 = vmatprep.subr.mxu0 0.0
    %1783 = vmatpush2.msra.mxu0 0.0
    %1784 = vmatprep.subr.mxu0 0.0
    %1785 = vmatpush2.msra.mxu0 0.0
    %1786 = vmatprep.subr.mxu0 0.0
    %1787 = vmatpush2.msra.mxu0 0.0
    %1788 = vmatprep.subr.mxu0 0.0
    %1789 = vmatpush2.msra.mxu0 0.0
    %1790 = vmatprep.mubr.f32.mxu0 0.0
    %1791 = vmatmul.mubr.f32.gmra.mxu0 %v1724
    %v1792 = vpop.f32.mrf.mxu0
    %v1793 = vadd.f32 0.0, %v1792
    %v1794 = vpop.f32.mrf.mxu0
    %1795 = vdwg.mxu0
    %v1796 = vadd.f32 %v134, %v1793
    %v1797 = vxor.u32 %v1796, 2147483648
    %v1798 = vmul.f32 %v1797, 1.442695
    %v1799 = vpow.pop %v1798
    %v1800 = vadd.f32 %v1799, 1.0
    %v1801 = vrcp.pop %v1800
    %v1802 = vmul.f32 1.0, %v1801
    %1803 = vmatprep.subr.mxu0 0.0
    %1804 = vmatpush1.msra.mxu0 0.0
    %1805 = vmatprep.subr.mxu0 0.0
    %1806 = vmatpush1.msra.mxu0 0.0
    %1807 = vmatprep.subr.mxu0 0.0
    %1808 = vmatpush1.msra.mxu0 0.0
    %1809 = vmatprep.subr.mxu0 0.0
    %1810 = vmatpush1.msra.mxu0 0.0
    %1811 = vmatprep.subr.mxu0 0.0
    %1812 = vmatpush1.msra.mxu0 0.0
    %1813 = vmatprep.subr.mxu0 0.0
    %1814 = vmatpush1.msra.mxu0 0.0
    %1815 = vmatprep.subr.mxu0 0.0
    %1816 = vmatpush1.msra.mxu0 0.0
    %1817 = vmatprep.subr.mxu0 0.0
    %1818 = vmatpush1.msra.mxu0 0.0
    %1819 = vmatprep.subr.mxu0 0.0
    %1820 = vmatpush1.msra.mxu0 %v492
    %1821 = vmatprep.subr.mxu0 0.0
    %1822 = vmatpush1.msra.mxu0 %v491
    %1823 = vmatprep.subr.mxu0 0.0
    %1824 = vmatpush1.msra.mxu0 %v490
    %1825 = vmatprep.subr.mxu0 0.0
    %1826 = vmatpush1.msra.mxu0 %v489
    %1827 = vmatprep.subr.mxu0 0.0
    %1828 = vmatpush1.msra.mxu0 %v488
    %1829 = vmatprep.subr.mxu0 0.0
    %1830 = vmatpush1.msra.mxu0 %v487
    %1831 = vmatprep.subr.mxu0 0.0
    %1832 = vmatpush1.msra.mxu0 %v486
    %1833 = vmatprep.subr.mxu0 0.0
    %1834 = vmatpush1.msra.mxu0 %v485
    %1835 = vmatprep.subr.mxu0 0.0
    %1836 = vmatpush2.msra.mxu0 0.0
    %1837 = vmatprep.subr.mxu0 0.0
    %1838 = vmatpush2.msra.mxu0 0.0
    %1839 = vmatprep.subr.mxu0 0.0
    %1840 = vmatpush2.msra.mxu0 0.0
    %1841 = vmatprep.subr.mxu0 0.0
    %1842 = vmatpush2.msra.mxu0 0.0
    %1843 = vmatprep.subr.mxu0 0.0
    %1844 = vmatpush2.msra.mxu0 0.0
    %1845 = vmatprep.subr.mxu0 0.0
    %1846 = vmatpush2.msra.mxu0 0.0
    %1847 = vmatprep.subr.mxu0 0.0
    %1848 = vmatpush2.msra.mxu0 0.0
    %1849 = vmatprep.subr.mxu0 0.0
    %1850 = vmatpush2.msra.mxu0 0.0
    %1851 = vmatprep.subr.mxu0 0.0
    %1852 = vmatpush2.msra.mxu0 0.0
    %1853 = vmatprep.subr.mxu0 0.0
    %1854 = vmatpush2.msra.mxu0 0.0
    %1855 = vmatprep.subr.mxu0 0.0
    %1856 = vmatpush2.msra.mxu0 0.0
    %1857 = vmatprep.subr.mxu0 0.0
    %1858 = vmatpush2.msra.mxu0 0.0
    %1859 = vmatprep.subr.mxu0 0.0
    %1860 = vmatpush2.msra.mxu0 0.0
    %1861 = vmatprep.subr.mxu0 0.0
    %1862 = vmatpush2.msra.mxu0 0.0
    %1863 = vmatprep.subr.mxu0 0.0
    %1864 = vmatpush2.msra.mxu0 0.0
    %1865 = vmatprep.subr.mxu0 0.0
    %1866 = vmatpush2.msra.mxu0 0.0
    %1867 = vmatprep.mubr.f32.mxu0 0.0
    %1868 = vmatmul.mubr.f32.gmra.mxu0 %v1724
    %v1869 = vpop.f32.mrf.mxu0
    %v1870 = vadd.f32 0.0, %v1869
    %v1871 = vpop.f32.mrf.mxu0
    %1872 = vdwg.mxu0
    %v1873 = vadd.f32 %v220, %v1870
    %v1874 = vxor.u32 %v1873, 2147483648
    %v1875 = vmul.f32 %v1874, 1.442695
    %v1876 = vpow.pop %v1875
    %v1877 = vadd.f32 %v1876, 1.0
    %v1878 = vrcp.pop %v1877
    %v1879 = vmul.f32 1.0, %v1878
    %1880 = vmatprep.subr.mxu0 0.0
    %1881 = vmatpush1.msra.mxu0 0.0
    %1882 = vmatprep.subr.mxu0 0.0
    %1883 = vmatpush1.msra.mxu0 0.0
    %1884 = vmatprep.subr.mxu0 0.0
    %1885 = vmatpush1.msra.mxu0 0.0
    %1886 = vmatprep.subr.mxu0 0.0
    %1887 = vmatpush1.msra.mxu0 0.0
    %1888 = vmatprep.subr.mxu0 0.0
    %1889 = vmatpush1.msra.mxu0 0.0
    %1890 = vmatprep.subr.mxu0 0.0
    %1891 = vmatpush1.msra.mxu0 0.0
    %1892 = vmatprep.subr.mxu0 0.0
    %1893 = vmatpush1.msra.mxu0 0.0
    %1894 = vmatprep.subr.mxu0 0.0
    %1895 = vmatpush1.msra.mxu0 0.0
    %1896 = vmatprep.subr.mxu0 0.0
    %1897 = vmatpush1.msra.mxu0 %v578
    %1898 = vmatprep.subr.mxu0 0.0
    %1899 = vmatpush1.msra.mxu0 %v577
    %1900 = vmatprep.subr.mxu0 0.0
    %1901 = vmatpush1.msra.mxu0 %v576
    %1902 = vmatprep.subr.mxu0 0.0
    %1903 = vmatpush1.msra.mxu0 %v575
    %1904 = vmatprep.subr.mxu0 0.0
    %1905 = vmatpush1.msra.mxu0 %v574
    %1906 = vmatprep.subr.mxu0 0.0
    %1907 = vmatpush1.msra.mxu0 %v573
    %1908 = vmatprep.subr.mxu0 0.0
    %1909 = vmatpush1.msra.mxu0 %v572
    %1910 = vmatprep.subr.mxu0 0.0
    %1911 = vmatpush1.msra.mxu0 %v571
    %1912 = vmatprep.subr.mxu0 0.0
    %1913 = vmatpush2.msra.mxu0 0.0
    %1914 = vmatprep.subr.mxu0 0.0
    %1915 = vmatpush2.msra.mxu0 0.0
    %1916 = vmatprep.subr.mxu0 0.0
    %1917 = vmatpush2.msra.mxu0 0.0
    %1918 = vmatprep.subr.mxu0 0.0
    %1919 = vmatpush2.msra.mxu0 0.0
    %1920 = vmatprep.subr.mxu0 0.0
    %1921 = vmatpush2.msra.mxu0 0.0
    %1922 = vmatprep.subr.mxu0 0.0
    %1923 = vmatpush2.msra.mxu0 0.0
    %1924 = vmatprep.subr.mxu0 0.0
    %1925 = vmatpush2.msra.mxu0 0.0
    %1926 = vmatprep.subr.mxu0 0.0
    %1927 = vmatpush2.msra.mxu0 0.0
    %1928 = vmatprep.subr.mxu0 0.0
    %1929 = vmatpush2.msra.mxu0 0.0
    %1930 = vmatprep.subr.mxu0 0.0
    %1931 = vmatpush2.msra.mxu0 0.0
    %1932 = vmatprep.subr.mxu0 0.0
    %1933 = vmatpush2.msra.mxu0 0.0
    %1934 = vmatprep.subr.mxu0 0.0
    %1935 = vmatpush2.msra.mxu0 0.0
    %1936 = vmatprep.subr.mxu0 0.0
    %1937 = vmatpush2.msra.mxu0 0.0
    %1938 = vmatprep.subr.mxu0 0.0
    %1939 = vmatpush2.msra.mxu0 0.0
    %1940 = vmatprep.subr.mxu0 0.0
    %1941 = vmatpush2.msra.mxu0 0.0
    %1942 = vmatprep.subr.mxu0 0.0
    %1943 = vmatpush2.msra.mxu0 0.0
    %1944 = vmatprep.mubr.f32.mxu0 0.0
    %1945 = vmatmul.mubr.f32.gmra.mxu0 %v1724
    %v1946 = vpop.f32.mrf.mxu0
    %v1947 = vadd.f32 0.0, %v1946
    %v1948 = vpop.f32.mrf.mxu0
    %1949 = vdwg.mxu0
    %v1950 = vadd.f32 %v306, %v1947
    %v1951 = vtanh.pop %v1950
    %1952 = vmatprep.subr.mxu0 0.0
    %1953 = vmatpush1.msra.mxu0 0.0
    %1954 = vmatprep.subr.mxu0 0.0
    %1955 = vmatpush1.msra.mxu0 0.0
    %1956 = vmatprep.subr.mxu0 0.0
    %1957 = vmatpush1.msra.mxu0 0.0
    %1958 = vmatprep.subr.mxu0 0.0
    %1959 = vmatpush1.msra.mxu0 0.0
    %1960 = vmatprep.subr.mxu0 0.0
    %1961 = vmatpush1.msra.mxu0 0.0
    %1962 = vmatprep.subr.mxu0 0.0
    %1963 = vmatpush1.msra.mxu0 0.0
    %1964 = vmatprep.subr.mxu0 0.0
    %1965 = vmatpush1.msra.mxu0 0.0
    %1966 = vmatprep.subr.mxu0 0.0
    %1967 = vmatpush1.msra.mxu0 0.0
    %1968 = vmatprep.subr.mxu0 0.0
    %1969 = vmatpush1.msra.mxu0 %v659
    %1970 = vmatprep.subr.mxu0 0.0
    %1971 = vmatpush1.msra.mxu0 %v658
    %1972 = vmatprep.subr.mxu0 0.0
    %1973 = vmatpush1.msra.mxu0 %v657
    %1974 = vmatprep.subr.mxu0 0.0
    %1975 = vmatpush1.msra.mxu0 %v656
    %1976 = vmatprep.subr.mxu0 0.0
    %1977 = vmatpush1.msra.mxu0 %v655
    %1978 = vmatprep.subr.mxu0 0.0
    %1979 = vmatpush1.msra.mxu0 %v654
    %1980 = vmatprep.subr.mxu0 0.0
    %1981 = vmatpush1.msra.mxu0 %v653
    %1982 = vmatprep.subr.mxu0 0.0
    %1983 = vmatpush1.msra.mxu0 %v652
    %1984 = vmatprep.subr.mxu0 0.0
    %1985 = vmatpush2.msra.mxu0 0.0
    %1986 = vmatprep.subr.mxu0 0.0
    %1987 = vmatpush2.msra.mxu0 0.0
    %1988 = vmatprep.subr.mxu0 0.0
    %1989 = vmatpush2.msra.mxu0 0.0
    %1990 = vmatprep.subr.mxu0 0.0
    %1991 = vmatpush2.msra.mxu0 0.0
    %1992 = vmatprep.subr.mxu0 0.0
    %1993 = vmatpush2.msra.mxu0 0.0
    %1994 = vmatprep.subr.mxu0 0.0
    %1995 = vmatpush2.msra.mxu0 0.0
    %1996 = vmatprep.subr.mxu0 0.0
    %1997 = vmatpush2.msra.mxu0 0.0
    %1998 = vmatprep.subr.mxu0 0.0
    %1999 = vmatpush2.msra.mxu0 0.0
    %2000 = vmatprep.subr.mxu0 0.0
    %2001 = vmatpush2.msra.mxu0 0.0
    %2002 = vmatprep.subr.mxu0 0.0
    %2003 = vmatpush2.msra.mxu0 0.0
    %2004 = vmatprep.subr.mxu0 0.0
    %2005 = vmatpush2.msra.mxu0 0.0
    %2006 = vmatprep.subr.mxu0 0.0
    %2007 = vmatpush2.msra.mxu0 0.0
    %2008 = vmatprep.subr.mxu0 0.0
    %2009 = vmatpush2.msra.mxu0 0.0
    %2010 = vmatprep.subr.mxu0 0.0
    %2011 = vmatpush2.msra.mxu0 0.0
    %2012 = vmatprep.subr.mxu0 0.0
    %2013 = vmatpush2.msra.mxu0 0.0
    %2014 = vmatprep.subr.mxu0 0.0
    %2015 = vmatpush2.msra.mxu0 0.0
    %2016 = vmatprep.mubr.f32.mxu0 0.0
    %2017 = vmatmul.mubr.f32.gmra.mxu0 %v1724
    %v2018 = vpop.f32.mrf.mxu0
    %v2019 = vadd.f32 0.0, %v2018
    %v2020 = vpop.f32.mrf.mxu0
    %2021 = vdwg.mxu0
    %v2022 = vadd.f32 %v392, %v2019
    %v2023 = vxor.u32 %v2022, 2147483648
    %v2024 = vmul.f32 %v2023, 1.442695
    %v2025 = vpow.pop %v2024
    %v2026 = vadd.f32 %v2025, 1.0
    %v2027 = vrcp.pop %v2026
    %v2028 = vmul.f32 1.0, %v2027
    %v2030 = vrot.slane %v1719, 6
    %v2032 = vmul.f32 %v1879, %v2030
    %v2033 = vmul.f32 %v1802, %v1951
    %v2034 = vadd.f32 %v2032, %v2033
    %v2035 = vtanh.pop %v2034
    %v2036 = vmul.f32 %v2028, %v2035
    %v2038 = vsel %vm403, %v2036, 0
    %2040 = vmatprep.subr.mxu0 0.0
    %2041 = vmatpush1.msra.mxu0 0.0
    %2042 = vmatprep.subr.mxu0 0.0
    %2043 = vmatpush1.msra.mxu0 0.0
    %2044 = vmatprep.subr.mxu0 0.0
    %2045 = vmatpush1.msra.mxu0 0.0
    %2046 = vmatprep.subr.mxu0 0.0
    %2047 = vmatpush1.msra.mxu0 0.0
    %2048 = vmatprep.subr.mxu0 0.0
    %2049 = vmatpush1.msra.mxu0 0.0
    %2050 = vmatprep.subr.mxu0 0.0
    %2051 = vmatpush1.msra.mxu0 0.0
    %2052 = vmatprep.subr.mxu0 0.0
    %2053 = vmatpush1.msra.mxu0 0.0
    %2054 = vmatprep.subr.mxu0 0.0
    %2055 = vmatpush1.msra.mxu0 0.0
    %2056 = vmatprep.subr.mxu0 0.0
    %2057 = vmatpush1.msra.mxu0 %v402
    %2058 = vmatprep.subr.mxu0 0.0
    %2059 = vmatpush1.msra.mxu0 %v401
    %2060 = vmatprep.subr.mxu0 0.0
    %2061 = vmatpush1.msra.mxu0 %v400
    %2062 = vmatprep.subr.mxu0 0.0
    %2063 = vmatpush1.msra.mxu0 %v399
    %2064 = vmatprep.subr.mxu0 0.0
    %2065 = vmatpush1.msra.mxu0 %v398
    %2066 = vmatprep.subr.mxu0 0.0
    %2067 = vmatpush1.msra.mxu0 %v397
    %2068 = vmatprep.subr.mxu0 0.0
    %2069 = vmatpush1.msra.mxu0 %v396
    %2070 = vmatprep.subr.mxu0 0.0
    %2071 = vmatpush1.msra.mxu0 %v395
    %2072 = vmatprep.subr.mxu0 0.0
    %2073 = vmatpush2.msra.mxu0 0.0
    %2074 = vmatprep.subr.mxu0 0.0
    %2075 = vmatpush2.msra.mxu0 0.0
    %2076 = vmatprep.subr.mxu0 0.0
    %2077 = vmatpush2.msra.mxu0 0.0
    %2078 = vmatprep.subr.mxu0 0.0
    %2079 = vmatpush2.msra.mxu0 0.0
    %2080 = vmatprep.subr.mxu0 0.0
    %2081 = vmatpush2.msra.mxu0 0.0
    %2082 = vmatprep.subr.mxu0 0.0
    %2083 = vmatpush2.msra.mxu0 0.0
    %2084 = vmatprep.subr.mxu0 0.0
    %2085 = vmatpush2.msra.mxu0 0.0
    %2086 = vmatprep.subr.mxu0 0.0
    %2087 = vmatpush2.msra.mxu0 0.0
    %2088 = vmatprep.subr.mxu0 0.0
    %2089 = vmatpush2.msra.mxu0 0.0
    %2090 = vmatprep.subr.mxu0 0.0
    %2091 = vmatpush2.msra.mxu0 0.0
    %2092 = vmatprep.subr.mxu0 0.0
    %2093 = vmatpush2.msra.mxu0 0.0
    %2094 = vmatprep.subr.mxu0 0.0
    %2095 = vmatpush2.msra.mxu0 0.0
    %2096 = vmatprep.subr.mxu0 0.0
    %2097 = vmatpush2.msra.mxu0 0.0
    %2098 = vmatprep.subr.mxu0 0.0
    %2099 = vmatpush2.msra.mxu0 0.0
    %2100 = vmatprep.subr.mxu0 0.0
    %2101 = vmatpush2.msra.mxu0 0.0
    %2102 = vmatprep.subr.mxu0 0.0
    %2103 = vmatpush2.msra.mxu0 0.0
    %2104 = vmatprep.mubr.f32.mxu0 0.0
    %2105 = vmatmul.mubr.f32.gmra.mxu0 %v2038
    %v2106 = vpop.f32.mrf.mxu0
    %v2107 = vadd.f32 0.0, %v2106
    %v2108 = vpop.f32.mrf.mxu0
    %2109 = vdwg.mxu0
    %v2111 = vrot.slane %v2107, 6
    %v2113 = vadd.f32 %v134, %v2111
    %v2114 = vxor.u32 %v2113, 2147483648
    %v2115 = vmul.f32 %v2114, 1.442695
    %v2116 = vpow.pop %v2115
    %v2117 = vadd.f32 %v2116, 1.0
    %v2118 = vrcp.pop %v2117
    %v2119 = vmul.f32 1.0, %v2118
    %2120 = vmatprep.subr.mxu0 0.0
    %2121 = vmatpush1.msra.mxu0 0.0
    %2122 = vmatprep.subr.mxu0 0.0
    %2123 = vmatpush1.msra.mxu0 0.0
    %2124 = vmatprep.subr.mxu0 0.0
    %2125 = vmatpush1.msra.mxu0 0.0
    %2126 = vmatprep.subr.mxu0 0.0
    %2127 = vmatpush1.msra.mxu0 0.0
    %2128 = vmatprep.subr.mxu0 0.0
    %2129 = vmatpush1.msra.mxu0 0.0
    %2130 = vmatprep.subr.mxu0 0.0
    %2131 = vmatpush1.msra.mxu0 0.0
    %2132 = vmatprep.subr.mxu0 0.0
    %2133 = vmatpush1.msra.mxu0 0.0
    %2134 = vmatprep.subr.mxu0 0.0
    %2135 = vmatpush1.msra.mxu0 0.0
    %2136 = vmatprep.subr.mxu0 0.0
    %2137 = vmatpush1.msra.mxu0 %v492
    %2138 = vmatprep.subr.mxu0 0.0
    %2139 = vmatpush1.msra.mxu0 %v491
    %2140 = vmatprep.subr.mxu0 0.0
    %2141 = vmatpush1.msra.mxu0 %v490
    %2142 = vmatprep.subr.mxu0 0.0
    %2143 = vmatpush1.msra.mxu0 %v489
    %2144 = vmatprep.subr.mxu0 0.0
    %2145 = vmatpush1.msra.mxu0 %v488
    %2146 = vmatprep.subr.mxu0 0.0
    %2147 = vmatpush1.msra.mxu0 %v487
    %2148 = vmatprep.subr.mxu0 0.0
    %2149 = vmatpush1.msra.mxu0 %v486
    %2150 = vmatprep.subr.mxu0 0.0
    %2151 = vmatpush1.msra.mxu0 %v485
    %2152 = vmatprep.subr.mxu0 0.0
    %2153 = vmatpush2.msra.mxu0 0.0
    %2154 = vmatprep.subr.mxu0 0.0
    %2155 = vmatpush2.msra.mxu0 0.0
    %2156 = vmatprep.subr.mxu0 0.0
    %2157 = vmatpush2.msra.mxu0 0.0
    %2158 = vmatprep.subr.mxu0 0.0
    %2159 = vmatpush2.msra.mxu0 0.0
    %2160 = vmatprep.subr.mxu0 0.0
    %2161 = vmatpush2.msra.mxu0 0.0
    %2162 = vmatprep.subr.mxu0 0.0
    %2163 = vmatpush2.msra.mxu0 0.0
    %2164 = vmatprep.subr.mxu0 0.0
    %2165 = vmatpush2.msra.mxu0 0.0
    %2166 = vmatprep.subr.mxu0 0.0
    %2167 = vmatpush2.msra.mxu0 0.0
    %2168 = vmatprep.subr.mxu0 0.0
    %2169 = vmatpush2.msra.mxu0 0.0
    %2170 = vmatprep.subr.mxu0 0.0
    %2171 = vmatpush2.msra.mxu0 0.0
    %2172 = vmatprep.subr.mxu0 0.0
    %2173 = vmatpush2.msra.mxu0 0.0
    %2174 = vmatprep.subr.mxu0 0.0
    %2175 = vmatpush2.msra.mxu0 0.0
    %2176 = vmatprep.subr.mxu0 0.0
    %2177 = vmatpush2.msra.mxu0 0.0
    %2178 = vmatprep.subr.mxu0 0.0
    %2179 = vmatpush2.msra.mxu0 0.0
    %2180 = vmatprep.subr.mxu0 0.0
    %2181 = vmatpush2.msra.mxu0 0.0
    %2182 = vmatprep.subr.mxu0 0.0
    %2183 = vmatpush2.msra.mxu0 0.0
    %2184 = vmatprep.mubr.f32.mxu0 0.0
    %2185 = vmatmul.mubr.f32.gmra.mxu0 %v2038
    %v2186 = vpop.f32.mrf.mxu0
    %v2187 = vadd.f32 0.0, %v2186
    %v2188 = vpop.f32.mrf.mxu0
    %2189 = vdwg.mxu0
    %v2191 = vrot.slane %v2187, 6
    %v2193 = vadd.f32 %v220, %v2191
    %v2194 = vxor.u32 %v2193, 2147483648
    %v2195 = vmul.f32 %v2194, 1.442695
    %v2196 = vpow.pop %v2195
    %v2197 = vadd.f32 %v2196, 1.0
    %v2198 = vrcp.pop %v2197
    %v2199 = vmul.f32 1.0, %v2198
    %2200 = vmatprep.subr.mxu0 0.0
    %2201 = vmatpush1.msra.mxu0 0.0
    %2202 = vmatprep.subr.mxu0 0.0
    %2203 = vmatpush1.msra.mxu0 0.0
    %2204 = vmatprep.subr.mxu0 0.0
    %2205 = vmatpush1.msra.mxu0 0.0
    %2206 = vmatprep.subr.mxu0 0.0
    %2207 = vmatpush1.msra.mxu0 0.0
    %2208 = vmatprep.subr.mxu0 0.0
    %2209 = vmatpush1.msra.mxu0 0.0
    %2210 = vmatprep.subr.mxu0 0.0
    %2211 = vmatpush1.msra.mxu0 0.0
    %2212 = vmatprep.subr.mxu0 0.0
    %2213 = vmatpush1.msra.mxu0 0.0
    %2214 = vmatprep.subr.mxu0 0.0
    %2215 = vmatpush1.msra.mxu0 0.0
    %2216 = vmatprep.subr.mxu0 0.0
    %2217 = vmatpush1.msra.mxu0 %v578
    %2218 = vmatprep.subr.mxu0 0.0
    %2219 = vmatpush1.msra.mxu0 %v577
    %2220 = vmatprep.subr.mxu0 0.0
    %2221 = vmatpush1.msra.mxu0 %v576
    %2222 = vmatprep.subr.mxu0 0.0
    %2223 = vmatpush1.msra.mxu0 %v575
    %2224 = vmatprep.subr.mxu0 0.0
    %2225 = vmatpush1.msra.mxu0 %v574
    %2226 = vmatprep.subr.mxu0 0.0
    %2227 = vmatpush1.msra.mxu0 %v573
    %2228 = vmatprep.subr.mxu0 0.0
    %2229 = vmatpush1.msra.mxu0 %v572
    %2230 = vmatprep.subr.mxu0 0.0
    %2231 = vmatpush1.msra.mxu0 %v571
    %2232 = vmatprep.subr.mxu0 0.0
    %2233 = vmatpush2.msra.mxu0 0.0
    %2234 = vmatprep.subr.mxu0 0.0
    %2235 = vmatpush2.msra.mxu0 0.0
    %2236 = vmatprep.subr.mxu0 0.0
    %2237 = vmatpush2.msra.mxu0 0.0
    %2238 = vmatprep.subr.mxu0 0.0
    %2239 = vmatpush2.msra.mxu0 0.0
    %2240 = vmatprep.subr.mxu0 0.0
    %2241 = vmatpush2.msra.mxu0 0.0
    %2242 = vmatprep.subr.mxu0 0.0
    %2243 = vmatpush2.msra.mxu0 0.0
    %2244 = vmatprep.subr.mxu0 0.0
    %2245 = vmatpush2.msra.mxu0 0.0
    %2246 = vmatprep.subr.mxu0 0.0
    %2247 = vmatpush2.msra.mxu0 0.0
    %2248 = vmatprep.subr.mxu0 0.0
    %2249 = vmatpush2.msra.mxu0 0.0
    %2250 = vmatprep.subr.mxu0 0.0
    %2251 = vmatpush2.msra.mxu0 0.0
    %2252 = vmatprep.subr.mxu0 0.0
    %2253 = vmatpush2.msra.mxu0 0.0
    %2254 = vmatprep.subr.mxu0 0.0
    %2255 = vmatpush2.msra.mxu0 0.0
    %2256 = vmatprep.subr.mxu0 0.0
    %2257 = vmatpush2.msra.mxu0 0.0
    %2258 = vmatprep.subr.mxu0 0.0
    %2259 = vmatpush2.msra.mxu0 0.0
    %2260 = vmatprep.subr.mxu0 0.0
    %2261 = vmatpush2.msra.mxu0 0.0
    %2262 = vmatprep.subr.mxu0 0.0
    %2263 = vmatpush2.msra.mxu0 0.0
    %2264 = vmatprep.mubr.f32.mxu0 0.0
    %2265 = vmatmul.mubr.f32.gmra.mxu0 %v2038
    %v2266 = vpop.f32.mrf.mxu0
    %v2267 = vadd.f32 0.0, %v2266
    %v2268 = vpop.f32.mrf.mxu0
    %2269 = vdwg.mxu0
    %v2271 = vrot.slane %v2267, 6
    %v2273 = vadd.f32 %v306, %v2271
    %v2274 = vtanh.pop %v2273
    %2275 = vmatprep.subr.mxu0 0.0
    %2276 = vmatpush1.msra.mxu0 0.0
    %2277 = vmatprep.subr.mxu0 0.0
    %2278 = vmatpush1.msra.mxu0 0.0
    %2279 = vmatprep.subr.mxu0 0.0
    %2280 = vmatpush1.msra.mxu0 0.0
    %2281 = vmatprep.subr.mxu0 0.0
    %2282 = vmatpush1.msra.mxu0 0.0
    %2283 = vmatprep.subr.mxu0 0.0
    %2284 = vmatpush1.msra.mxu0 0.0
    %2285 = vmatprep.subr.mxu0 0.0
    %2286 = vmatpush1.msra.mxu0 0.0
    %2287 = vmatprep.subr.mxu0 0.0
    %2288 = vmatpush1.msra.mxu0 0.0
    %2289 = vmatprep.subr.mxu0 0.0
    %2290 = vmatpush1.msra.mxu0 0.0
    %2291 = vmatprep.subr.mxu0 0.0
    %2292 = vmatpush1.msra.mxu0 %v659
    %2293 = vmatprep.subr.mxu0 0.0
    %2294 = vmatpush1.msra.mxu0 %v658
    %2295 = vmatprep.subr.mxu0 0.0
    %2296 = vmatpush1.msra.mxu0 %v657
    %2297 = vmatprep.subr.mxu0 0.0
    %2298 = vmatpush1.msra.mxu0 %v656
    %2299 = vmatprep.subr.mxu0 0.0
    %2300 = vmatpush1.msra.mxu0 %v655
    %2301 = vmatprep.subr.mxu0 0.0
    %2302 = vmatpush1.msra.mxu0 %v654
    %2303 = vmatprep.subr.mxu0 0.0
    %2304 = vmatpush1.msra.mxu0 %v653
    %2305 = vmatprep.subr.mxu0 0.0
    %2306 = vmatpush1.msra.mxu0 %v652
    %2307 = vmatprep.subr.mxu0 0.0
    %2308 = vmatpush2.msra.mxu0 0.0
    %2309 = vmatprep.subr.mxu0 0.0
    %2310 = vmatpush2.msra.mxu0 0.0
    %2311 = vmatprep.subr.mxu0 0.0
    %2312 = vmatpush2.msra.mxu0 0.0
    %2313 = vmatprep.subr.mxu0 0.0
    %2314 = vmatpush2.msra.mxu0 0.0
    %2315 = vmatprep.subr.mxu0 0.0
    %2316 = vmatpush2.msra.mxu0 0.0
    %2317 = vmatprep.subr.mxu0 0.0
    %2318 = vmatpush2.msra.mxu0 0.0
    %2319 = vmatprep.subr.mxu0 0.0
    %2320 = vmatpush2.msra.mxu0 0.0
    %2321 = vmatprep.subr.mxu0 0.0
    %2322 = vmatpush2.msra.mxu0 0.0
    %2323 = vmatprep.subr.mxu0 0.0
    %2324 = vmatpush2.msra.mxu0 0.0
    %2325 = vmatprep.subr.mxu0 0.0
    %2326 = vmatpush2.msra.mxu0 0.0
    %2327 = vmatprep.subr.mxu0 0.0
    %2328 = vmatpush2.msra.mxu0 0.0
    %2329 = vmatprep.subr.mxu0 0.0
    %2330 = vmatpush2.msra.mxu0 0.0
    %2331 = vmatprep.subr.mxu0 0.0
    %2332 = vmatpush2.msra.mxu0 0.0
    %2333 = vmatprep.subr.mxu0 0.0
    %2334 = vmatpush2.msra.mxu0 0.0
    %2335 = vmatprep.subr.mxu0 0.0
    %2336 = vmatpush2.msra.mxu0 0.0
    %2337 = vmatprep.subr.mxu0 0.0
    %2338 = vmatpush2.msra.mxu0 0.0
    %2339 = vmatprep.mubr.f32.mxu0 0.0
    %2340 = vmatmul.mubr.f32.gmra.mxu0 %v2038
    %v2341 = vpop.f32.mrf.mxu0
    %v2342 = vadd.f32 0.0, %v2341
    %v2343 = vpop.f32.mrf.mxu0
    %2344 = vdwg.mxu0
    %v2346 = vrot.slane %v2342, 6
    %v2348 = vadd.f32 %v392, %v2346
    %v2349 = vxor.u32 %v2348, 2147483648
    %v2350 = vmul.f32 %v2349, 1.442695
    %v2351 = vpow.pop %v2350
    %v2352 = vadd.f32 %v2351, 1.0
    %v2353 = vrcp.pop %v2352
    %v2354 = vmul.f32 1.0, %v2353
    %v2356 = vrot.slane %v2034, 6
    %v2358 = vmul.f32 %v2199, %v2356
    %v2359 = vmul.f32 %v2119, %v2274
    %v2360 = vadd.f32 %v2358, %v2359
    %v2361 = vtanh.pop %v2360
    %v2362 = vmul.f32 %v2354, %v2361
    %v2364 = vrot.slane %v2362, 2
    %v2365 = vsel %vm403, %v2364, 0
    %2367 = vmatprep.subr.mxu0 0.0
    %2368 = vmatpush1.msra.mxu0 0.0
    %2369 = vmatprep.subr.mxu0 0.0
    %2370 = vmatpush1.msra.mxu0 0.0
    %2371 = vmatprep.subr.mxu0 0.0
    %2372 = vmatpush1.msra.mxu0 0.0
    %2373 = vmatprep.subr.mxu0 0.0
    %2374 = vmatpush1.msra.mxu0 0.0
    %2375 = vmatprep.subr.mxu0 0.0
    %2376 = vmatpush1.msra.mxu0 0.0
    %2377 = vmatprep.subr.mxu0 0.0
    %2378 = vmatpush1.msra.mxu0 0.0
    %2379 = vmatprep.subr.mxu0 0.0
    %2380 = vmatpush1.msra.mxu0 0.0
    %2381 = vmatprep.subr.mxu0 0.0
    %2382 = vmatpush1.msra.mxu0 0.0
    %2383 = vmatprep.subr.mxu0 0.0
    %2384 = vmatpush1.msra.mxu0 %v402
    %2385 = vmatprep.subr.mxu0 0.0
    %2386 = vmatpush1.msra.mxu0 %v401
    %2387 = vmatprep.subr.mxu0 0.0
    %2388 = vmatpush1.msra.mxu0 %v400
    %2389 = vmatprep.subr.mxu0 0.0
    %2390 = vmatpush1.msra.mxu0 %v399
    %2391 = vmatprep.subr.mxu0 0.0
    %2392 = vmatpush1.msra.mxu0 %v398
    %2393 = vmatprep.subr.mxu0 0.0
    %2394 = vmatpush1.msra.mxu0 %v397
    %2395 = vmatprep.subr.mxu0 0.0
    %2396 = vmatpush1.msra.mxu0 %v396
    %2397 = vmatprep.subr.mxu0 0.0
    %2398 = vmatpush1.msra.mxu0 %v395
    %2399 = vmatprep.subr.mxu0 0.0
    %2400 = vmatpush2.msra.mxu0 0.0
    %2401 = vmatprep.subr.mxu0 0.0
    %2402 = vmatpush2.msra.mxu0 0.0
    %2403 = vmatprep.subr.mxu0 0.0
    %2404 = vmatpush2.msra.mxu0 0.0
    %2405 = vmatprep.subr.mxu0 0.0
    %2406 = vmatpush2.msra.mxu0 0.0
    %2407 = vmatprep.subr.mxu0 0.0
    %2408 = vmatpush2.msra.mxu0 0.0
    %2409 = vmatprep.subr.mxu0 0.0
    %2410 = vmatpush2.msra.mxu0 0.0
    %2411 = vmatprep.subr.mxu0 0.0
    %2412 = vmatpush2.msra.mxu0 0.0
    %2413 = vmatprep.subr.mxu0 0.0
    %2414 = vmatpush2.msra.mxu0 0.0
    %2415 = vmatprep.subr.mxu0 0.0
    %2416 = vmatpush2.msra.mxu0 0.0
    %2417 = vmatprep.subr.mxu0 0.0
    %2418 = vmatpush2.msra.mxu0 0.0
    %2419 = vmatprep.subr.mxu0 0.0
    %2420 = vmatpush2.msra.mxu0 0.0
    %2421 = vmatprep.subr.mxu0 0.0
    %2422 = vmatpush2.msra.mxu0 0.0
    %2423 = vmatprep.subr.mxu0 0.0
    %2424 = vmatpush2.msra.mxu0 0.0
    %2425 = vmatprep.subr.mxu0 0.0
    %2426 = vmatpush2.msra.mxu0 0.0
    %2427 = vmatprep.subr.mxu0 0.0
    %2428 = vmatpush2.msra.mxu0 0.0
    %2429 = vmatprep.subr.mxu0 0.0
    %2430 = vmatpush2.msra.mxu0 0.0
    %2431 = vmatprep.mubr.f32.mxu0 0.0
    %2432 = vmatmul.mubr.f32.gmra.mxu0 %v2365
    %v2433 = vpop.f32.mrf.mxu0
    %v2434 = vadd.f32 0.0, %v2433
    %v2435 = vpop.f32.mrf.mxu0
    %2436 = vdwg.mxu0
    %v2438 = vrot.slane %v2434, 4
    %v2440 = vadd.f32 %v134, %v2438
    %v2441 = vxor.u32 %v2440, 2147483648
    %v2442 = vmul.f32 %v2441, 1.442695
    %v2443 = vpow.pop %v2442
    %v2444 = vadd.f32 %v2443, 1.0
    %v2445 = vrcp.pop %v2444
    %v2446 = vmul.f32 1.0, %v2445
    %2447 = vmatprep.subr.mxu0 0.0
    %2448 = vmatpush1.msra.mxu0 0.0
    %2449 = vmatprep.subr.mxu0 0.0
    %2450 = vmatpush1.msra.mxu0 0.0
    %2451 = vmatprep.subr.mxu0 0.0
    %2452 = vmatpush1.msra.mxu0 0.0
    %2453 = vmatprep.subr.mxu0 0.0
    %2454 = vmatpush1.msra.mxu0 0.0
    %2455 = vmatprep.subr.mxu0 0.0
    %2456 = vmatpush1.msra.mxu0 0.0
    %2457 = vmatprep.subr.mxu0 0.0
    %2458 = vmatpush1.msra.mxu0 0.0
    %2459 = vmatprep.subr.mxu0 0.0
    %2460 = vmatpush1.msra.mxu0 0.0
    %2461 = vmatprep.subr.mxu0 0.0
    %2462 = vmatpush1.msra.mxu0 0.0
    %2463 = vmatprep.subr.mxu0 0.0
    %2464 = vmatpush1.msra.mxu0 %v492
    %2465 = vmatprep.subr.mxu0 0.0
    %2466 = vmatpush1.msra.mxu0 %v491
    %2467 = vmatprep.subr.mxu0 0.0
    %2468 = vmatpush1.msra.mxu0 %v490
    %2469 = vmatprep.subr.mxu0 0.0
    %2470 = vmatpush1.msra.mxu0 %v489
    %2471 = vmatprep.subr.mxu0 0.0
    %2472 = vmatpush1.msra.mxu0 %v488
    %2473 = vmatprep.subr.mxu0 0.0
    %2474 = vmatpush1.msra.mxu0 %v487
    %2475 = vmatprep.subr.mxu0 0.0
    %2476 = vmatpush1.msra.mxu0 %v486
    %2477 = vmatprep.subr.mxu0 0.0
    %2478 = vmatpush1.msra.mxu0 %v485
    %2479 = vmatprep.subr.mxu0 0.0
    %2480 = vmatpush2.msra.mxu0 0.0
    %2481 = vmatprep.subr.mxu0 0.0
    %2482 = vmatpush2.msra.mxu0 0.0
    %2483 = vmatprep.subr.mxu0 0.0
    %2484 = vmatpush2.msra.mxu0 0.0
    %2485 = vmatprep.subr.mxu0 0.0
    %2486 = vmatpush2.msra.mxu0 0.0
    %2487 = vmatprep.subr.mxu0 0.0
    %2488 = vmatpush2.msra.mxu0 0.0
    %2489 = vmatprep.subr.mxu0 0.0
    %2490 = vmatpush2.msra.mxu0 0.0
    %2491 = vmatprep.subr.mxu0 0.0
    %2492 = vmatpush2.msra.mxu0 0.0
    %2493 = vmatprep.subr.mxu0 0.0
    %2494 = vmatpush2.msra.mxu0 0.0
    %2495 = vmatprep.subr.mxu0 0.0
    %2496 = vmatpush2.msra.mxu0 0.0
    %2497 = vmatprep.subr.mxu0 0.0
    %2498 = vmatpush2.msra.mxu0 0.0
    %2499 = vmatprep.subr.mxu0 0.0
    %2500 = vmatpush2.msra.mxu0 0.0
    %2501 = vmatprep.subr.mxu0 0.0
    %2502 = vmatpush2.msra.mxu0 0.0
    %2503 = vmatprep.subr.mxu0 0.0
    %2504 = vmatpush2.msra.mxu0 0.0
    %2505 = vmatprep.subr.mxu0 0.0
    %2506 = vmatpush2.msra.mxu0 0.0
    %2507 = vmatprep.subr.mxu0 0.0
    %2508 = vmatpush2.msra.mxu0 0.0
    %2509 = vmatprep.subr.mxu0 0.0
    %2510 = vmatpush2.msra.mxu0 0.0
    %2511 = vmatprep.mubr.f32.mxu0 0.0
    %2512 = vmatmul.mubr.f32.gmra.mxu0 %v2365
    %v2513 = vpop.f32.mrf.mxu0
    %v2514 = vadd.f32 0.0, %v2513
    %v2515 = vpop.f32.mrf.mxu0
    %2516 = vdwg.mxu0
    %v2518 = vrot.slane %v2514, 4
    %v2520 = vadd.f32 %v220, %v2518
    %v2521 = vxor.u32 %v2520, 2147483648
    %v2522 = vmul.f32 %v2521, 1.442695
    %v2523 = vpow.pop %v2522
    %v2524 = vadd.f32 %v2523, 1.0
    %v2525 = vrcp.pop %v2524
    %v2526 = vmul.f32 1.0, %v2525
    %2527 = vmatprep.subr.mxu0 0.0
    %2528 = vmatpush1.msra.mxu0 0.0
    %2529 = vmatprep.subr.mxu0 0.0
    %2530 = vmatpush1.msra.mxu0 0.0
    %2531 = vmatprep.subr.mxu0 0.0
    %2532 = vmatpush1.msra.mxu0 0.0
    %2533 = vmatprep.subr.mxu0 0.0
    %2534 = vmatpush1.msra.mxu0 0.0
    %2535 = vmatprep.subr.mxu0 0.0
    %2536 = vmatpush1.msra.mxu0 0.0
    %2537 = vmatprep.subr.mxu0 0.0
    %2538 = vmatpush1.msra.mxu0 0.0
    %2539 = vmatprep.subr.mxu0 0.0
    %2540 = vmatpush1.msra.mxu0 0.0
    %2541 = vmatprep.subr.mxu0 0.0
    %2542 = vmatpush1.msra.mxu0 0.0
    %2543 = vmatprep.subr.mxu0 0.0
    %2544 = vmatpush1.msra.mxu0 %v578
    %2545 = vmatprep.subr.mxu0 0.0
    %2546 = vmatpush1.msra.mxu0 %v577
    %2547 = vmatprep.subr.mxu0 0.0
    %2548 = vmatpush1.msra.mxu0 %v576
    %2549 = vmatprep.subr.mxu0 0.0
    %2550 = vmatpush1.msra.mxu0 %v575
    %2551 = vmatprep.subr.mxu0 0.0
    %2552 = vmatpush1.msra.mxu0 %v574
    %2553 = vmatprep.subr.mxu0 0.0
    %2554 = vmatpush1.msra.mxu0 %v573
    %2555 = vmatprep.subr.mxu0 0.0
    %2556 = vmatpush1.msra.mxu0 %v572
    %2557 = vmatprep.subr.mxu0 0.0
    %2558 = vmatpush1.msra.mxu0 %v571
    %2559 = vmatprep.subr.mxu0 0.0
    %2560 = vmatpush2.msra.mxu0 0.0
    %2561 = vmatprep.subr.mxu0 0.0
    %2562 = vmatpush2.msra.mxu0 0.0
    %2563 = vmatprep.subr.mxu0 0.0
    %2564 = vmatpush2.msra.mxu0 0.0
    %2565 = vmatprep.subr.mxu0 0.0
    %2566 = vmatpush2.msra.mxu0 0.0
    %2567 = vmatprep.subr.mxu0 0.0
    %2568 = vmatpush2.msra.mxu0 0.0
    %2569 = vmatprep.subr.mxu0 0.0
    %2570 = vmatpush2.msra.mxu0 0.0
    %2571 = vmatprep.subr.mxu0 0.0
    %2572 = vmatpush2.msra.mxu0 0.0
    %2573 = vmatprep.subr.mxu0 0.0
    %2574 = vmatpush2.msra.mxu0 0.0
    %2575 = vmatprep.subr.mxu0 0.0
    %2576 = vmatpush2.msra.mxu0 0.0
    %2577 = vmatprep.subr.mxu0 0.0
    %2578 = vmatpush2.msra.mxu0 0.0
    %2579 = vmatprep.subr.mxu0 0.0
    %2580 = vmatpush2.msra.mxu0 0.0
    %2581 = vmatprep.subr.mxu0 0.0
    %2582 = vmatpush2.msra.mxu0 0.0
    %2583 = vmatprep.subr.mxu0 0.0
    %2584 = vmatpush2.msra.mxu0 0.0
    %2585 = vmatprep.subr.mxu0 0.0
    %2586 = vmatpush2.msra.mxu0 0.0
    %2587 = vmatprep.subr.mxu0 0.0
    %2588 = vmatpush2.msra.mxu0 0.0
    %2589 = vmatprep.subr.mxu0 0.0
    %2590 = vmatpush2.msra.mxu0 0.0
    %2591 = vmatprep.mubr.f32.mxu0 0.0
    %2592 = vmatmul.mubr.f32.gmra.mxu0 %v2365
    %v2593 = vpop.f32.mrf.mxu0
    %v2594 = vadd.f32 0.0, %v2593
    %v2595 = vpop.f32.mrf.mxu0
    %2596 = vdwg.mxu0
    %v2598 = vrot.slane %v2594, 4
    %v2600 = vadd.f32 %v306, %v2598
    %v2601 = vtanh.pop %v2600
    %2602 = vmatprep.subr.mxu0 0.0
    %2603 = vmatpush1.msra.mxu0 0.0
    %2604 = vmatprep.subr.mxu0 0.0
    %2605 = vmatpush1.msra.mxu0 0.0
    %2606 = vmatprep.subr.mxu0 0.0
    %2607 = vmatpush1.msra.mxu0 0.0
    %2608 = vmatprep.subr.mxu0 0.0
    %2609 = vmatpush1.msra.mxu0 0.0
    %2610 = vmatprep.subr.mxu0 0.0
    %2611 = vmatpush1.msra.mxu0 0.0
    %2612 = vmatprep.subr.mxu0 0.0
    %2613 = vmatpush1.msra.mxu0 0.0
    %2614 = vmatprep.subr.mxu0 0.0
    %2615 = vmatpush1.msra.mxu0 0.0
    %2616 = vmatprep.subr.mxu0 0.0
    %2617 = vmatpush1.msra.mxu0 0.0
    %2618 = vmatprep.subr.mxu0 0.0
    %2619 = vmatpush1.msra.mxu0 %v659
    %2620 = vmatprep.subr.mxu0 0.0
    %2621 = vmatpush1.msra.mxu0 %v658
    %2622 = vmatprep.subr.mxu0 0.0
    %2623 = vmatpush1.msra.mxu0 %v657
    %2624 = vmatprep.subr.mxu0 0.0
    %2625 = vmatpush1.msra.mxu0 %v656
    %2626 = vmatprep.subr.mxu0 0.0
    %2627 = vmatpush1.msra.mxu0 %v655
    %2628 = vmatprep.subr.mxu0 0.0
    %2629 = vmatpush1.msra.mxu0 %v654
    %2630 = vmatprep.subr.mxu0 0.0
    %2631 = vmatpush1.msra.mxu0 %v653
    %2632 = vmatprep.subr.mxu0 0.0
    %2633 = vmatpush1.msra.mxu0 %v652
    %2634 = vmatprep.subr.mxu0 0.0
    %2635 = vmatpush2.msra.mxu0 0.0
    %2636 = vmatprep.subr.mxu0 0.0
    %2637 = vmatpush2.msra.mxu0 0.0
    %2638 = vmatprep.subr.mxu0 0.0
    %2639 = vmatpush2.msra.mxu0 0.0
    %2640 = vmatprep.subr.mxu0 0.0
    %2641 = vmatpush2.msra.mxu0 0.0
    %2642 = vmatprep.subr.mxu0 0.0
    %2643 = vmatpush2.msra.mxu0 0.0
    %2644 = vmatprep.subr.mxu0 0.0
    %2645 = vmatpush2.msra.mxu0 0.0
    %2646 = vmatprep.subr.mxu0 0.0
    %2647 = vmatpush2.msra.mxu0 0.0
    %2648 = vmatprep.subr.mxu0 0.0
    %2649 = vmatpush2.msra.mxu0 0.0
    %2650 = vmatprep.subr.mxu0 0.0
    %2651 = vmatpush2.msra.mxu0 0.0
    %2652 = vmatprep.subr.mxu0 0.0
    %2653 = vmatpush2.msra.mxu0 0.0
    %2654 = vmatprep.subr.mxu0 0.0
    %2655 = vmatpush2.msra.mxu0 0.0
    %2656 = vmatprep.subr.mxu0 0.0
    %2657 = vmatpush2.msra.mxu0 0.0
    %2658 = vmatprep.subr.mxu0 0.0
    %2659 = vmatpush2.msra.mxu0 0.0
    %2660 = vmatprep.subr.mxu0 0.0
    %2661 = vmatpush2.msra.mxu0 0.0
    %2662 = vmatprep.subr.mxu0 0.0
    %2663 = vmatpush2.msra.mxu0 0.0
    %2664 = vmatprep.subr.mxu0 0.0
    %2665 = vmatpush2.msra.mxu0 0.0
    %2666 = vmatprep.mubr.f32.mxu0 0.0
    %2667 = vmatmul.mubr.f32.gmra.mxu0 %v2365
    %v2668 = vpop.f32.mrf.mxu0
    %v2669 = vadd.f32 0.0, %v2668
    %v2670 = vpop.f32.mrf.mxu0
    %2671 = vdwg.mxu0
    %v2673 = vrot.slane %v2669, 4
    %v2675 = vadd.f32 %v392, %v2673
    %v2676 = vxor.u32 %v2675, 2147483648
    %v2677 = vmul.f32 %v2676, 1.442695
    %v2678 = vpow.pop %v2677
    %v2679 = vadd.f32 %v2678, 1.0
    %v2680 = vrcp.pop %v2679
    %v2681 = vmul.f32 1.0, %v2680
    %v2683 = vrot.slane %v2360, 6
    %v2685 = vmul.f32 %v2526, %v2683
    %v2686 = vmul.f32 %v2446, %v2601
    %v2687 = vadd.f32 %v2685, %v2686
    %v2688 = vtanh.pop %v2687
    %v2689 = vmul.f32 %v2681, %v2688
    %v2691 = vrot.slane %v2689, 4
    %v2692 = vsel %vm403, %v2691, 0
    %2694 = vmatprep.subr.mxu0 0.0
    %2695 = vmatpush1.msra.mxu0 0.0
    %2696 = vmatprep.subr.mxu0 0.0
    %2697 = vmatpush1.msra.mxu0 0.0
    %2698 = vmatprep.subr.mxu0 0.0
    %2699 = vmatpush1.msra.mxu0 0.0
    %2700 = vmatprep.subr.mxu0 0.0
    %2701 = vmatpush1.msra.mxu0 0.0
    %2702 = vmatprep.subr.mxu0 0.0
    %2703 = vmatpush1.msra.mxu0 0.0
    %2704 = vmatprep.subr.mxu0 0.0
    %2705 = vmatpush1.msra.mxu0 0.0
    %2706 = vmatprep.subr.mxu0 0.0
    %2707 = vmatpush1.msra.mxu0 0.0
    %2708 = vmatprep.subr.mxu0 0.0
    %2709 = vmatpush1.msra.mxu0 0.0
    %2710 = vmatprep.subr.mxu0 0.0
    %2711 = vmatpush1.msra.mxu0 %v402
    %2712 = vmatprep.subr.mxu0 0.0
    %2713 = vmatpush1.msra.mxu0 %v401
    %2714 = vmatprep.subr.mxu0 0.0
    %2715 = vmatpush1.msra.mxu0 %v400
    %2716 = vmatprep.subr.mxu0 0.0
    %2717 = vmatpush1.msra.mxu0 %v399
    %2718 = vmatprep.subr.mxu0 0.0
    %2719 = vmatpush1.msra.mxu0 %v398
    %2720 = vmatprep.subr.mxu0 0.0
    %2721 = vmatpush1.msra.mxu0 %v397
    %2722 = vmatprep.subr.mxu0 0.0
    %2723 = vmatpush1.msra.mxu0 %v396
    %2724 = vmatprep.subr.mxu0 0.0
    %2725 = vmatpush1.msra.mxu0 %v395
    %2726 = vmatprep.subr.mxu0 0.0
    %2727 = vmatpush2.msra.mxu0 0.0
    %2728 = vmatprep.subr.mxu0 0.0
    %2729 = vmatpush2.msra.mxu0 0.0
    %2730 = vmatprep.subr.mxu0 0.0
    %2731 = vmatpush2.msra.mxu0 0.0
    %2732 = vmatprep.subr.mxu0 0.0
    %2733 = vmatpush2.msra.mxu0 0.0
    %2734 = vmatprep.subr.mxu0 0.0
    %2735 = vmatpush2.msra.mxu0 0.0
    %2736 = vmatprep.subr.mxu0 0.0
    %2737 = vmatpush2.msra.mxu0 0.0
    %2738 = vmatprep.subr.mxu0 0.0
    %2739 = vmatpush2.msra.mxu0 0.0
    %2740 = vmatprep.subr.mxu0 0.0
    %2741 = vmatpush2.msra.mxu0 0.0
    %2742 = vmatprep.subr.mxu0 0.0
    %2743 = vmatpush2.msra.mxu0 0.0
    %2744 = vmatprep.subr.mxu0 0.0
    %2745 = vmatpush2.msra.mxu0 0.0
    %2746 = vmatprep.subr.mxu0 0.0
    %2747 = vmatpush2.msra.mxu0 0.0
    %2748 = vmatprep.subr.mxu0 0.0
    %2749 = vmatpush2.msra.mxu0 0.0
    %2750 = vmatprep.subr.mxu0 0.0
    %2751 = vmatpush2.msra.mxu0 0.0
    %2752 = vmatprep.subr.mxu0 0.0
    %2753 = vmatpush2.msra.mxu0 0.0
    %2754 = vmatprep.subr.mxu0 0.0
    %2755 = vmatpush2.msra.mxu0 0.0
    %2756 = vmatprep.subr.mxu0 0.0
    %2757 = vmatpush2.msra.mxu0 0.0
    %2758 = vmatprep.mubr.f32.mxu0 0.0
    %2759 = vmatmul.mubr.f32.gmra.mxu0 %v2692
    %v2760 = vpop.f32.mrf.mxu0
    %v2761 = vadd.f32 0.0, %v2760
    %v2762 = vpop.f32.mrf.mxu0
    %2763 = vdwg.mxu0
    %v2765 = vrot.slane %v2761, 2
    %v2767 = vadd.f32 %v134, %v2765
    %v2768 = vxor.u32 %v2767, 2147483648
    %v2769 = vmul.f32 %v2768, 1.442695
    %v2770 = vpow.pop %v2769
    %v2771 = vadd.f32 %v2770, 1.0
    %v2772 = vrcp.pop %v2771
    %v2773 = vmul.f32 1.0, %v2772
    %2774 = vmatprep.subr.mxu0 0.0
    %2775 = vmatpush1.msra.mxu0 0.0
    %2776 = vmatprep.subr.mxu0 0.0
    %2777 = vmatpush1.msra.mxu0 0.0
    %2778 = vmatprep.subr.mxu0 0.0
    %2779 = vmatpush1.msra.mxu0 0.0
    %2780 = vmatprep.subr.mxu0 0.0
    %2781 = vmatpush1.msra.mxu0 0.0
    %2782 = vmatprep.subr.mxu0 0.0
    %2783 = vmatpush1.msra.mxu0 0.0
    %2784 = vmatprep.subr.mxu0 0.0
    %2785 = vmatpush1.msra.mxu0 0.0
    %2786 = vmatprep.subr.mxu0 0.0
    %2787 = vmatpush1.msra.mxu0 0.0
    %2788 = vmatprep.subr.mxu0 0.0
    %2789 = vmatpush1.msra.mxu0 0.0
    %2790 = vmatprep.subr.mxu0 0.0
    %2791 = vmatpush1.msra.mxu0 %v492
    %2792 = vmatprep.subr.mxu0 0.0
    %2793 = vmatpush1.msra.mxu0 %v491
    %2794 = vmatprep.subr.mxu0 0.0
    %2795 = vmatpush1.msra.mxu0 %v490
    %2796 = vmatprep.subr.mxu0 0.0
    %2797 = vmatpush1.msra.mxu0 %v489
    %2798 = vmatprep.subr.mxu0 0.0
    %2799 = vmatpush1.msra.mxu0 %v488
    %2800 = vmatprep.subr.mxu0 0.0
    %2801 = vmatpush1.msra.mxu0 %v487
    %2802 = vmatprep.subr.mxu0 0.0
    %2803 = vmatpush1.msra.mxu0 %v486
    %2804 = vmatprep.subr.mxu0 0.0
    %2805 = vmatpush1.msra.mxu0 %v485
    %2806 = vmatprep.subr.mxu0 0.0
    %2807 = vmatpush2.msra.mxu0 0.0
    %2808 = vmatprep.subr.mxu0 0.0
    %2809 = vmatpush2.msra.mxu0 0.0
    %2810 = vmatprep.subr.mxu0 0.0
    %2811 = vmatpush2.msra.mxu0 0.0
    %2812 = vmatprep.subr.mxu0 0.0
    %2813 = vmatpush2.msra.mxu0 0.0
    %2814 = vmatprep.subr.mxu0 0.0
    %2815 = vmatpush2.msra.mxu0 0.0
    %2816 = vmatprep.subr.mxu0 0.0
    %2817 = vmatpush2.msra.mxu0 0.0
    %2818 = vmatprep.subr.mxu0 0.0
    %2819 = vmatpush2.msra.mxu0 0.0
    %2820 = vmatprep.subr.mxu0 0.0
    %2821 = vmatpush2.msra.mxu0 0.0
    %2822 = vmatprep.subr.mxu0 0.0
    %2823 = vmatpush2.msra.mxu0 0.0
    %2824 = vmatprep.subr.mxu0 0.0
    %2825 = vmatpush2.msra.mxu0 0.0
    %2826 = vmatprep.subr.mxu0 0.0
    %2827 = vmatpush2.msra.mxu0 0.0
    %2828 = vmatprep.subr.mxu0 0.0
    %2829 = vmatpush2.msra.mxu0 0.0
    %2830 = vmatprep.subr.mxu0 0.0
    %2831 = vmatpush2.msra.mxu0 0.0
    %2832 = vmatprep.subr.mxu0 0.0
    %2833 = vmatpush2.msra.mxu0 0.0
    %2834 = vmatprep.subr.mxu0 0.0
    %2835 = vmatpush2.msra.mxu0 0.0
    %2836 = vmatprep.subr.mxu0 0.0
    %2837 = vmatpush2.msra.mxu0 0.0
    %2838 = vmatprep.mubr.f32.mxu0 0.0
    %2839 = vmatmul.mubr.f32.gmra.mxu0 %v2692
    %v2840 = vpop.f32.mrf.mxu0
    %v2841 = vadd.f32 0.0, %v2840
    %v2842 = vpop.f32.mrf.mxu0
    %2843 = vdwg.mxu0
    %v2845 = vrot.slane %v2841, 2
    %v2847 = vadd.f32 %v220, %v2845
    %v2848 = vxor.u32 %v2847, 2147483648
    %v2849 = vmul.f32 %v2848, 1.442695
    %v2850 = vpow.pop %v2849
    %v2851 = vadd.f32 %v2850, 1.0
    %v2852 = vrcp.pop %v2851
    %v2853 = vmul.f32 1.0, %v2852
    %2854 = vmatprep.subr.mxu0 0.0
    %2855 = vmatpush1.msra.mxu0 0.0
    %2856 = vmatprep.subr.mxu0 0.0
    %2857 = vmatpush1.msra.mxu0 0.0
    %2858 = vmatprep.subr.mxu0 0.0
    %2859 = vmatpush1.msra.mxu0 0.0
    %2860 = vmatprep.subr.mxu0 0.0
    %2861 = vmatpush1.msra.mxu0 0.0
    %2862 = vmatprep.subr.mxu0 0.0
    %2863 = vmatpush1.msra.mxu0 0.0
    %2864 = vmatprep.subr.mxu0 0.0
    %2865 = vmatpush1.msra.mxu0 0.0
    %2866 = vmatprep.subr.mxu0 0.0
    %2867 = vmatpush1.msra.mxu0 0.0
    %2868 = vmatprep.subr.mxu0 0.0
    %2869 = vmatpush1.msra.mxu0 0.0
    %2870 = vmatprep.subr.mxu0 0.0
    %2871 = vmatpush1.msra.mxu0 %v578
    %2872 = vmatprep.subr.mxu0 0.0
    %2873 = vmatpush1.msra.mxu0 %v577
    %2874 = vmatprep.subr.mxu0 0.0
    %2875 = vmatpush1.msra.mxu0 %v576
    %2876 = vmatprep.subr.mxu0 0.0
    %2877 = vmatpush1.msra.mxu0 %v575
    %2878 = vmatprep.subr.mxu0 0.0
    %2879 = vmatpush1.msra.mxu0 %v574
    %2880 = vmatprep.subr.mxu0 0.0
    %2881 = vmatpush1.msra.mxu0 %v573
    %2882 = vmatprep.subr.mxu0 0.0
    %2883 = vmatpush1.msra.mxu0 %v572
    %2884 = vmatprep.subr.mxu0 0.0
    %2885 = vmatpush1.msra.mxu0 %v571
    %2886 = vmatprep.subr.mxu0 0.0
    %2887 = vmatpush2.msra.mxu0 0.0
    %2888 = vmatprep.subr.mxu0 0.0
    %2889 = vmatpush2.msra.mxu0 0.0
    %2890 = vmatprep.subr.mxu0 0.0
    %2891 = vmatpush2.msra.mxu0 0.0
    %2892 = vmatprep.subr.mxu0 0.0
    %2893 = vmatpush2.msra.mxu0 0.0
    %2894 = vmatprep.subr.mxu0 0.0
    %2895 = vmatpush2.msra.mxu0 0.0
    %2896 = vmatprep.subr.mxu0 0.0
    %2897 = vmatpush2.msra.mxu0 0.0
    %2898 = vmatprep.subr.mxu0 0.0
    %2899 = vmatpush2.msra.mxu0 0.0
    %2900 = vmatprep.subr.mxu0 0.0
    %2901 = vmatpush2.msra.mxu0 0.0
    %2902 = vmatprep.subr.mxu0 0.0
    %2903 = vmatpush2.msra.mxu0 0.0
    %2904 = vmatprep.subr.mxu0 0.0
    %2905 = vmatpush2.msra.mxu0 0.0
    %2906 = vmatprep.subr.mxu0 0.0
    %2907 = vmatpush2.msra.mxu0 0.0
    %2908 = vmatprep.subr.mxu0 0.0
    %2909 = vmatpush2.msra.mxu0 0.0
    %2910 = vmatprep.subr.mxu0 0.0
    %2911 = vmatpush2.msra.mxu0 0.0
    %2912 = vmatprep.subr.mxu0 0.0
    %2913 = vmatpush2.msra.mxu0 0.0
    %2914 = vmatprep.subr.mxu0 0.0
    %2915 = vmatpush2.msra.mxu0 0.0
    %2916 = vmatprep.subr.mxu0 0.0
    %2917 = vmatpush2.msra.mxu0 0.0
    %2918 = vmatprep.mubr.f32.mxu0 0.0
    %2919 = vmatmul.mubr.f32.gmra.mxu0 %v2692
    %v2920 = vpop.f32.mrf.mxu0
    %v2921 = vadd.f32 0.0, %v2920
    %v2922 = vpop.f32.mrf.mxu0
    %2923 = vdwg.mxu0
    %v2925 = vrot.slane %v2921, 2
    %v2927 = vadd.f32 %v306, %v2925
    %v2928 = vtanh.pop %v2927
    %2929 = vmatprep.subr.mxu0 0.0
    %2930 = vmatpush1.msra.mxu0 0.0
    %2931 = vmatprep.subr.mxu0 0.0
    %2932 = vmatpush1.msra.mxu0 0.0
    %2933 = vmatprep.subr.mxu0 0.0
    %2934 = vmatpush1.msra.mxu0 0.0
    %2935 = vmatprep.subr.mxu0 0.0
    %2936 = vmatpush1.msra.mxu0 0.0
    %2937 = vmatprep.subr.mxu0 0.0
    %2938 = vmatpush1.msra.mxu0 0.0
    %2939 = vmatprep.subr.mxu0 0.0
    %2940 = vmatpush1.msra.mxu0 0.0
    %2941 = vmatprep.subr.mxu0 0.0
    %2942 = vmatpush1.msra.mxu0 0.0
    %2943 = vmatprep.subr.mxu0 0.0
    %2944 = vmatpush1.msra.mxu0 0.0
    %2945 = vmatprep.subr.mxu0 0.0
    %2946 = vmatpush1.msra.mxu0 %v659
    %2947 = vmatprep.subr.mxu0 0.0
    %2948 = vmatpush1.msra.mxu0 %v658
    %2949 = vmatprep.subr.mxu0 0.0
    %2950 = vmatpush1.msra.mxu0 %v657
    %2951 = vmatprep.subr.mxu0 0.0
    %2952 = vmatpush1.msra.mxu0 %v656
    %2953 = vmatprep.subr.mxu0 0.0
    %2954 = vmatpush1.msra.mxu0 %v655
    %2955 = vmatprep.subr.mxu0 0.0
    %2956 = vmatpush1.msra.mxu0 %v654
    %2957 = vmatprep.subr.mxu0 0.0
    %2958 = vmatpush1.msra.mxu0 %v653
    %2959 = vmatprep.subr.mxu0 0.0
    %2960 = vmatpush1.msra.mxu0 %v652
    %2961 = vmatprep.subr.mxu0 0.0
    %2962 = vmatpush2.msra.mxu0 0.0
    %2963 = vmatprep.subr.mxu0 0.0
    %2964 = vmatpush2.msra.mxu0 0.0
    %2965 = vmatprep.subr.mxu0 0.0
    %2966 = vmatpush2.msra.mxu0 0.0
    %2967 = vmatprep.subr.mxu0 0.0
    %2968 = vmatpush2.msra.mxu0 0.0
    %2969 = vmatprep.subr.mxu0 0.0
    %2970 = vmatpush2.msra.mxu0 0.0
    %2971 = vmatprep.subr.mxu0 0.0
    %2972 = vmatpush2.msra.mxu0 0.0
    %2973 = vmatprep.subr.mxu0 0.0
    %2974 = vmatpush2.msra.mxu0 0.0
    %2975 = vmatprep.subr.mxu0 0.0
    %2976 = vmatpush2.msra.mxu0 0.0
    %2977 = vmatprep.subr.mxu0 0.0
    %2978 = vmatpush2.msra.mxu0 0.0
    %2979 = vmatprep.subr.mxu0 0.0
    %2980 = vmatpush2.msra.mxu0 0.0
    %2981 = vmatprep.subr.mxu0 0.0
    %2982 = vmatpush2.msra.mxu0 0.0
    %2983 = vmatprep.subr.mxu0 0.0
    %2984 = vmatpush2.msra.mxu0 0.0
    %2985 = vmatprep.subr.mxu0 0.0
    %2986 = vmatpush2.msra.mxu0 0.0
    %2987 = vmatprep.subr.mxu0 0.0
    %2988 = vmatpush2.msra.mxu0 0.0
    %2989 = vmatprep.subr.mxu0 0.0
    %2990 = vmatpush2.msra.mxu0 0.0
    %2991 = vmatprep.subr.mxu0 0.0
    %2992 = vmatpush2.msra.mxu0 0.0
    %2993 = vmatprep.mubr.f32.mxu0 0.0
    %2994 = vmatmul.mubr.f32.gmra.mxu0 %v2692
    %v2995 = vpop.f32.mrf.mxu0
    %v2996 = vadd.f32 0.0, %v2995
    %v2997 = vpop.f32.mrf.mxu0
    %2998 = vdwg.mxu0
    %v3000 = vrot.slane %v2996, 2
    %v3002 = vadd.f32 %v392, %v3000
    %v3003 = vxor.u32 %v3002, 2147483648
    %v3004 = vmul.f32 %v3003, 1.442695
    %v3005 = vpow.pop %v3004
    %v3006 = vadd.f32 %v3005, 1.0
    %v3007 = vrcp.pop %v3006
    %v3008 = vmul.f32 1.0, %v3007
    %v3010 = vrot.slane %v2687, 6
    %v3012 = vmul.f32 %v2853, %v3010
    %v3013 = vmul.f32 %v2773, %v2928
    %v3014 = vadd.f32 %v3012, %v3013
    %v3015 = vtanh.pop %v3014
    %v3016 = vmul.f32 %v3008, %v3015
    %v3017 = vld [vmem:[%s4] sm:$0xff]
    %v3018 = vld [vmem:[%s4 + $0x8] sm:$0xff]
    %v3019 = vld [vmem:[%s4 + $0x10] sm:$0xff]
    %v3020 = vld [vmem:[%s4 + $0x18] sm:$0xff]
    %v3021 = vld [vmem:[%s4 + $0x20] sm:$0xff]
    %v3022 = vld [vmem:[%s4 + $0x28] sm:$0xff]
    %v3023 = vld [vmem:[%s4 + $0x30] sm:$0xff]
    %v3024 = vld [vmem:[%s4 + $0x38] sm:$0xff]
    %v3025 = vld [vmem:[%s5] sm:$0x1]
    %v3027 = vlaneseq
    %v3028 = vshrl.u32 %v3027, 7
    %v3029 = vsub.s32 0, %v3028
    %v3030 = vrot.slane %v3025, %v3029
    %v3033 = vrot.slane %v3016, 6
    %v3034 = vsel %vm403, %v3033, 0
    %3036 = vmatprep.subr.mxu0 0.0
    %3037 = vmatpush1.msra.mxu0 0.0
    %3038 = vmatprep.subr.mxu0 0.0
    %3039 = vmatpush1.msra.mxu0 0.0
    %3040 = vmatprep.subr.mxu0 0.0
    %3041 = vmatpush1.msra.mxu0 0.0
    %3042 = vmatprep.subr.mxu0 0.0
    %3043 = vmatpush1.msra.mxu0 0.0
    %3044 = vmatprep.subr.mxu0 0.0
    %3045 = vmatpush1.msra.mxu0 0.0
    %3046 = vmatprep.subr.mxu0 0.0
    %3047 = vmatpush1.msra.mxu0 0.0
    %3048 = vmatprep.subr.mxu0 0.0
    %3049 = vmatpush1.msra.mxu0 0.0
    %3050 = vmatprep.subr.mxu0 0.0
    %3051 = vmatpush1.msra.mxu0 0.0
    %3052 = vmatprep.subr.mxu0 0.0
    %3053 = vmatpush1.msra.mxu0 %v3024
    %3054 = vmatprep.subr.mxu0 0.0
    %3055 = vmatpush1.msra.mxu0 %v3023
    %3056 = vmatprep.subr.mxu0 0.0
    %3057 = vmatpush1.msra.mxu0 %v3022
    %3058 = vmatprep.subr.mxu0 0.0
    %3059 = vmatpush1.msra.mxu0 %v3021
    %3060 = vmatprep.subr.mxu0 0.0
    %3061 = vmatpush1.msra.mxu0 %v3020
    %3062 = vmatprep.subr.mxu0 0.0
    %3063 = vmatpush1.msra.mxu0 %v3019
    %3064 = vmatprep.subr.mxu0 0.0
    %3065 = vmatpush1.msra.mxu0 %v3018
    %3066 = vmatprep.subr.mxu0 0.0
    %3067 = vmatpush1.msra.mxu0 %v3017
    %3068 = vmatprep.subr.mxu0 0.0
    %3069 = vmatpush2.msra.mxu0 0.0
    %3070 = vmatprep.subr.mxu0 0.0
    %3071 = vmatpush2.msra.mxu0 0.0
    %3072 = vmatprep.subr.mxu0 0.0
    %3073 = vmatpush2.msra.mxu0 0.0
    %3074 = vmatprep.subr.mxu0 0.0
    %3075 = vmatpush2.msra.mxu0 0.0
    %3076 = vmatprep.subr.mxu0 0.0
    %3077 = vmatpush2.msra.mxu0 0.0
    %3078 = vmatprep.subr.mxu0 0.0
    %3079 = vmatpush2.msra.mxu0 0.0
    %3080 = vmatprep.subr.mxu0 0.0
    %3081 = vmatpush2.msra.mxu0 0.0
    %3082 = vmatprep.subr.mxu0 0.0
    %3083 = vmatpush2.msra.mxu0 0.0
    %3084 = vmatprep.subr.mxu0 0.0
    %3085 = vmatpush2.msra.mxu0 0.0
    %3086 = vmatprep.subr.mxu0 0.0
    %3087 = vmatpush2.msra.mxu0 0.0
    %3088 = vmatprep.subr.mxu0 0.0
    %3089 = vmatpush2.msra.mxu0 0.0
    %3090 = vmatprep.subr.mxu0 0.0
    %3091 = vmatpush2.msra.mxu0 0.0
    %3092 = vmatprep.subr.mxu0 0.0
    %3093 = vmatpush2.msra.mxu0 0.0
    %3094 = vmatprep.subr.mxu0 0.0
    %3095 = vmatpush2.msra.mxu0 0.0
    %3096 = vmatprep.subr.mxu0 0.0
    %3097 = vmatpush2.msra.mxu0 0.0
    %3098 = vmatprep.subr.mxu0 0.0
    %3099 = vmatpush2.msra.mxu0 0.0
    %3100 = vmatprep.mubr.f32.mxu0 0.0
    %3101 = vmatmul.mubr.f32.gmra.mxu0 %v3034
    %v3102 = vpop.f32.mrf.mxu0
    %v3103 = vadd.f32 %v3030, %v3102
    %v3104 = vpop.f32.mrf.mxu0
    %3105 = vdwg.mxu0
    %v3106 = vld [vmem:[%s6] sm:$0xff]
    %v3107 = vld [vmem:[%s6 + $0x8] sm:$0xff]
    %v3108 = vld [vmem:[%s6 + $0x10] sm:$0xff]
    %v3109 = vld [vmem:[%s6 + $0x18] sm:$0xff]
    %v3110 = vld [vmem:[%s7] sm:$0x1]
    %v3112 = vlaneseq
    %v3113 = vshrl.u32 %v3112, 7
    %v3114 = vsub.s32 0, %v3113
    %v3115 = vrot.slane %v3110, %v3114
    %vm3117 = vcmask 261120
    %v3119 = vsel %vm3117, %v3103, 0
    %3121 = vmatprep.subr.mxu0 0.0
    %3122 = vmatpush1.msra.mxu0 0.0
    %3123 = vmatprep.subr.mxu0 0.0
    %3124 = vmatpush1.msra.mxu0 0.0
    %3125 = vmatprep.subr.mxu0 0.0
    %3126 = vmatpush1.msra.mxu0 0.0
    %3127 = vmatprep.subr.mxu0 0.0
    %3128 = vmatpush1.msra.mxu0 0.0
    %3129 = vmatprep.subr.mxu0 0.0
    %3130 = vmatpush1.msra.mxu0 0.0
    %3131 = vmatprep.subr.mxu0 0.0
    %3132 = vmatpush1.msra.mxu0 0.0
    %3133 = vmatprep.subr.mxu0 0.0
    %3134 = vmatpush1.msra.mxu0 0.0
    %3135 = vmatprep.subr.mxu0 0.0
    %3136 = vmatpush1.msra.mxu0 0.0
    %3137 = vmatprep.subr.mxu0 0.0
    %3138 = vmatpush1.msra.mxu0 0.0
    %3139 = vmatprep.subr.mxu0 0.0
    %3140 = vmatpush1.msra.mxu0 0.0
    %3141 = vmatprep.subr.mxu0 0.0
    %3142 = vmatpush1.msra.mxu0 0.0
    %3143 = vmatprep.subr.mxu0 0.0
    %3144 = vmatpush1.msra.mxu0 0.0
    %3145 = vmatprep.subr.mxu0 0.0
    %3146 = vmatpush1.msra.mxu0 %v3109
    %3147 = vmatprep.subr.mxu0 0.0
    %3148 = vmatpush1.msra.mxu0 %v3108
    %3149 = vmatprep.subr.mxu0 0.0
    %3150 = vmatpush1.msra.mxu0 %v3107
    %3151 = vmatprep.subr.mxu0 0.0
    %3152 = vmatpush1.msra.mxu0 %v3106
    %3153 = vmatprep.subr.mxu0 0.0
    %3154 = vmatpush2.msra.mxu0 0.0
    %3155 = vmatprep.subr.mxu0 0.0
    %3156 = vmatpush2.msra.mxu0 0.0
    %3157 = vmatprep.subr.mxu0 0.0
    %3158 = vmatpush2.msra.mxu0 0.0
    %3159 = vmatprep.subr.mxu0 0.0
    %3160 = vmatpush2.msra.mxu0 0.0
    %3161 = vmatprep.subr.mxu0 0.0
    %3162 = vmatpush2.msra.mxu0 0.0
    %3163 = vmatprep.subr.mxu0 0.0
    %3164 = vmatpush2.msra.mxu0 0.0
    %3165 = vmatprep.subr.mxu0 0.0
    %3166 = vmatpush2.msra.mxu0 0.0
    %3167 = vmatprep.subr.mxu0 0.0
    %3168 = vmatpush2.msra.mxu0 0.0
    %3169 = vmatprep.subr.mxu0 0.0
    %3170 = vmatpush2.msra.mxu0 0.0
    %3171 = vmatprep.subr.mxu0 0.0
    %3172 = vmatpush2.msra.mxu0 0.0
    %3173 = vmatprep.subr.mxu0 0.0
    %3174 = vmatpush2.msra.mxu0 0.0
    %3175 = vmatprep.subr.mxu0 0.0
    %3176 = vmatpush2.msra.mxu0 0.0
    %3177 = vmatprep.subr.mxu0 0.0
    %3178 = vmatpush2.msra.mxu0 0.0
    %3179 = vmatprep.subr.mxu0 0.0
    %3180 = vmatpush2.msra.mxu0 0.0
    %3181 = vmatprep.subr.mxu0 0.0
    %3182 = vmatpush2.msra.mxu0 0.0
    %3183 = vmatprep.subr.mxu0 0.0
    %3184 = vmatpush2.msra.mxu0 0.0
    %3185 = vmatprep.mubr.f32.mxu0 0.0
    %3186 = vmatmul.mubr.f32.gmra.mxu0 %v3119
    %v3187 = vpop.f32.mrf.mxu0
    %v3188 = vadd.f32 %v3115, %v3187
    %v3189 = vpop.f32.mrf.mxu0
    %3190 = vdwg.mxu0
    %vm3191 = vcmask 9216
    %3192 = vst.msk [vmem:[#allocation5] sm:$0x3] %vm3191, %v3188
    // Predicated region
    $region38: #{tpu_custom_call.1} parent=1 // pred_check
      _
    $region39: #{tpu_custom_call.1} parent=1 // pred_check_branch
      %3194 = sbr.rel (0) target = $region41
    $region40: #{tpu_custom_call.1} parent=1 // pred_region
      %s3196 = ssub.s32 32, 32
      %3197 = vsyncadd [#allocation4], %s3196
      %s3199 = sshll.u32 [#allocation5], 4
      %s3200 = int_to_ptr.vmem [resolvable:$true] %s3199
      %3202 = dma.vmem_to_hbm [thread:$0]  %s3200, 32, %s8, [#allocation4]
    $region41: #{tpu_custom_call.1} parent=1 // pred_fallthru
      _
    // Predicated region
    $region42: #{tpu_custom_call.1} parent=1 // pred_check
      _
    $region43: #{tpu_custom_call.1} parent=1 // pred_check_branch
      %3204 = sbr.rel (0) target = $region45
    $region44: #{tpu_custom_call.1} parent=1 // pred_region
      %3205 = dma.done [#allocation4], 32
    $region45: #{tpu_custom_call.1} parent=1 // pred_fallthru
      _
    %3206 = vsyncpa [#allocation3], 1
    %3207 = vsyncpa [#allocation4], 1

</llo_original>
